<compile_context>
chip_gen: v6e
topology: v6e:2x2x1
jax: 0.10.0
libtpu: 0.0.40
codegen_flags: <defaults>
</compile_context>

<pallas_src>
import functools
import math

import jax
import jax.numpy as jnp
from jax.experimental import pallas as pl
from jax.experimental.pallas import tpu as pltpu

_BN_EPS = 0.8          # positional 0.8 in nn.BatchNorm1d(out_feat, 0.8) is eps
_LRELU_SLOPE = 0.2
_HIDDEN = (128, 256, 512, 1024)


def _round_up(x, m):
    return ((x + m - 1) // m) * m


def _leaky_relu(x, slope=_LRELU_SLOPE):
    return jnp.where(x > 0, x, slope * x)


def _generator_kernel(
    z_ref,
    w1_ref,
    w2_ref, g2_ref, be2_ref,
    w3_ref, g3_ref, be3_ref,
    w4_ref, g4_ref, be4_ref,
    w5_ref, b5_ref,
    out_ref,
    *, real_b: int,
):
    """Fused 5-layer MLP generator (bf16 weights, f32 MXU accumulation).

    The whole (padded) batch is resident in one invocation: training-mode
    BatchNorm1d needs FULL-batch statistics, so the batch is not tiled over a
    grid. Padded batch rows are kept at exactly zero before every pre-BN
    matmul, so plain column sums divided by the REAL batch size reproduce the
    exact biased batch statistics.
    """
    b_pad = z_ref.shape[0]
    inv_b = 1.0 / real_b   # static real batch size

    if b_pad != real_b:
        row_ids = jax.lax.broadcasted_iota(jnp.int32, (b_pad, 1), 0)
        row_mask = (row_ids < real_b).astype(jnp.float32)
    else:
        row_mask = None

    def bn_lrelu(h, gamma, beta):
        # One-pass biased batch stats (eps=0.8 dominates any cancellation).
        mean = jnp.sum(h, axis=0, keepdims=True) * inv_b
        msq = jnp.sum(h * h, axis=0, keepdims=True) * inv_b
        var = jnp.maximum(msq - mean * mean, 0.0)
        # Two-op affine; rsqrt lands on the (otherwise idle) EUP.
        scale = gamma * jax.lax.rsqrt(var + _BN_EPS)
        shift = beta - mean * scale
        out = _leaky_relu(h * scale + shift)
        if row_mask is not None:
            out = out * row_mask   # re-zero padded rows for the next BN block
        return out

    # Block 1: Linear(latent,128) + LeakyReLU. b1 is folded into w1 through a
    # constant 1.0 lane in z; padded rows (zeros everywhere) stay exactly 0.
    h = jnp.dot(z_ref[...], w1_ref[...], preferred_element_type=jnp.float32)
    h = _leaky_relu(h)

    # Blocks 2-4: Linear (bias cancelled by batch-mean) + BN(eps=0.8) + LReLU.
    h = bn_lrelu(
        jnp.dot(h.astype(jnp.bfloat16), w2_ref[...],
                preferred_element_type=jnp.float32),
        g2_ref[...], be2_ref[...])
    h = bn_lrelu(
        jnp.dot(h.astype(jnp.bfloat16), w3_ref[...],
                preferred_element_type=jnp.float32),
        g3_ref[...], be3_ref[...])
    h = bn_lrelu(
        jnp.dot(h.astype(jnp.bfloat16), w4_ref[...],
                preferred_element_type=jnp.float32),
        g4_ref[...], be4_ref[...])

    # Output: Linear(1024, out_dim) + Tanh, stored as bf16 (w5 unpadded in HBM;
    # at most one masked lane-group tail per row tile, negligible here).
    o = jnp.dot(h.astype(jnp.bfloat16), w5_ref[...],
                preferred_element_type=jnp.float32) + b5_ref[...]
    out_ref[...] = jnp.tanh(o).astype(out_ref.dtype)


@functools.partial(jax.jit, static_argnames=("img_shape",))
def generator_forward(z, params, img_shape):
    """z: (B, latent_dim) float32; params from init_generator_params."""
    B, latent_dim = z.shape
    out_dim = math.prod(img_shape)

    k_pad = params[0].shape[0]          # padded (latent+bias) dim, mult of 128
    assert params[-1].shape[1] == out_dim

    # Pad batch to a multiple of 16 (full bf16 packed sublane tiles / MXU rows).
    b_pad = max(_round_up(B, 16), 16)

    # Append the constant 1.0 bias lane, then zero-pad lanes and batch rows.
    z_aug = jnp.concatenate(
        [z.astype(jnp.bfloat16), jnp.ones((B, 1), jnp.bfloat16)], axis=1)
    z_p = jnp.pad(z_aug, ((0, b_pad - B), (0, k_pad - (latent_dim + 1))))

    # --- resource sizing & cost hints (all static) ---
    layer_dims = [(k_pad, _HIDDEN[0]),
                  (_HIDDEN[0], _HIDDEN[1]),
                  (_HIDDEN[1], _HIDDEN[2]),
                  (_HIDDEN[2], _HIDDEN[3]),
                  (_HIDDEN[3], out_dim)]
    flops = 2 * b_pad * sum(k * n for k, n in layer_dims)
    transcendentals = b_pad * out_dim + sum(_HIDDEN[1:])          # tanh + rsqrt
    param_bytes = sum(int(p.size) * p.dtype.itemsize for p in params)
    io_bytes = param_bytes + b_pad * k_pad * 2 + b_pad * out_dim * 2
    act_bytes = b_pad * (sum(_HIDDEN) + out_dim) * 4
    # Size VMEM from the actual footprint; cap at 64 MiB so the same sizing is
    # safe on v7x (64 MiB physical VMEM) as well as v5e/v6e.
    vmem_limit = int(min(64 << 20,
                         max(16 << 20, int(1.5 * io_bytes + 3 * act_bytes) + (2 << 20))))

    n_in = 1 + len(params)
    flat = pl.pallas_call(
        functools.partial(_generator_kernel, real_b=B),
        out_shape=jax.ShapeDtypeStruct((b_pad, out_dim), jnp.bfloat16),
        in_specs=[pl.BlockSpec(memory_space=pltpu.MemorySpace.VMEM)] * n_in,
        out_specs=pl.BlockSpec(memory_space=pltpu.MemorySpace.VMEM),
        compiler_params=pltpu.CompilerParams(vmem_limit_bytes=vmem_limit),
        cost_estimate=pl.CostEstimate(flops=flops,
                                      transcendentals=transcendentals,
                                      bytes_accessed=io_bytes),
    )(z_p, *params)
    # TODO(synk): on v7x (2 TensorCores/chip) shard the batch over two calls at
    # the JAX level (or core_map + shared BN stats) to use both cores.

    # Drop padded batch rows, restore f32, view(B, *img_shape).
    return flat[:B].astype(jnp.float32).reshape((B,) + tuple(img_shape))


def init_generator_params(key, latent_dim, img_shape):
    """PyTorch-Linear-style init (U[-1/sqrt(fan_in), 1/sqrt(fan_in)]).

    Weights are stored as (in, out) and cast ONCE to bf16 here. b1 is folded
    into an extra row of w1 (matching the 1.0 bias lane appended to z). Pre-BN
    biases (blocks 2-4) are never created (cancelled by training-mode BN).
    w5/b5 are kept unpadded. gamma/beta/b5 are (1, out) f32 rows.
    """
    out_dim = math.prod(img_shape)
    k_pad = _round_up(latent_dim + 1, 128)   # +1 row for the folded b1
    dims = [latent_dim] + list(_HIDDEN) + [out_dim]

    keys = jax.random.split(key, 7)
    ki = 0

    def uniform(shape, bound):
        nonlocal ki
        v = jax.random.uniform(keys[ki], shape, jnp.float32,
                               minval=-bound, maxval=bound)
        ki += 1
        return v

    params = []
    for li in range(5):
        fan_in, fan_out = dims[li], dims[li + 1]
        bound = 1.0 / math.sqrt(fan_in)
        w = uniform((fan_in, fan_out), bound)
        if li == 0:
            b = uniform((1, fan_out), bound)
            w1 = jnp.zeros((k_pad, fan_out), jnp.float32)
            w1 = w1.at[:fan_in].set(w)
            w1 = w1.at[fan_in].set(b[0])          # folded bias row
            params.append(w1.astype(jnp.bfloat16))
        elif li == 4:
            b = uniform((1, fan_out), bound)
            params.append(w.astype(jnp.bfloat16))  # unpadded (1024, out_dim)
            params.append(b)
        else:
            params.append(w.astype(jnp.bfloat16))
            params.append(jnp.ones((1, fan_out), jnp.float32))   # gamma
            params.append(jnp.zeros((1, fan_out), jnp.float32))  # beta
    return tuple(params)


if __name__ == "__main__":
    latent_dim = 32
    img_shape = (1, 8, 8)   # small NCHW image shape: C=1, H=8, W=8
    batch = 8               # small demo batch; production should use B >= 256

    key = jax.random.PRNGKey(0)
    pkey, zkey = jax.random.split(key)
    params = init_generator_params(pkey, latent_dim, img_shape)
    z = jax.random.normal(zkey, (batch, latent_dim), jnp.float32)

    img = jax.block_until_ready(generator_forward(z, params, img_shape))

    assert img.shape == (batch,) + img_shape, img.shape
    assert img.dtype == jnp.float32
    assert bool(jnp.all(jnp.isfinite(img)))
    assert bool(jnp.all(jnp.abs(img) <= 1.0))  # tanh range
    print("KERNEL_OK")
</pallas_src>

<mosaic_0001>
module attributes {stable_mosaic.version = 11 : i64} {
  func.func @_generator_kernel(%arg0: memref<16x128xbf16, #tpu.memory_space<vmem>>, %arg1: memref<128x128xbf16, #tpu.memory_space<vmem>>, %arg2: memref<128x256xbf16, #tpu.memory_space<vmem>>, %arg3: memref<1x256xf32, #tpu.memory_space<vmem>>, %arg4: memref<1x256xf32, #tpu.memory_space<vmem>>, %arg5: memref<256x512xbf16, #tpu.memory_space<vmem>>, %arg6: memref<1x512xf32, #tpu.memory_space<vmem>>, %arg7: memref<1x512xf32, #tpu.memory_space<vmem>>, %arg8: memref<512x1024xbf16, #tpu.memory_space<vmem>>, %arg9: memref<1x1024xf32, #tpu.memory_space<vmem>>, %arg10: memref<1x1024xf32, #tpu.memory_space<vmem>>, %arg11: memref<1024x64xbf16, #tpu.memory_space<vmem>>, %arg12: memref<1x64xf32, #tpu.memory_space<vmem>>, %arg13: memref<16x64xbf16, #tpu.memory_space<vmem>>) attributes {dimension_semantics = [], scalar_prefetch = 0 : i64, scratch_operands = 0 : i64, tpu.core_type = #tpu.core_type<tc>} {
    %0 = tpu.iota {dimensions = array<i32: 0>} : vector<16x1xi32>
    %c8_i32 = arith.constant 8 : i32
    %1 = vector.broadcast %c8_i32 : i32 to vector<16x1xi32>
    %2 = arith.cmpi slt, %0, %1 : vector<16x1xi32>
    %3 = arith.extui %2 : vector<16x1xi1> to vector<16x1xi32>
    %4 = arith.sitofp %3 : vector<16x1xi32> to vector<16x1xf32>
    %c0 = arith.constant 0 : index
    %c0_0 = arith.constant 0 : index
    %5 = vector.load %arg0[%c0, %c0_0] : memref<16x128xbf16, #tpu.memory_space<vmem>>, vector<16x128xbf16>
    %c0_1 = arith.constant 0 : index
    %c0_2 = arith.constant 0 : index
    %6 = vector.load %arg1[%c0_1, %c0_2] : memref<128x128xbf16, #tpu.memory_space<vmem>>, vector<128x128xbf16>
    %cst = arith.constant dense<0.000000e+00> : vector<16x128xf32>
    %7 = tpu.matmul %5, %6, %cst {dimension_numbers = #tpu.dot_dimension_numbers<[1], [0], [0], [1], [0, 0, 1, 1], [], []>} : vector<16x128xbf16>, vector<128x128xbf16>, vector<16x128xf32> -> vector<16x128xf32>
    %cst_3 = arith.constant 0.000000e+00 : f32
    %8 = vector.broadcast %cst_3 : f32 to vector<16x128xf32>
    %9 = arith.cmpf ogt, %7, %8 : vector<16x128xf32>
    %cst_4 = arith.constant 2.000000e-01 : f32
    %10 = vector.broadcast %cst_4 : f32 to vector<16x128xf32>
    %11 = arith.mulf %10, %7 : vector<16x128xf32>
    %12 = arith.select %9, %7, %11 : vector<16x128xi1>, vector<16x128xf32>
    %13 = arith.truncf %12 : vector<16x128xf32> to vector<16x128xbf16>
    %c0_5 = arith.constant 0 : index
    %c0_6 = arith.constant 0 : index
    %14 = vector.load %arg2[%c0_5, %c0_6] : memref<128x256xbf16, #tpu.memory_space<vmem>>, vector<128x256xbf16>
    %cst_7 = arith.constant dense<0.000000e+00> : vector<16x256xf32>
    %15 = tpu.matmul %13, %14, %cst_7 {dimension_numbers = #tpu.dot_dimension_numbers<[1], [0], [0], [1], [0, 0, 1, 1], [], []>} : vector<16x128xbf16>, vector<128x256xbf16>, vector<16x256xf32> -> vector<16x256xf32>
    %c0_8 = arith.constant 0 : index
    %c0_9 = arith.constant 0 : index
    %16 = vector.load %arg3[%c0_8, %c0_9] : memref<1x256xf32, #tpu.memory_space<vmem>>, vector<1x256xf32>
    %c0_10 = arith.constant 0 : index
    %c0_11 = arith.constant 0 : index
    %17 = vector.load %arg4[%c0_10, %c0_11] : memref<1x256xf32, #tpu.memory_space<vmem>>, vector<1x256xf32>
    %cst_12 = arith.constant dense<0.000000e+00> : vector<256xf32>
    %18 = vector.multi_reduction <add>, %15, %cst_12 [0] : vector<16x256xf32> to vector<256xf32>
    %19 = vector.shape_cast %18 : vector<256xf32> to vector<1x256xf32>
    %cst_13 = arith.constant 1.250000e-01 : f32
    %20 = vector.broadcast %cst_13 : f32 to vector<1x256xf32>
    %21 = arith.mulf %19, %20 : vector<1x256xf32>
    %22 = arith.mulf %15, %15 : vector<16x256xf32>
    %cst_14 = arith.constant dense<0.000000e+00> : vector<256xf32>
    %23 = vector.multi_reduction <add>, %22, %cst_14 [0] : vector<16x256xf32> to vector<256xf32>
    %24 = vector.shape_cast %23 : vector<256xf32> to vector<1x256xf32>
    %cst_15 = arith.constant 1.250000e-01 : f32
    %25 = vector.broadcast %cst_15 : f32 to vector<1x256xf32>
    %26 = arith.mulf %24, %25 : vector<1x256xf32>
    %27 = arith.mulf %21, %21 : vector<1x256xf32>
    %28 = arith.subf %26, %27 : vector<1x256xf32>
    %cst_16 = arith.constant 0.000000e+00 : f32
    %29 = vector.broadcast %cst_16 : f32 to vector<1x256xf32>
    %30 = arith.maximumf %28, %29 : vector<1x256xf32>
    %cst_17 = arith.constant 8.000000e-01 : f32
    %31 = vector.broadcast %cst_17 : f32 to vector<1x256xf32>
    %32 = arith.addf %30, %31 : vector<1x256xf32>
    %33 = math.rsqrt %32 : vector<1x256xf32>
    %34 = arith.mulf %16, %33 : vector<1x256xf32>
    %35 = arith.mulf %21, %34 : vector<1x256xf32>
    %36 = arith.subf %17, %35 : vector<1x256xf32>
    %37 = vector.broadcast %34 : vector<1x256xf32> to vector<16x256xf32>
    %38 = arith.mulf %15, %37 : vector<16x256xf32>
    %39 = vector.broadcast %36 : vector<1x256xf32> to vector<16x256xf32>
    %40 = arith.addf %38, %39 : vector<16x256xf32>
    %cst_18 = arith.constant 0.000000e+00 : f32
    %41 = vector.broadcast %cst_18 : f32 to vector<16x256xf32>
    %42 = arith.cmpf ogt, %40, %41 : vector<16x256xf32>
    %cst_19 = arith.constant 2.000000e-01 : f32
    %43 = vector.broadcast %cst_19 : f32 to vector<16x256xf32>
    %44 = arith.mulf %43, %40 : vector<16x256xf32>
    %45 = arith.select %42, %40, %44 : vector<16x256xi1>, vector<16x256xf32>
    %46 = vector.broadcast %4 : vector<16x1xf32> to vector<16x256xf32>
    %47 = arith.mulf %45, %46 : vector<16x256xf32>
    %48 = arith.truncf %47 : vector<16x256xf32> to vector<16x256xbf16>
    %c0_20 = arith.constant 0 : index
    %c0_21 = arith.constant 0 : index
    %49 = vector.load %arg5[%c0_20, %c0_21] : memref<256x512xbf16, #tpu.memory_space<vmem>>, vector<256x512xbf16>
    %cst_22 = arith.constant dense<0.000000e+00> : vector<16x512xf32>
    %50 = tpu.matmul %48, %49, %cst_22 {dimension_numbers = #tpu.dot_dimension_numbers<[1], [0], [0], [1], [0, 0, 1, 1], [], []>} : vector<16x256xbf16>, vector<256x512xbf16>, vector<16x512xf32> -> vector<16x512xf32>
    %c0_23 = arith.constant 0 : index
    %c0_24 = arith.constant 0 : index
    %51 = vector.load %arg6[%c0_23, %c0_24] : memref<1x512xf32, #tpu.memory_space<vmem>>, vector<1x512xf32>
    %c0_25 = arith.constant 0 : index
    %c0_26 = arith.constant 0 : index
    %52 = vector.load %arg7[%c0_25, %c0_26] : memref<1x512xf32, #tpu.memory_space<vmem>>, vector<1x512xf32>
    %cst_27 = arith.constant dense<0.000000e+00> : vector<512xf32>
    %53 = vector.multi_reduction <add>, %50, %cst_27 [0] : vector<16x512xf32> to vector<512xf32>
    %54 = vector.shape_cast %53 : vector<512xf32> to vector<1x512xf32>
    %cst_28 = arith.constant 1.250000e-01 : f32
    %55 = vector.broadcast %cst_28 : f32 to vector<1x512xf32>
    %56 = arith.mulf %54, %55 : vector<1x512xf32>
    %57 = arith.mulf %50, %50 : vector<16x512xf32>
    %cst_29 = arith.constant dense<0.000000e+00> : vector<512xf32>
    %58 = vector.multi_reduction <add>, %57, %cst_29 [0] : vector<16x512xf32> to vector<512xf32>
    %59 = vector.shape_cast %58 : vector<512xf32> to vector<1x512xf32>
    %cst_30 = arith.constant 1.250000e-01 : f32
    %60 = vector.broadcast %cst_30 : f32 to vector<1x512xf32>
    %61 = arith.mulf %59, %60 : vector<1x512xf32>
    %62 = arith.mulf %56, %56 : vector<1x512xf32>
    %63 = arith.subf %61, %62 : vector<1x512xf32>
    %cst_31 = arith.constant 0.000000e+00 : f32
    %64 = vector.broadcast %cst_31 : f32 to vector<1x512xf32>
    %65 = arith.maximumf %63, %64 : vector<1x512xf32>
    %cst_32 = arith.constant 8.000000e-01 : f32
    %66 = vector.broadcast %cst_32 : f32 to vector<1x512xf32>
    %67 = arith.addf %65, %66 : vector<1x512xf32>
    %68 = math.rsqrt %67 : vector<1x512xf32>
    %69 = arith.mulf %51, %68 : vector<1x512xf32>
    %70 = arith.mulf %56, %69 : vector<1x512xf32>
    %71 = arith.subf %52, %70 : vector<1x512xf32>
    %72 = vector.broadcast %69 : vector<1x512xf32> to vector<16x512xf32>
    %73 = arith.mulf %50, %72 : vector<16x512xf32>
    %74 = vector.broadcast %71 : vector<1x512xf32> to vector<16x512xf32>
    %75 = arith.addf %73, %74 : vector<16x512xf32>
    %cst_33 = arith.constant 0.000000e+00 : f32
    %76 = vector.broadcast %cst_33 : f32 to vector<16x512xf32>
    %77 = arith.cmpf ogt, %75, %76 : vector<16x512xf32>
    %cst_34 = arith.constant 2.000000e-01 : f32
    %78 = vector.broadcast %cst_34 : f32 to vector<16x512xf32>
    %79 = arith.mulf %78, %75 : vector<16x512xf32>
    %80 = arith.select %77, %75, %79 : vector<16x512xi1>, vector<16x512xf32>
    %81 = vector.broadcast %4 : vector<16x1xf32> to vector<16x512xf32>
    %82 = arith.mulf %80, %81 : vector<16x512xf32>
    %83 = arith.truncf %82 : vector<16x512xf32> to vector<16x512xbf16>
    %c0_35 = arith.constant 0 : index
    %c0_36 = arith.constant 0 : index
    %84 = vector.load %arg8[%c0_35, %c0_36] : memref<512x1024xbf16, #tpu.memory_space<vmem>>, vector<512x1024xbf16>
    %cst_37 = arith.constant dense<0.000000e+00> : vector<16x1024xf32>
    %85 = tpu.matmul %83, %84, %cst_37 {dimension_numbers = #tpu.dot_dimension_numbers<[1], [0], [0], [1], [0, 0, 1, 1], [], []>} : vector<16x512xbf16>, vector<512x1024xbf16>, vector<16x1024xf32> -> vector<16x1024xf32>
    %c0_38 = arith.constant 0 : index
    %c0_39 = arith.constant 0 : index
    %86 = vector.load %arg9[%c0_38, %c0_39] : memref<1x1024xf32, #tpu.memory_space<vmem>>, vector<1x1024xf32>
    %c0_40 = arith.constant 0 : index
    %c0_41 = arith.constant 0 : index
    %87 = vector.load %arg10[%c0_40, %c0_41] : memref<1x1024xf32, #tpu.memory_space<vmem>>, vector<1x1024xf32>
    %cst_42 = arith.constant dense<0.000000e+00> : vector<1024xf32>
    %88 = vector.multi_reduction <add>, %85, %cst_42 [0] : vector<16x1024xf32> to vector<1024xf32>
    %89 = vector.shape_cast %88 : vector<1024xf32> to vector<1x1024xf32>
    %cst_43 = arith.constant 1.250000e-01 : f32
    %90 = vector.broadcast %cst_43 : f32 to vector<1x1024xf32>
    %91 = arith.mulf %89, %90 : vector<1x1024xf32>
    %92 = arith.mulf %85, %85 : vector<16x1024xf32>
    %cst_44 = arith.constant dense<0.000000e+00> : vector<1024xf32>
    %93 = vector.multi_reduction <add>, %92, %cst_44 [0] : vector<16x1024xf32> to vector<1024xf32>
    %94 = vector.shape_cast %93 : vector<1024xf32> to vector<1x1024xf32>
    %cst_45 = arith.constant 1.250000e-01 : f32
    %95 = vector.broadcast %cst_45 : f32 to vector<1x1024xf32>
    %96 = arith.mulf %94, %95 : vector<1x1024xf32>
    %97 = arith.mulf %91, %91 : vector<1x1024xf32>
    %98 = arith.subf %96, %97 : vector<1x1024xf32>
    %cst_46 = arith.constant 0.000000e+00 : f32
    %99 = vector.broadcast %cst_46 : f32 to vector<1x1024xf32>
    %100 = arith.maximumf %98, %99 : vector<1x1024xf32>
    %cst_47 = arith.constant 8.000000e-01 : f32
    %101 = vector.broadcast %cst_47 : f32 to vector<1x1024xf32>
    %102 = arith.addf %100, %101 : vector<1x1024xf32>
    %103 = math.rsqrt %102 : vector<1x1024xf32>
    %104 = arith.mulf %86, %103 : vector<1x1024xf32>
    %105 = arith.mulf %91, %104 : vector<1x1024xf32>
    %106 = arith.subf %87, %105 : vector<1x1024xf32>
    %107 = vector.broadcast %104 : vector<1x1024xf32> to vector<16x1024xf32>
    %108 = arith.mulf %85, %107 : vector<16x1024xf32>
    %109 = vector.broadcast %106 : vector<1x1024xf32> to vector<16x1024xf32>
    %110 = arith.addf %108, %109 : vector<16x1024xf32>
    %cst_48 = arith.constant 0.000000e+00 : f32
    %111 = vector.broadcast %cst_48 : f32 to vector<16x1024xf32>
    %112 = arith.cmpf ogt, %110, %111 : vector<16x1024xf32>
    %cst_49 = arith.constant 2.000000e-01 : f32
    %113 = vector.broadcast %cst_49 : f32 to vector<16x1024xf32>
    %114 = arith.mulf %113, %110 : vector<16x1024xf32>
    %115 = arith.select %112, %110, %114 : vector<16x1024xi1>, vector<16x1024xf32>
    %116 = vector.broadcast %4 : vector<16x1xf32> to vector<16x1024xf32>
    %117 = arith.mulf %115, %116 : vector<16x1024xf32>
    %118 = arith.truncf %117 : vector<16x1024xf32> to vector<16x1024xbf16>
    %c0_50 = arith.constant 0 : index
    %c0_51 = arith.constant 0 : index
    %119 = vector.load %arg11[%c0_50, %c0_51] : memref<1024x64xbf16, #tpu.memory_space<vmem>>, vector<1024x64xbf16>
    %cst_52 = arith.constant dense<0.000000e+00> : vector<16x64xf32>
    %120 = tpu.matmul %118, %119, %cst_52 {dimension_numbers = #tpu.dot_dimension_numbers<[1], [0], [0], [1], [0, 0, 1, 1], [], []>} : vector<16x1024xbf16>, vector<1024x64xbf16>, vector<16x64xf32> -> vector<16x64xf32>
    %c0_53 = arith.constant 0 : index
    %c0_54 = arith.constant 0 : index
    %121 = vector.load %arg12[%c0_53, %c0_54] : memref<1x64xf32, #tpu.memory_space<vmem>>, vector<1x64xf32>
    %122 = vector.broadcast %121 : vector<1x64xf32> to vector<16x64xf32>
    %123 = arith.addf %120, %122 : vector<16x64xf32>
    %124 = math.tanh %123 : vector<16x64xf32>
    %125 = arith.truncf %124 : vector<16x64xf32> to vector<16x64xbf16>
    %c0_55 = arith.constant 0 : index
    %c0_56 = arith.constant 0 : index
    %126 = vector.load %arg13[%c0_55, %c0_56] : memref<16x64xbf16, #tpu.memory_space<vmem>>, vector<16x64xbf16>
    tpu.vector_store %arg13[%c0_55, %c0_56], %125 {strides = array<i32>} : memref<16x64xbf16, #tpu.memory_space<vmem>>, vector<16x64xbf16>,
    return
  }
}

</mosaic_0001>

<llo_original>
// kernel: generator_forward.1
$region0: #{generator_forward.1}
  #allocation0 [shape = 'u32[]', space=smem, size = 0x4, offset = 0x4, fixed_abs, tag = 'smem constant byte address 0x4 - core index']
  #allocation1 [shape = 'u32[144,128]{1,0:T(1,128)}', space=vmem, size = 0x12000, scoped, tag = 'internal scratch']
  %s0 = inlined_call_operand.vmem [shape: bf16[16,128], index: 0, kind: input, shape index: {}]
  %s1 = inlined_call_operand.vmem [shape: bf16[128,128], index: 1, kind: input, shape index: {}]
  %s2 = inlined_call_operand.vmem [shape: bf16[128,256], index: 2, kind: input, shape index: {}]
  %s3 = inlined_call_operand.vmem [shape: f32[1,256], index: 3, kind: input, shape index: {}]
  %s4 = inlined_call_operand.vmem [shape: f32[1,256], index: 4, kind: input, shape index: {}]
  %s5 = inlined_call_operand.vmem [shape: bf16[256,512], index: 5, kind: input, shape index: {}]
  %s6 = inlined_call_operand.vmem [shape: f32[1,512], index: 6, kind: input, shape index: {}]
  %s7 = inlined_call_operand.vmem [shape: f32[1,512], index: 7, kind: input, shape index: {}]
  %s8 = inlined_call_operand.hbm [shape: bf16[512,1024], index: 8, kind: input, shape index: {}]
  %s9 = inlined_call_operand.vmem [shape: f32[1,1024], index: 9, kind: input, shape index: {}]
  %s10 = inlined_call_operand.vmem [shape: f32[1,1024], index: 10, kind: input, shape index: {}]
  %s11 = inlined_call_operand.vmem [shape: bf16[1024,64], index: 11, kind: input, shape index: {}]
  %s12 = inlined_call_operand.vmem [shape: f32[1,64], index: 12, kind: input, shape index: {}]
  %s13 = inlined_call_operand.vmem [shape: bf16[16,64], index: 13, kind: output, shape index: {}]
  %s14 = sld [smem:[#allocation0]]
  $region66: #{generator_forward.1} parent=0
    _
  %s16 = ssub.s32 1, %s14
  %s17 = scalar_select 0, %s16, %s14
  $region1: #{generator_forward.1} parent=0
    #allocation2 [shape = 'u8[1048576]{0}', space=vmem, size = 0x100000, scoped, tag = 'input window, operand 8, single buffered']
    #allocation3 [shape = 's32[1]{0}', space=sflag, size = 0x4, scoped, tag = 'scoped memory for generator_forward.1']
    %18 = vsyncpa [#allocation3], 0
    // Predicated region
    $region2: #{generator_forward.1} parent=1 // pred_check
      _
    $region3: #{generator_forward.1} parent=1 // pred_check_branch
      %20 = sbr.rel (0) target = $region5
    $region4: #{generator_forward.1} parent=1 // pred_region
      _
    $region5: #{generator_forward.1} parent=1 // pred_fallthru
      _
    // Predicated region
    $region6: #{generator_forward.1} parent=1 // pred_check
      _
    $region7: #{generator_forward.1} parent=1 // pred_check_branch
      %22 = sbr.rel (0) target = $region9
    $region8: #{generator_forward.1} parent=1 // pred_region
      _
    $region9: #{generator_forward.1} parent=1 // pred_fallthru
      _
    // Predicated region
    $region10: #{generator_forward.1} parent=1 // pred_check
      _
    $region11: #{generator_forward.1} parent=1 // pred_check_branch
      %24 = sbr.rel (0) target = $region13
    $region12: #{generator_forward.1} parent=1 // pred_region
      _
    $region13: #{generator_forward.1} parent=1 // pred_fallthru
      _
    // Predicated region
    $region14: #{generator_forward.1} parent=1 // pred_check
      _
    $region15: #{generator_forward.1} parent=1 // pred_check_branch
      %26 = sbr.rel (0) target = $region17
    $region16: #{generator_forward.1} parent=1 // pred_region
      _
    $region17: #{generator_forward.1} parent=1 // pred_fallthru
      _
    // Predicated region
    $region18: #{generator_forward.1} parent=1 // pred_check
      _
    $region19: #{generator_forward.1} parent=1 // pred_check_branch
      %28 = sbr.rel (0) target = $region21
    $region20: #{generator_forward.1} parent=1 // pred_region
      _
    $region21: #{generator_forward.1} parent=1 // pred_fallthru
      _
    // Predicated region
    $region22: #{generator_forward.1} parent=1 // pred_check
      _
    $region23: #{generator_forward.1} parent=1 // pred_check_branch
      %30 = sbr.rel (0) target = $region25
    $region24: #{generator_forward.1} parent=1 // pred_region
      _
    $region25: #{generator_forward.1} parent=1 // pred_fallthru
      _
    // Predicated region
    $region26: #{generator_forward.1} parent=1 // pred_check
      _
    $region27: #{generator_forward.1} parent=1 // pred_check_branch
      %32 = sbr.rel (0) target = $region29
    $region28: #{generator_forward.1} parent=1 // pred_region
      _
    $region29: #{generator_forward.1} parent=1 // pred_fallthru
      _
    // Predicated region
    $region30: #{generator_forward.1} parent=1 // pred_check
      _
    $region31: #{generator_forward.1} parent=1 // pred_check_branch
      %34 = sbr.rel (0) target = $region33
    $region32: #{generator_forward.1} parent=1 // pred_region
      _
    $region33: #{generator_forward.1} parent=1 // pred_fallthru
      _
    // Predicated region
    $region34: #{generator_forward.1} parent=1 // pred_check
      _
    $region35: #{generator_forward.1} parent=1 // pred_check_branch
      %36 = sbr.rel (0) target = $region37
    $region36: #{generator_forward.1} parent=1 // pred_region
      %s38 = ssub.s32 32768, 32768
      %39 = vsyncadd [#allocation3], %s38
      %s40 = sshll.u32 [#allocation2], 4
      %s41 = int_to_ptr.vmem [resolvable:$true] %s40
      %46 = dma.hbm_to_vmem [thread:$0]  %s8, 32768, %s41, [#allocation3], 512, 512, 32
    $region37: #{generator_forward.1} parent=1 // pred_fallthru
      _
    // Predicated region
    $region38: #{generator_forward.1} parent=1 // pred_check
      _
    $region39: #{generator_forward.1} parent=1 // pred_check_branch
      %48 = sbr.rel (0) target = $region41
    $region40: #{generator_forward.1} parent=1 // pred_region
      _
    $region41: #{generator_forward.1} parent=1 // pred_fallthru
      _
    // Predicated region
    $region42: #{generator_forward.1} parent=1 // pred_check
      _
    $region43: #{generator_forward.1} parent=1 // pred_check_branch
      %50 = sbr.rel (0) target = $region45
    $region44: #{generator_forward.1} parent=1 // pred_region
      _
    $region45: #{generator_forward.1} parent=1 // pred_fallthru
      _
    // Predicated region
    $region46: #{generator_forward.1} parent=1 // pred_check
      _
    $region47: #{generator_forward.1} parent=1 // pred_check_branch
      %52 = sbr.rel (0) target = $region49
    $region48: #{generator_forward.1} parent=1 // pred_region
      _
    $region49: #{generator_forward.1} parent=1 // pred_fallthru
      _
    // Predicated region
    $region50: #{generator_forward.1} parent=1 // pred_check
      _
    $region51: #{generator_forward.1} parent=1 // pred_check_branch
      %54 = sbr.rel (0) target = $region53
    $region52: #{generator_forward.1} parent=1 // pred_region
      _
    $region53: #{generator_forward.1} parent=1 // pred_fallthru
      _
    // Predicated region
    $region54: #{generator_forward.1} parent=1 // pred_check
      _
    $region55: #{generator_forward.1} parent=1 // pred_check_branch
      %56 = sbr.rel (0) target = $region57
    $region56: #{generator_forward.1} parent=1 // pred_region
      %57 = dma.done [#allocation3], 32768
    $region57: #{generator_forward.1} parent=1 // pred_fallthru
      _
    %v59 = vlaneseq
    %v60 = vshrl.u32 %v59, 7
    %v61 = vadd.s32 %v60, 8
    %vm62 = vcmp.lt.s32.totalorder %v60, 8
    %vm63 = vcmp.lt.s32.totalorder %v61, 8
    %v64 = vsel %vm62, 1, 0
    %v65 = vsel %vm63, 1, 0
    %v66 = vcvt.s32.f32 %v64
    %v67 = vcvt.s32.f32 %v65
    %v68 = vld [vmem:[%s0] sm:$0xf]
    %v69 = vld [vmem:[%s0 + $0x4] sm:$0xf]
    %v70 = vld [vmem:[%s1] sm:$0xf]
    %v71 = vld [vmem:[%s1 + $0x4] sm:$0xf]
    %v72 = vld [vmem:[%s1 + $0x8] sm:$0xf]
    %v73 = vld [vmem:[%s1 + $0xc] sm:$0xf]
    %v74 = vld [vmem:[%s1 + $0x10] sm:$0xf]
    %v75 = vld [vmem:[%s1 + $0x14] sm:$0xf]
    %v76 = vld [vmem:[%s1 + $0x18] sm:$0xf]
    %v77 = vld [vmem:[%s1 + $0x1c] sm:$0xf]
    %v78 = vld [vmem:[%s1 + $0x20] sm:$0xf]
    %v79 = vld [vmem:[%s1 + $0x24] sm:$0xf]
    %v80 = vld [vmem:[%s1 + $0x28] sm:$0xf]
    %v81 = vld [vmem:[%s1 + $0x2c] sm:$0xf]
    %v82 = vld [vmem:[%s1 + $0x30] sm:$0xf]
    %v83 = vld [vmem:[%s1 + $0x34] sm:$0xf]
    %v84 = vld [vmem:[%s1 + $0x38] sm:$0xf]
    %v85 = vld [vmem:[%s1 + $0x3c] sm:$0xf]
    %v88 = vunpack.c.l.b16 %v68
    %v89 = vunpack.c.l.b16 %v69
    %v90 = vpack.c.b16 %v89, %v88
    %v108 = vunpack.c.l.b16 %v70
    %v109 = vunpack.c.l.b16 %v71
    %v110 = vunpack.c.l.b16 %v72
    %v111 = vunpack.c.l.b16 %v73
    %v112 = vunpack.c.l.b16 %v74
    %v113 = vunpack.c.l.b16 %v75
    %v114 = vunpack.c.l.b16 %v76
    %v115 = vunpack.c.l.b16 %v77
    %v116 = vunpack.c.l.b16 %v78
    %v117 = vunpack.c.l.b16 %v79
    %v118 = vunpack.c.l.b16 %v80
    %v119 = vunpack.c.l.b16 %v81
    %v120 = vunpack.c.l.b16 %v82
    %v121 = vunpack.c.l.b16 %v83
    %v122 = vunpack.c.l.b16 %v84
    %v123 = vunpack.c.l.b16 %v85
    %v124 = vpack.c.b16 %v109, %v108
    %v125 = vpack.c.b16 %v111, %v110
    %v126 = vpack.c.b16 %v113, %v112
    %v127 = vpack.c.b16 %v115, %v114
    %v128 = vpack.c.b16 %v117, %v116
    %v129 = vpack.c.b16 %v119, %v118
    %v130 = vpack.c.b16 %v121, %v120
    %v131 = vpack.c.b16 %v123, %v122
    %140 = vmatprep.subr.bf16.mxu0 0
    %141 = vmatpush1.bf16.msra.mxu0 %v131
    %142 = vmatprep.subr.bf16.mxu0 0
    %143 = vmatpush1.bf16.msra.mxu0 %v130
    %144 = vmatprep.subr.bf16.mxu0 0
    %145 = vmatpush1.bf16.msra.mxu0 %v129
    %146 = vmatprep.subr.bf16.mxu0 0
    %147 = vmatpush1.bf16.msra.mxu0 %v128
    %148 = vmatprep.subr.bf16.mxu0 0
    %149 = vmatpush1.bf16.msra.mxu0 %v127
    %150 = vmatprep.subr.bf16.mxu0 0
    %151 = vmatpush1.bf16.msra.mxu0 %v126
    %152 = vmatprep.subr.bf16.mxu0 0
    %153 = vmatpush1.bf16.msra.mxu0 %v125
    %154 = vmatprep.subr.bf16.mxu0 0
    %155 = vmatpush1.bf16.msra.mxu0 %v124
    %156 = vmatprep.subr.bf16.mxu0 0
    %157 = vmatpush2.bf16.msra.mxu0 0
    %158 = vmatprep.subr.bf16.mxu0 0
    %159 = vmatpush2.bf16.msra.mxu0 0
    %160 = vmatprep.subr.bf16.mxu0 0
    %161 = vmatpush2.bf16.msra.mxu0 0
    %162 = vmatprep.subr.bf16.mxu0 0
    %163 = vmatpush2.bf16.msra.mxu0 0
    %164 = vmatprep.subr.bf16.mxu0 0
    %165 = vmatpush2.bf16.msra.mxu0 0
    %166 = vmatprep.subr.bf16.mxu0 0
    %167 = vmatpush2.bf16.msra.mxu0 0
    %168 = vmatprep.subr.bf16.mxu0 0
    %169 = vmatpush2.bf16.msra.mxu0 0
    %170 = vmatprep.subr.bf16.mxu0 0
    %171 = vmatpush2.bf16.msra.mxu0 0
    %172 = vmatprep.mubr.bf16.mxu0 0
    %173 = vmatmul.mubr.bf16.gmra.mxu0 %v90
    %v174 = vpop.f32.mrf.mxu0
    %v175 = vadd.f32 0.0, %v174
    %v176 = vpop.f32.mrf.mxu0
    %v177 = vpop.f32.mrf.mxu0
    %v178 = vadd.f32 0.0, %v177
    %v179 = vpop.f32.mrf.mxu0
    %180 = vdwg.mxu0
    %vm181 = vcmp.gt.f32.partialorder %v175, 0.0
    %vm182 = vcmp.gt.f32.partialorder %v178, 0.0
    %v183 = vmul.f32 %v175, 0.2
    %v184 = vmul.f32 %v178, 0.2
    %v185 = vsel %vm181, %v175, %v183
    %v186 = vsel %vm182, %v178, %v184
    %v187 = vpack.c.bf16 %v186, %v185
    %v188 = vld [vmem:[%s2] sm:$0xff]
    %v189 = vld [vmem:[%s2 + $0x8] sm:$0xff]
    %v190 = vld [vmem:[%s2 + $0x10] sm:$0xff]
    %v191 = vld [vmem:[%s2 + $0x18] sm:$0xff]
    %v192 = vld [vmem:[%s2 + $0x20] sm:$0xff]
    %v193 = vld [vmem:[%s2 + $0x28] sm:$0xff]
    %v194 = vld [vmem:[%s2 + $0x30] sm:$0xff]
    %v195 = vld [vmem:[%s2 + $0x38] sm:$0xff]
    %v196 = vld [vmem:[%s2 + $0x40] sm:$0xff]
    %v197 = vld [vmem:[%s2 + $0x48] sm:$0xff]
    %v198 = vld [vmem:[%s2 + $0x50] sm:$0xff]
    %v199 = vld [vmem:[%s2 + $0x58] sm:$0xff]
    %v200 = vld [vmem:[%s2 + $0x60] sm:$0xff]
    %v201 = vld [vmem:[%s2 + $0x68] sm:$0xff]
    %v202 = vld [vmem:[%s2 + $0x70] sm:$0xff]
    %v203 = vld [vmem:[%s2 + $0x78] sm:$0xff]
    %v220 = vunpack.c.l.b16 %v188
    %v221 = vunpack.c.h.b16 %v188
    %v222 = vunpack.c.l.b16 %v189
    %v223 = vunpack.c.h.b16 %v189
    %v224 = vunpack.c.l.b16 %v190
    %v225 = vunpack.c.h.b16 %v190
    %v226 = vunpack.c.l.b16 %v191
    %v227 = vunpack.c.h.b16 %v191
    %v228 = vunpack.c.l.b16 %v192
    %v229 = vunpack.c.h.b16 %v192
    %v230 = vunpack.c.l.b16 %v193
    %v231 = vunpack.c.h.b16 %v193
    %v232 = vunpack.c.l.b16 %v194
    %v233 = vunpack.c.h.b16 %v194
    %v234 = vunpack.c.l.b16 %v195
    %v235 = vunpack.c.h.b16 %v195
    %v236 = vunpack.c.l.b16 %v196
    %v237 = vunpack.c.h.b16 %v196
    %v238 = vunpack.c.l.b16 %v197
    %v239 = vunpack.c.h.b16 %v197
    %v240 = vunpack.c.l.b16 %v198
    %v241 = vunpack.c.h.b16 %v198
    %v242 = vunpack.c.l.b16 %v199
    %v243 = vunpack.c.h.b16 %v199
    %v244 = vunpack.c.l.b16 %v200
    %v245 = vunpack.c.h.b16 %v200
    %v246 = vunpack.c.l.b16 %v201
    %v247 = vunpack.c.h.b16 %v201
    %v248 = vunpack.c.l.b16 %v202
    %v249 = vunpack.c.h.b16 %v202
    %v250 = vunpack.c.l.b16 %v203
    %v251 = vunpack.c.h.b16 %v203
    %v252 = vpack.c.b16 %v222, %v220
    %v253 = vpack.c.b16 %v223, %v221
    %v254 = vpack.c.b16 %v226, %v224
    %v255 = vpack.c.b16 %v227, %v225
    %v256 = vpack.c.b16 %v230, %v228
    %v257 = vpack.c.b16 %v231, %v229
    %v258 = vpack.c.b16 %v234, %v232
    %v259 = vpack.c.b16 %v235, %v233
    %v260 = vpack.c.b16 %v238, %v236
    %v261 = vpack.c.b16 %v239, %v237
    %v262 = vpack.c.b16 %v242, %v240
    %v263 = vpack.c.b16 %v243, %v241
    %v264 = vpack.c.b16 %v246, %v244
    %v265 = vpack.c.b16 %v247, %v245
    %v266 = vpack.c.b16 %v250, %v248
    %v267 = vpack.c.b16 %v251, %v249
    %284 = vmatprep.subr.bf16.mxu0 %v267
    %285 = vmatpush1.bf16.msra.mxu0 %v266
    %286 = vmatprep.subr.bf16.mxu0 %v265
    %287 = vmatpush1.bf16.msra.mxu0 %v264
    %288 = vmatprep.subr.bf16.mxu0 %v263
    %289 = vmatpush1.bf16.msra.mxu0 %v262
    %290 = vmatprep.subr.bf16.mxu0 %v261
    %291 = vmatpush1.bf16.msra.mxu0 %v260
    %292 = vmatprep.subr.bf16.mxu0 %v259
    %293 = vmatpush1.bf16.msra.mxu0 %v258
    %294 = vmatprep.subr.bf16.mxu0 %v257
    %295 = vmatpush1.bf16.msra.mxu0 %v256
    %296 = vmatprep.subr.bf16.mxu0 %v255
    %297 = vmatpush1.bf16.msra.mxu0 %v254
    %298 = vmatprep.subr.bf16.mxu0 %v253
    %299 = vmatpush1.bf16.msra.mxu0 %v252
    %300 = vmatprep.subr.bf16.mxu0 0
    %301 = vmatpush2.bf16.msra.mxu0 0
    %302 = vmatprep.subr.bf16.mxu0 0
    %303 = vmatpush2.bf16.msra.mxu0 0
    %304 = vmatprep.subr.bf16.mxu0 0
    %305 = vmatpush2.bf16.msra.mxu0 0
    %306 = vmatprep.subr.bf16.mxu0 0
    %307 = vmatpush2.bf16.msra.mxu0 0
    %308 = vmatprep.subr.bf16.mxu0 0
    %309 = vmatpush2.bf16.msra.mxu0 0
    %310 = vmatprep.subr.bf16.mxu0 0
    %311 = vmatpush2.bf16.msra.mxu0 0
    %312 = vmatprep.subr.bf16.mxu0 0
    %313 = vmatpush2.bf16.msra.mxu0 0
    %314 = vmatprep.subr.bf16.mxu0 0
    %315 = vmatpush2.bf16.msra.mxu0 0
    %316 = vmatprep.mubr.bf16.mxu0 0
    %317 = vmatmul.mubr.bf16.gmra.mxu0 %v187
    %v318 = vpop.f32.mrf.mxu0
    %v319 = vadd.f32 0.0, %v318
    %v320 = vpop.f32.mrf.mxu0
    %v321 = vadd.f32 0.0, %v320
    %v322 = vpop.f32.mrf.mxu0
    %v323 = vadd.f32 0.0, %v322
    %v324 = vpop.f32.mrf.mxu0
    %v325 = vadd.f32 0.0, %v324
    %326 = vdwg.mxu0
    %v327 = vld [vmem:[%s3] sm:$0x3]
    %v328 = vld [vmem:[%s4] sm:$0x3]
    %v329 = vadd.f32 %v319, %v323
    %v330 = vrot.slane %v329, 4
    %v331 = vadd.f32 %v329, %v330
    %v332 = vrot.slane %v331, 2
    %v333 = vadd.f32 %v331, %v332
    %v334 = vrot.slane %v333, 1
    %v335 = vadd.f32 %v333, %v334
    %v336 = vadd.f32 %v321, %v325
    %v337 = vrot.slane %v336, 4
    %v338 = vadd.f32 %v336, %v337
    %v339 = vrot.slane %v338, 2
    %v340 = vadd.f32 %v338, %v339
    %v341 = vrot.slane %v340, 1
    %v342 = vadd.f32 %v340, %v341
    %v343 = vmul.f32 %v335, 0.125
    %v344 = vmul.f32 %v342, 0.125
    %v345 = vmul.f32 %v319, %v319
    %v346 = vmul.f32 %v321, %v321
    %v347 = vmul.f32 %v323, %v323
    %v348 = vmul.f32 %v325, %v325
    %v349 = vadd.f32 %v345, %v347
    %v350 = vrot.slane %v349, 4
    %v351 = vadd.f32 %v349, %v350
    %v352 = vrot.slane %v351, 2
    %v353 = vadd.f32 %v351, %v352
    %v354 = vrot.slane %v353, 1
    %v355 = vadd.f32 %v353, %v354
    %v356 = vadd.f32 %v346, %v348
    %v357 = vrot.slane %v356, 4
    %v358 = vadd.f32 %v356, %v357
    %v359 = vrot.slane %v358, 2
    %v360 = vadd.f32 %v358, %v359
    %v361 = vrot.slane %v360, 1
    %v362 = vadd.f32 %v360, %v361
    %v363 = vmul.f32 %v355, 0.125
    %v364 = vmul.f32 %v362, 0.125
    %v365 = vmul.f32 %v343, %v343
    %v366 = vmul.f32 %v344, %v344
    %v367 = vsub.f32 %v363, %v365
    %v368 = vsub.f32 %v364, %v366
    %v369 = vmax.f32 %v367, 0.0
    %v370 = vmax.f32 %v368, 0.0
    %v371 = vadd.f32 %v369, 0.8
    %v372 = vadd.f32 %v370, 0.8
    %v373 = vrsqrt.pop %v371
    %v374 = vrsqrt.pop %v372
    %v377 = vcombine.low %v373, %v374
    %v379 = vunpack.c.l.s4 1966171168
    %v380 = vunpack.c.0.s8 %v379
    %v381 = vlaneseq
    %v382 = vshrl.u32 %v381, 7
    %v383 = vsub.s32 %v380, %v382
    %v384 = vrot.slane %v377, %v383
    %v386 = vunpack.c.l.s4 1966171168
    %v387 = vunpack.c.0.s8 %v386
    %v388 = vlaneseq
    %v389 = vshrl.u32 %v388, 7
    %v390 = vsub.s32 %v387, %v389
    %v391 = vrot.slane %v384, %v390
    %v393 = vmul.f32 %v327, %v391
    %v395 = vlaneseq
    %v396 = vshrl.u32 %v395, 7
    %v397 = vsub.s32 0, %v396
    %v398 = vrot.slane %v393, %v397
    %v399 = vlaneseq
    %v400 = vshrl.u32 %v399, 7
    %v401 = vsub.s32 1, %v400
    %v402 = vrot.slane %v393, %v401
    %v405 = vmul.f32 %v343, %v398
    %v406 = vmul.f32 %v344, %v402
    %v409 = vcombine.low %v405, %v406
    %v411 = vunpack.c.l.s4 1966171168
    %v412 = vunpack.c.0.s8 %v411
    %v413 = vlaneseq
    %v414 = vshrl.u32 %v413, 7
    %v415 = vsub.s32 %v412, %v414
    %v416 = vrot.slane %v409, %v415
    %v418 = vunpack.c.l.s4 1966171168
    %v419 = vunpack.c.0.s8 %v418
    %v420 = vlaneseq
    %v421 = vshrl.u32 %v420, 7
    %v422 = vsub.s32 %v419, %v421
    %v423 = vrot.slane %v416, %v422
    %v425 = vsub.f32 %v328, %v423
    %v426 = vmul.f32 %v319, %v398
    %v427 = vmul.f32 %v321, %v402
    %v428 = vmul.f32 %v323, %v398
    %v429 = vmul.f32 %v325, %v402
    %v431 = vlaneseq
    %v432 = vshrl.u32 %v431, 7
    %v433 = vsub.s32 0, %v432
    %v434 = vrot.slane %v425, %v433
    %v435 = vlaneseq
    %v436 = vshrl.u32 %v435, 7
    %v437 = vsub.s32 1, %v436
    %v438 = vrot.slane %v425, %v437
    %v441 = vadd.f32 %v426, %v434
    %v442 = vadd.f32 %v427, %v438
    %v443 = vadd.f32 %v428, %v434
    %v444 = vadd.f32 %v429, %v438
    %vm445 = vcmp.gt.f32.partialorder %v441, 0.0
    %vm446 = vcmp.gt.f32.partialorder %v442, 0.0
    %vm447 = vcmp.gt.f32.partialorder %v443, 0.0
    %vm448 = vcmp.gt.f32.partialorder %v444, 0.0
    %v449 = vmul.f32 %v441, 0.2
    %v450 = vmul.f32 %v442, 0.2
    %v451 = vmul.f32 %v443, 0.2
    %v452 = vmul.f32 %v444, 0.2
    %v453 = vsel %vm445, %v441, %v449
    %v454 = vsel %vm446, %v442, %v450
    %v455 = vsel %vm447, %v443, %v451
    %v456 = vsel %vm448, %v444, %v452
    %v457 = vmul.f32 %v453, %v66
    %v458 = vmul.f32 %v454, %v66
    %v459 = vmul.f32 %v455, %v67
    %v460 = vmul.f32 %v456, %v67
    %v461 = vpack.c.bf16 %v459, %v457
    %v462 = vpack.c.bf16 %v460, %v458
    %v463 = vld [vmem:[%s5] sm:$0xff]
    %v464 = vld [vmem:[%s5 + $0x8] sm:$0xff]
    %v465 = vld [vmem:[%s5 + $0x10] sm:$0xff]
    %v466 = vld [vmem:[%s5 + $0x18] sm:$0xff]
    %v467 = vld [vmem:[%s5 + $0x20] sm:$0xff]
    %v468 = vld [vmem:[%s5 + $0x28] sm:$0xff]
    %v469 = vld [vmem:[%s5 + $0x30] sm:$0xff]
    %v470 = vld [vmem:[%s5 + $0x38] sm:$0xff]
    %v471 = vld [vmem:[%s5 + $0x40] sm:$0xff]
    %v472 = vld [vmem:[%s5 + $0x48] sm:$0xff]
    %v473 = vld [vmem:[%s5 + $0x50] sm:$0xff]
    %v474 = vld [vmem:[%s5 + $0x58] sm:$0xff]
    %v475 = vld [vmem:[%s5 + $0x60] sm:$0xff]
    %v476 = vld [vmem:[%s5 + $0x68] sm:$0xff]
    %v477 = vld [vmem:[%s5 + $0x70] sm:$0xff]
    %v478 = vld [vmem:[%s5 + $0x78] sm:$0xff]
    %v479 = vld [vmem:[%s5 + $0x80] sm:$0xff]
    %v480 = vld [vmem:[%s5 + $0x88] sm:$0xff]
    %v481 = vld [vmem:[%s5 + $0x90] sm:$0xff]
    %v482 = vld [vmem:[%s5 + $0x98] sm:$0xff]
    %v483 = vld [vmem:[%s5 + $0xa0] sm:$0xff]
    %v484 = vld [vmem:[%s5 + $0xa8] sm:$0xff]
    %v485 = vld [vmem:[%s5 + $0xb0] sm:$0xff]
    %v486 = vld [vmem:[%s5 + $0xb8] sm:$0xff]
    %v487 = vld [vmem:[%s5 + $0xc0] sm:$0xff]
    %v488 = vld [vmem:[%s5 + $0xc8] sm:$0xff]
    %v489 = vld [vmem:[%s5 + $0xd0] sm:$0xff]
    %v490 = vld [vmem:[%s5 + $0xd8] sm:$0xff]
    %v491 = vld [vmem:[%s5 + $0xe0] sm:$0xff]
    %v492 = vld [vmem:[%s5 + $0xe8] sm:$0xff]
    %v493 = vld [vmem:[%s5 + $0xf0] sm:$0xff]
    %v494 = vld [vmem:[%s5 + $0xf8] sm:$0xff]
    %v495 = vld [vmem:[%s5 + $0x100] sm:$0xff]
    %v496 = vld [vmem:[%s5 + $0x108] sm:$0xff]
    %v497 = vld [vmem:[%s5 + $0x110] sm:$0xff]
    %v498 = vld [vmem:[%s5 + $0x118] sm:$0xff]
    %v499 = vld [vmem:[%s5 + $0x120] sm:$0xff]
    %v500 = vld [vmem:[%s5 + $0x128] sm:$0xff]
    %v501 = vld [vmem:[%s5 + $0x130] sm:$0xff]
    %v502 = vld [vmem:[%s5 + $0x138] sm:$0xff]
    %v503 = vld [vmem:[%s5 + $0x140] sm:$0xff]
    %v504 = vld [vmem:[%s5 + $0x148] sm:$0xff]
    %v505 = vld [vmem:[%s5 + $0x150] sm:$0xff]
    %v506 = vld [vmem:[%s5 + $0x158] sm:$0xff]
    %v507 = vld [vmem:[%s5 + $0x160] sm:$0xff]
    %v508 = vld [vmem:[%s5 + $0x168] sm:$0xff]
    %v509 = vld [vmem:[%s5 + $0x170] sm:$0xff]
    %v510 = vld [vmem:[%s5 + $0x178] sm:$0xff]
    %v511 = vld [vmem:[%s5 + $0x180] sm:$0xff]
    %v512 = vld [vmem:[%s5 + $0x188] sm:$0xff]
    %v513 = vld [vmem:[%s5 + $0x190] sm:$0xff]
    %v514 = vld [vmem:[%s5 + $0x198] sm:$0xff]
    %v515 = vld [vmem:[%s5 + $0x1a0] sm:$0xff]
    %v516 = vld [vmem:[%s5 + $0x1a8] sm:$0xff]
    %v517 = vld [vmem:[%s5 + $0x1b0] sm:$0xff]
    %v518 = vld [vmem:[%s5 + $0x1b8] sm:$0xff]
    %v519 = vld [vmem:[%s5 + $0x1c0] sm:$0xff]
    %v520 = vld [vmem:[%s5 + $0x1c8] sm:$0xff]
    %v521 = vld [vmem:[%s5 + $0x1d0] sm:$0xff]
    %v522 = vld [vmem:[%s5 + $0x1d8] sm:$0xff]
    %v523 = vld [vmem:[%s5 + $0x1e0] sm:$0xff]
    %v524 = vld [vmem:[%s5 + $0x1e8] sm:$0xff]
    %v525 = vld [vmem:[%s5 + $0x1f0] sm:$0xff]
    %v526 = vld [vmem:[%s5 + $0x1f8] sm:$0xff]
    %v591 = vunpack.c.l.b16 %v463
    %v592 = vunpack.c.h.b16 %v463
    %v593 = vunpack.c.l.b16 %v464
    %v594 = vunpack.c.h.b16 %v464
    %v595 = vunpack.c.l.b16 %v465
    %v596 = vunpack.c.h.b16 %v465
    %v597 = vunpack.c.l.b16 %v466
    %v598 = vunpack.c.h.b16 %v466
    %v599 = vunpack.c.l.b16 %v467
    %v600 = vunpack.c.h.b16 %v467
    %v601 = vunpack.c.l.b16 %v468
    %v602 = vunpack.c.h.b16 %v468
    %v603 = vunpack.c.l.b16 %v469
    %v604 = vunpack.c.h.b16 %v469
    %v605 = vunpack.c.l.b16 %v470
    %v606 = vunpack.c.h.b16 %v470
    %v607 = vunpack.c.l.b16 %v471
    %v608 = vunpack.c.h.b16 %v471
    %v609 = vunpack.c.l.b16 %v472
    %v610 = vunpack.c.h.b16 %v472
    %v611 = vunpack.c.l.b16 %v473
    %v612 = vunpack.c.h.b16 %v473
    %v613 = vunpack.c.l.b16 %v474
    %v614 = vunpack.c.h.b16 %v474
    %v615 = vunpack.c.l.b16 %v475
    %v616 = vunpack.c.h.b16 %v475
    %v617 = vunpack.c.l.b16 %v476
    %v618 = vunpack.c.h.b16 %v476
    %v619 = vunpack.c.l.b16 %v477
    %v620 = vunpack.c.h.b16 %v477
    %v621 = vunpack.c.l.b16 %v478
    %v622 = vunpack.c.h.b16 %v478
    %v623 = vunpack.c.l.b16 %v479
    %v624 = vunpack.c.h.b16 %v479
    %v625 = vunpack.c.l.b16 %v480
    %v626 = vunpack.c.h.b16 %v480
    %v627 = vunpack.c.l.b16 %v481
    %v628 = vunpack.c.h.b16 %v481
    %v629 = vunpack.c.l.b16 %v482
    %v630 = vunpack.c.h.b16 %v482
    %v631 = vunpack.c.l.b16 %v483
    %v632 = vunpack.c.h.b16 %v483
    %v633 = vunpack.c.l.b16 %v484
    %v634 = vunpack.c.h.b16 %v484
    %v635 = vunpack.c.l.b16 %v485
    %v636 = vunpack.c.h.b16 %v485
    %v637 = vunpack.c.l.b16 %v486
    %v638 = vunpack.c.h.b16 %v486
    %v639 = vunpack.c.l.b16 %v487
    %v640 = vunpack.c.h.b16 %v487
    %v641 = vunpack.c.l.b16 %v488
    %v642 = vunpack.c.h.b16 %v488
    %v643 = vunpack.c.l.b16 %v489
    %v644 = vunpack.c.h.b16 %v489
    %v645 = vunpack.c.l.b16 %v490
    %v646 = vunpack.c.h.b16 %v490
    %v647 = vunpack.c.l.b16 %v491
    %v648 = vunpack.c.h.b16 %v491
    %v649 = vunpack.c.l.b16 %v492
    %v650 = vunpack.c.h.b16 %v492
    %v651 = vunpack.c.l.b16 %v493
    %v652 = vunpack.c.h.b16 %v493
    %v653 = vunpack.c.l.b16 %v494
    %v654 = vunpack.c.h.b16 %v494
    %v655 = vunpack.c.l.b16 %v495
    %v656 = vunpack.c.h.b16 %v495
    %v657 = vunpack.c.l.b16 %v496
    %v658 = vunpack.c.h.b16 %v496
    %v659 = vunpack.c.l.b16 %v497
    %v660 = vunpack.c.h.b16 %v497
    %v661 = vunpack.c.l.b16 %v498
    %v662 = vunpack.c.h.b16 %v498
    %v663 = vunpack.c.l.b16 %v499
    %v664 = vunpack.c.h.b16 %v499
    %v665 = vunpack.c.l.b16 %v500
    %v666 = vunpack.c.h.b16 %v500
    %v667 = vunpack.c.l.b16 %v501
    %v668 = vunpack.c.h.b16 %v501
    %v669 = vunpack.c.l.b16 %v502
    %v670 = vunpack.c.h.b16 %v502
    %v671 = vunpack.c.l.b16 %v503
    %v672 = vunpack.c.h.b16 %v503
    %v673 = vunpack.c.l.b16 %v504
    %v674 = vunpack.c.h.b16 %v504
    %v675 = vunpack.c.l.b16 %v505
    %v676 = vunpack.c.h.b16 %v505
    %v677 = vunpack.c.l.b16 %v506
    %v678 = vunpack.c.h.b16 %v506
    %v679 = vunpack.c.l.b16 %v507
    %v680 = vunpack.c.h.b16 %v507
    %v681 = vunpack.c.l.b16 %v508
    %v682 = vunpack.c.h.b16 %v508
    %v683 = vunpack.c.l.b16 %v509
    %v684 = vunpack.c.h.b16 %v509
    %v685 = vunpack.c.l.b16 %v510
    %v686 = vunpack.c.h.b16 %v510
    %v687 = vunpack.c.l.b16 %v511
    %v688 = vunpack.c.h.b16 %v511
    %v689 = vunpack.c.l.b16 %v512
    %v690 = vunpack.c.h.b16 %v512
    %v691 = vunpack.c.l.b16 %v513
    %v692 = vunpack.c.h.b16 %v513
    %v693 = vunpack.c.l.b16 %v514
    %v694 = vunpack.c.h.b16 %v514
    %v695 = vunpack.c.l.b16 %v515
    %v696 = vunpack.c.h.b16 %v515
    %v697 = vunpack.c.l.b16 %v516
    %v698 = vunpack.c.h.b16 %v516
    %v699 = vunpack.c.l.b16 %v517
    %v700 = vunpack.c.h.b16 %v517
    %v701 = vunpack.c.l.b16 %v518
    %v702 = vunpack.c.h.b16 %v518
    %v703 = vunpack.c.l.b16 %v519
    %v704 = vunpack.c.h.b16 %v519
    %v705 = vunpack.c.l.b16 %v520
    %v706 = vunpack.c.h.b16 %v520
    %v707 = vunpack.c.l.b16 %v521
    %v708 = vunpack.c.h.b16 %v521
    %v709 = vunpack.c.l.b16 %v522
    %v710 = vunpack.c.h.b16 %v522
    %v711 = vunpack.c.l.b16 %v523
    %v712 = vunpack.c.h.b16 %v523
    %v713 = vunpack.c.l.b16 %v524
    %v714 = vunpack.c.h.b16 %v524
    %v715 = vunpack.c.l.b16 %v525
    %v716 = vunpack.c.h.b16 %v525
    %v717 = vunpack.c.l.b16 %v526
    %v718 = vunpack.c.h.b16 %v526
    %v719 = vpack.c.b16 %v595, %v591
    %v720 = vpack.c.b16 %v596, %v592
    %v721 = vpack.c.b16 %v597, %v593
    %v722 = vpack.c.b16 %v598, %v594
    %v723 = vpack.c.b16 %v603, %v599
    %v724 = vpack.c.b16 %v604, %v600
    %v725 = vpack.c.b16 %v605, %v601
    %v726 = vpack.c.b16 %v606, %v602
    %v727 = vpack.c.b16 %v611, %v607
    %v728 = vpack.c.b16 %v612, %v608
    %v729 = vpack.c.b16 %v613, %v609
    %v730 = vpack.c.b16 %v614, %v610
    %v731 = vpack.c.b16 %v619, %v615
    %v732 = vpack.c.b16 %v620, %v616
    %v733 = vpack.c.b16 %v621, %v617
    %v734 = vpack.c.b16 %v622, %v618
    %v735 = vpack.c.b16 %v627, %v623
    %v736 = vpack.c.b16 %v628, %v624
    %v737 = vpack.c.b16 %v629, %v625
    %v738 = vpack.c.b16 %v630, %v626
    %v739 = vpack.c.b16 %v635, %v631
    %v740 = vpack.c.b16 %v636, %v632
    %v741 = vpack.c.b16 %v637, %v633
    %v742 = vpack.c.b16 %v638, %v634
    %v743 = vpack.c.b16 %v643, %v639
    %v744 = vpack.c.b16 %v644, %v640
    %v745 = vpack.c.b16 %v645, %v641
    %v746 = vpack.c.b16 %v646, %v642
    %v747 = vpack.c.b16 %v651, %v647
    %v748 = vpack.c.b16 %v652, %v648
    %v749 = vpack.c.b16 %v653, %v649
    %v750 = vpack.c.b16 %v654, %v650
    %v751 = vpack.c.b16 %v659, %v655
    %v752 = vpack.c.b16 %v660, %v656
    %v753 = vpack.c.b16 %v661, %v657
    %v754 = vpack.c.b16 %v662, %v658
    %v755 = vpack.c.b16 %v667, %v663
    %v756 = vpack.c.b16 %v668, %v664
    %v757 = vpack.c.b16 %v669, %v665
    %v758 = vpack.c.b16 %v670, %v666
    %v759 = vpack.c.b16 %v675, %v671
    %v760 = vpack.c.b16 %v676, %v672
    %v761 = vpack.c.b16 %v677, %v673
    %v762 = vpack.c.b16 %v678, %v674
    %v763 = vpack.c.b16 %v683, %v679
    %v764 = vpack.c.b16 %v684, %v680
    %v765 = vpack.c.b16 %v685, %v681
    %v766 = vpack.c.b16 %v686, %v682
    %v767 = vpack.c.b16 %v691, %v687
    %v768 = vpack.c.b16 %v692, %v688
    %v769 = vpack.c.b16 %v693, %v689
    %v770 = vpack.c.b16 %v694, %v690
    %v771 = vpack.c.b16 %v699, %v695
    %v772 = vpack.c.b16 %v700, %v696
    %v773 = vpack.c.b16 %v701, %v697
    %v774 = vpack.c.b16 %v702, %v698
    %v775 = vpack.c.b16 %v707, %v703
    %v776 = vpack.c.b16 %v708, %v704
    %v777 = vpack.c.b16 %v709, %v705
    %v778 = vpack.c.b16 %v710, %v706
    %v779 = vpack.c.b16 %v715, %v711
    %v780 = vpack.c.b16 %v716, %v712
    %v781 = vpack.c.b16 %v717, %v713
    %v782 = vpack.c.b16 %v718, %v714
    %847 = vmatprep.subr.bf16.mxu0 %v748
    %848 = vmatpush1.bf16.msra.mxu0 %v747
    %849 = vmatprep.subr.bf16.mxu0 %v744
    %850 = vmatpush1.bf16.msra.mxu0 %v743
    %851 = vmatprep.subr.bf16.mxu0 %v740
    %852 = vmatpush1.bf16.msra.mxu0 %v739
    %853 = vmatprep.subr.bf16.mxu0 %v736
    %854 = vmatpush1.bf16.msra.mxu0 %v735
    %855 = vmatprep.subr.bf16.mxu0 %v732
    %856 = vmatpush1.bf16.msra.mxu0 %v731
    %857 = vmatprep.subr.bf16.mxu0 %v728
    %858 = vmatpush1.bf16.msra.mxu0 %v727
    %859 = vmatprep.subr.bf16.mxu0 %v724
    %860 = vmatpush1.bf16.msra.mxu0 %v723
    %861 = vmatprep.subr.bf16.mxu0 %v720
    %862 = vmatpush1.bf16.msra.mxu0 %v719
    %863 = vmatprep.subr.bf16.mxu0 %v780
    %864 = vmatpush2.bf16.msra.mxu0 %v779
    %865 = vmatprep.subr.bf16.mxu0 %v776
    %866 = vmatpush2.bf16.msra.mxu0 %v775
    %867 = vmatprep.subr.bf16.mxu0 %v772
    %868 = vmatpush2.bf16.msra.mxu0 %v771
    %869 = vmatprep.subr.bf16.mxu0 %v768
    %870 = vmatpush2.bf16.msra.mxu0 %v767
    %871 = vmatprep.subr.bf16.mxu0 %v764
    %872 = vmatpush2.bf16.msra.mxu0 %v763
    %873 = vmatprep.subr.bf16.mxu0 %v760
    %874 = vmatpush2.bf16.msra.mxu0 %v759
    %875 = vmatprep.subr.bf16.mxu0 %v756
    %876 = vmatpush2.bf16.msra.mxu0 %v755
    %877 = vmatprep.subr.bf16.mxu0 %v752
    %878 = vmatpush2.bf16.msra.mxu0 %v751
    %879 = vmatprep.mubr.bf16.mxu0 %v462
    %880 = vmatmul.mubr.bf16.gmra.mxu0 %v461
    %v881 = vpop.f32.mrf.mxu0
    %v882 = vadd.f32 0.0, %v881
    %v883 = vpop.f32.mrf.mxu0
    %v884 = vadd.f32 0.0, %v883
    %v885 = vpop.f32.mrf.mxu0
    %v886 = vadd.f32 0.0, %v885
    %v887 = vpop.f32.mrf.mxu0
    %v888 = vadd.f32 0.0, %v887
    %889 = vdwg.mxu0
    %890 = vmatprep.subr.bf16.mxu0 %v750
    %891 = vmatpush1.bf16.msra.mxu0 %v749
    %892 = vmatprep.subr.bf16.mxu0 %v746
    %893 = vmatpush1.bf16.msra.mxu0 %v745
    %894 = vmatprep.subr.bf16.mxu0 %v742
    %895 = vmatpush1.bf16.msra.mxu0 %v741
    %896 = vmatprep.subr.bf16.mxu0 %v738
    %897 = vmatpush1.bf16.msra.mxu0 %v737
    %898 = vmatprep.subr.bf16.mxu0 %v734
    %899 = vmatpush1.bf16.msra.mxu0 %v733
    %900 = vmatprep.subr.bf16.mxu0 %v730
    %901 = vmatpush1.bf16.msra.mxu0 %v729
    %902 = vmatprep.subr.bf16.mxu0 %v726
    %903 = vmatpush1.bf16.msra.mxu0 %v725
    %904 = vmatprep.subr.bf16.mxu0 %v722
    %905 = vmatpush1.bf16.msra.mxu0 %v721
    %906 = vmatprep.subr.bf16.mxu0 %v782
    %907 = vmatpush2.bf16.msra.mxu0 %v781
    %908 = vmatprep.subr.bf16.mxu0 %v778
    %909 = vmatpush2.bf16.msra.mxu0 %v777
    %910 = vmatprep.subr.bf16.mxu0 %v774
    %911 = vmatpush2.bf16.msra.mxu0 %v773
    %912 = vmatprep.subr.bf16.mxu0 %v770
    %913 = vmatpush2.bf16.msra.mxu0 %v769
    %914 = vmatprep.subr.bf16.mxu0 %v766
    %915 = vmatpush2.bf16.msra.mxu0 %v765
    %916 = vmatprep.subr.bf16.mxu0 %v762
    %917 = vmatpush2.bf16.msra.mxu0 %v761
    %918 = vmatprep.subr.bf16.mxu0 %v758
    %919 = vmatpush2.bf16.msra.mxu0 %v757
    %920 = vmatprep.subr.bf16.mxu0 %v754
    %921 = vmatpush2.bf16.msra.mxu0 %v753
    %922 = vmatprep.mubr.bf16.mxu0 %v462
    %923 = vmatmul.mubr.bf16.gmra.mxu0 %v461
    %v924 = vpop.f32.mrf.mxu0
    %v925 = vadd.f32 0.0, %v924
    %v926 = vpop.f32.mrf.mxu0
    %v927 = vadd.f32 0.0, %v926
    %v928 = vpop.f32.mrf.mxu0
    %v929 = vadd.f32 0.0, %v928
    %v930 = vpop.f32.mrf.mxu0
    %v931 = vadd.f32 0.0, %v930
    %932 = vdwg.mxu0
    %v933 = vld [vmem:[%s6] sm:$0xf]
    %v934 = vld [vmem:[%s7] sm:$0xf]
    %v935 = vadd.f32 %v882, %v886
    %v936 = vrot.slane %v935, 4
    %v937 = vadd.f32 %v935, %v936
    %v938 = vrot.slane %v937, 2
    %v939 = vadd.f32 %v937, %v938
    %v940 = vrot.slane %v939, 1
    %v941 = vadd.f32 %v939, %v940
    %v942 = vadd.f32 %v884, %v888
    %v943 = vrot.slane %v942, 4
    %v944 = vadd.f32 %v942, %v943
    %v945 = vrot.slane %v944, 2
    %v946 = vadd.f32 %v944, %v945
    %v947 = vrot.slane %v946, 1
    %v948 = vadd.f32 %v946, %v947
    %v949 = vadd.f32 %v925, %v929
    %v950 = vrot.slane %v949, 4
    %v951 = vadd.f32 %v949, %v950
    %v952 = vrot.slane %v951, 2
    %v953 = vadd.f32 %v951, %v952
    %v954 = vrot.slane %v953, 1
    %v955 = vadd.f32 %v953, %v954
    %v956 = vadd.f32 %v927, %v931
    %v957 = vrot.slane %v956, 4
    %v958 = vadd.f32 %v956, %v957
    %v959 = vrot.slane %v958, 2
    %v960 = vadd.f32 %v958, %v959
    %v961 = vrot.slane %v960, 1
    %v962 = vadd.f32 %v960, %v961
    %v963 = vmul.f32 %v941, 0.125
    %v964 = vmul.f32 %v948, 0.125
    %v965 = vmul.f32 %v955, 0.125
    %v966 = vmul.f32 %v962, 0.125
    %v967 = vmul.f32 %v882, %v882
    %v968 = vmul.f32 %v884, %v884
    %v969 = vmul.f32 %v925, %v925
    %v970 = vmul.f32 %v927, %v927
    %v971 = vmul.f32 %v886, %v886
    %v972 = vmul.f32 %v888, %v888
    %v973 = vmul.f32 %v929, %v929
    %v974 = vmul.f32 %v931, %v931
    %v975 = vadd.f32 %v967, %v971
    %v976 = vrot.slane %v975, 4
    %v977 = vadd.f32 %v975, %v976
    %v978 = vrot.slane %v977, 2
    %v979 = vadd.f32 %v977, %v978
    %v980 = vrot.slane %v979, 1
    %v981 = vadd.f32 %v979, %v980
    %v982 = vadd.f32 %v968, %v972
    %v983 = vrot.slane %v982, 4
    %v984 = vadd.f32 %v982, %v983
    %v985 = vrot.slane %v984, 2
    %v986 = vadd.f32 %v984, %v985
    %v987 = vrot.slane %v986, 1
    %v988 = vadd.f32 %v986, %v987
    %v989 = vadd.f32 %v969, %v973
    %v990 = vrot.slane %v989, 4
    %v991 = vadd.f32 %v989, %v990
    %v992 = vrot.slane %v991, 2
    %v993 = vadd.f32 %v991, %v992
    %v994 = vrot.slane %v993, 1
    %v995 = vadd.f32 %v993, %v994
    %v996 = vadd.f32 %v970, %v974
    %v997 = vrot.slane %v996, 4
    %v998 = vadd.f32 %v996, %v997
    %v999 = vrot.slane %v998, 2
    %v1000 = vadd.f32 %v998, %v999
    %v1001 = vrot.slane %v1000, 1
    %v1002 = vadd.f32 %v1000, %v1001
    %v1003 = vmul.f32 %v981, 0.125
    %v1004 = vmul.f32 %v988, 0.125
    %v1005 = vmul.f32 %v995, 0.125
    %v1006 = vmul.f32 %v1002, 0.125
    %v1007 = vmul.f32 %v963, %v963
    %v1008 = vmul.f32 %v964, %v964
    %v1009 = vmul.f32 %v965, %v965
    %v1010 = vmul.f32 %v966, %v966
    %v1011 = vsub.f32 %v1003, %v1007
    %v1012 = vsub.f32 %v1004, %v1008
    %v1013 = vsub.f32 %v1005, %v1009
    %v1014 = vsub.f32 %v1006, %v1010
    %v1015 = vmax.f32 %v1011, 0.0
    %v1016 = vmax.f32 %v1012, 0.0
    %v1017 = vmax.f32 %v1013, 0.0
    %v1018 = vmax.f32 %v1014, 0.0
    %v1019 = vadd.f32 %v1015, 0.8
    %v1020 = vadd.f32 %v1016, 0.8
    %v1021 = vadd.f32 %v1017, 0.8
    %v1022 = vadd.f32 %v1018, 0.8
    %v1023 = vrsqrt.pop %v1019
    %v1024 = vrsqrt.pop %v1020
    %v1025 = vrsqrt.pop %v1021
    %v1026 = vrsqrt.pop %v1022
    %v1031 = vcombine.low %v1023, %v1024
    %v1032 = vcombine.low %v1025, %v1026
    %v1034 = vunpack.c.l.s4 1966171168
    %v1035 = vunpack.c.0.s8 %v1034
    %v1036 = vlaneseq
    %v1037 = vshrl.u32 %v1036, 7
    %v1038 = vsub.s32 %v1035, %v1037
    %v1039 = vrot.slane %v1031, %v1038
    %v1041 = vunpack.c.l.s4 1966171168
    %v1042 = vunpack.c.0.s8 %v1041
    %v1043 = vlaneseq
    %v1044 = vshrl.u32 %v1043, 7
    %v1045 = vsub.s32 %v1042, %v1044
    %v1046 = vrot.slane %v1032, %v1045
    %v1047 = vcombine.low %v1039, %v1046
    %v1049 = vunpack.c.l.s4 1966171168
    %v1050 = vunpack.c.0.s8 %v1049
    %v1051 = vlaneseq
    %v1052 = vshrl.u32 %v1051, 7
    %v1053 = vsub.s32 %v1050, %v1052
    %v1054 = vrot.slane %v1047, %v1053
    %v1056 = vmul.f32 %v933, %v1054
    %v1058 = vlaneseq
    %v1059 = vshrl.u32 %v1058, 7
    %v1060 = vsub.s32 0, %v1059
    %v1061 = vrot.slane %v1056, %v1060
    %v1062 = vlaneseq
    %v1063 = vshrl.u32 %v1062, 7
    %v1064 = vsub.s32 1, %v1063
    %v1065 = vrot.slane %v1056, %v1064
    %v1066 = vlaneseq
    %v1067 = vshrl.u32 %v1066, 7
    %v1068 = vsub.s32 2, %v1067
    %v1069 = vrot.slane %v1056, %v1068
    %v1070 = vlaneseq
    %v1071 = vshrl.u32 %v1070, 7
    %v1072 = vsub.s32 3, %v1071
    %v1073 = vrot.slane %v1056, %v1072
    %v1078 = vmul.f32 %v963, %v1061
    %v1079 = vmul.f32 %v964, %v1065
    %v1080 = vmul.f32 %v965, %v1069
    %v1081 = vmul.f32 %v966, %v1073
    %v1086 = vcombine.low %v1078, %v1079
    %v1087 = vcombine.low %v1080, %v1081
    %v1089 = vunpack.c.l.s4 1966171168
    %v1090 = vunpack.c.0.s8 %v1089
    %v1091 = vlaneseq
    %v1092 = vshrl.u32 %v1091, 7
    %v1093 = vsub.s32 %v1090, %v1092
    %v1094 = vrot.slane %v1086, %v1093
    %v1096 = vunpack.c.l.s4 1966171168
    %v1097 = vunpack.c.0.s8 %v1096
    %v1098 = vlaneseq
    %v1099 = vshrl.u32 %v1098, 7
    %v1100 = vsub.s32 %v1097, %v1099
    %v1101 = vrot.slane %v1087, %v1100
    %v1102 = vcombine.low %v1094, %v1101
    %v1104 = vunpack.c.l.s4 1966171168
    %v1105 = vunpack.c.0.s8 %v1104
    %v1106 = vlaneseq
    %v1107 = vshrl.u32 %v1106, 7
    %v1108 = vsub.s32 %v1105, %v1107
    %v1109 = vrot.slane %v1102, %v1108
    %v1111 = vsub.f32 %v934, %v1109
    %v1112 = vmul.f32 %v882, %v1061
    %v1113 = vmul.f32 %v884, %v1065
    %v1114 = vmul.f32 %v925, %v1069
    %v1115 = vmul.f32 %v927, %v1073
    %v1116 = vmul.f32 %v886, %v1061
    %v1117 = vmul.f32 %v888, %v1065
    %v1118 = vmul.f32 %v929, %v1069
    %v1119 = vmul.f32 %v931, %v1073
    %v1121 = vlaneseq
    %v1122 = vshrl.u32 %v1121, 7
    %v1123 = vsub.s32 0, %v1122
    %v1124 = vrot.slane %v1111, %v1123
    %v1125 = vlaneseq
    %v1126 = vshrl.u32 %v1125, 7
    %v1127 = vsub.s32 1, %v1126
    %v1128 = vrot.slane %v1111, %v1127
    %v1129 = vlaneseq
    %v1130 = vshrl.u32 %v1129, 7
    %v1131 = vsub.s32 2, %v1130
    %v1132 = vrot.slane %v1111, %v1131
    %v1133 = vlaneseq
    %v1134 = vshrl.u32 %v1133, 7
    %v1135 = vsub.s32 3, %v1134
    %v1136 = vrot.slane %v1111, %v1135
    %v1141 = vadd.f32 %v1112, %v1124
    %v1142 = vadd.f32 %v1113, %v1128
    %v1143 = vadd.f32 %v1114, %v1132
    %v1144 = vadd.f32 %v1115, %v1136
    %v1145 = vadd.f32 %v1116, %v1124
    %v1146 = vadd.f32 %v1117, %v1128
    %v1147 = vadd.f32 %v1118, %v1132
    %v1148 = vadd.f32 %v1119, %v1136
    %vm1149 = vcmp.gt.f32.partialorder %v1141, 0.0
    %vm1150 = vcmp.gt.f32.partialorder %v1142, 0.0
    %vm1151 = vcmp.gt.f32.partialorder %v1143, 0.0
    %vm1152 = vcmp.gt.f32.partialorder %v1144, 0.0
    %vm1153 = vcmp.gt.f32.partialorder %v1145, 0.0
    %vm1154 = vcmp.gt.f32.partialorder %v1146, 0.0
    %vm1155 = vcmp.gt.f32.partialorder %v1147, 0.0
    %vm1156 = vcmp.gt.f32.partialorder %v1148, 0.0
    %v1157 = vmul.f32 %v1141, 0.2
    %v1158 = vmul.f32 %v1142, 0.2
    %v1159 = vmul.f32 %v1143, 0.2
    %v1160 = vmul.f32 %v1144, 0.2
    %v1161 = vmul.f32 %v1145, 0.2
    %v1162 = vmul.f32 %v1146, 0.2
    %v1163 = vmul.f32 %v1147, 0.2
    %v1164 = vmul.f32 %v1148, 0.2
    %v1165 = vsel %vm1149, %v1141, %v1157
    %v1166 = vsel %vm1150, %v1142, %v1158
    %v1167 = vsel %vm1151, %v1143, %v1159
    %v1168 = vsel %vm1152, %v1144, %v1160
    %v1169 = vsel %vm1153, %v1145, %v1161
    %v1170 = vsel %vm1154, %v1146, %v1162
    %v1171 = vsel %vm1155, %v1147, %v1163
    %v1172 = vsel %vm1156, %v1148, %v1164
    %v1173 = vmul.f32 %v1165, %v66
    %v1174 = vmul.f32 %v1166, %v66
    %v1175 = vmul.f32 %v1167, %v66
    %v1176 = vmul.f32 %v1168, %v66
    %v1177 = vmul.f32 %v1169, %v67
    %v1178 = vmul.f32 %v1170, %v67
    %v1179 = vmul.f32 %v1171, %v67
    %v1180 = vmul.f32 %v1172, %v67
    %v1181 = vpack.c.bf16 %v1177, %v1173
    %v1182 = vpack.c.bf16 %v1178, %v1174
    %v1183 = vpack.c.bf16 %v1179, %v1175
    %v1184 = vpack.c.bf16 %v1180, %v1176
    %v1185 = vld [vmem:[#allocation2] sm:$0xff]
    %v1186 = vld [vmem:[#allocation2 + $0x8] sm:$0xff]
    %v1187 = vld [vmem:[#allocation2 + $0x10] sm:$0xff]
    %v1188 = vld [vmem:[#allocation2 + $0x18] sm:$0xff]
    %v1189 = vld [vmem:[#allocation2 + $0x20] sm:$0xff]
    %v1190 = vld [vmem:[#allocation2 + $0x28] sm:$0xff]
    %v1191 = vld [vmem:[#allocation2 + $0x30] sm:$0xff]
    %v1192 = vld [vmem:[#allocation2 + $0x38] sm:$0xff]
    %v1193 = vld [vmem:[#allocation2 + $0x40] sm:$0xff]
    %v1194 = vld [vmem:[#allocation2 + $0x48] sm:$0xff]
    %v1195 = vld [vmem:[#allocation2 + $0x50] sm:$0xff]
    %v1196 = vld [vmem:[#allocation2 + $0x58] sm:$0xff]
    %v1197 = vld [vmem:[#allocation2 + $0x60] sm:$0xff]
    %v1198 = vld [vmem:[#allocation2 + $0x68] sm:$0xff]
    %v1199 = vld [vmem:[#allocation2 + $0x70] sm:$0xff]
    %v1200 = vld [vmem:[#allocation2 + $0x78] sm:$0xff]
    %v1201 = vld [vmem:[#allocation2 + $0x80] sm:$0xff]
    %v1202 = vld [vmem:[#allocation2 + $0x88] sm:$0xff]
    %v1203 = vld [vmem:[#allocation2 + $0x90] sm:$0xff]
    %v1204 = vld [vmem:[#allocation2 + $0x98] sm:$0xff]
    %v1205 = vld [vmem:[#allocation2 + $0xa0] sm:$0xff]
    %v1206 = vld [vmem:[#allocation2 + $0xa8] sm:$0xff]
    %v1207 = vld [vmem:[#allocation2 + $0xb0] sm:$0xff]
    %v1208 = vld [vmem:[#allocation2 + $0xb8] sm:$0xff]
    %v1209 = vld [vmem:[#allocation2 + $0xc0] sm:$0xff]
    %v1210 = vld [vmem:[#allocation2 + $0xc8] sm:$0xff]
    %v1211 = vld [vmem:[#allocation2 + $0xd0] sm:$0xff]
    %v1212 = vld [vmem:[#allocation2 + $0xd8] sm:$0xff]
    %v1213 = vld [vmem:[#allocation2 + $0xe0] sm:$0xff]
    %v1214 = vld [vmem:[#allocation2 + $0xe8] sm:$0xff]
    %v1215 = vld [vmem:[#allocation2 + $0xf0] sm:$0xff]
    %v1216 = vld [vmem:[#allocation2 + $0xf8] sm:$0xff]
    %v1217 = vld [vmem:[#allocation2 + $0x100] sm:$0xff]
    %v1218 = vld [vmem:[#allocation2 + $0x108] sm:$0xff]
    %v1219 = vld [vmem:[#allocation2 + $0x110] sm:$0xff]
    %v1220 = vld [vmem:[#allocation2 + $0x118] sm:$0xff]
    %v1221 = vld [vmem:[#allocation2 + $0x120] sm:$0xff]
    %v1222 = vld [vmem:[#allocation2 + $0x128] sm:$0xff]
    %v1223 = vld [vmem:[#allocation2 + $0x130] sm:$0xff]
    %v1224 = vld [vmem:[#allocation2 + $0x138] sm:$0xff]
    %v1225 = vld [vmem:[#allocation2 + $0x140] sm:$0xff]
    %v1226 = vld [vmem:[#allocation2 + $0x148] sm:$0xff]
    %v1227 = vld [vmem:[#allocation2 + $0x150] sm:$0xff]
    %v1228 = vld [vmem:[#allocation2 + $0x158] sm:$0xff]
    %v1229 = vld [vmem:[#allocation2 + $0x160] sm:$0xff]
    %v1230 = vld [vmem:[#allocation2 + $0x168] sm:$0xff]
    %v1231 = vld [vmem:[#allocation2 + $0x170] sm:$0xff]
    %v1232 = vld [vmem:[#allocation2 + $0x178] sm:$0xff]
    %v1233 = vld [vmem:[#allocation2 + $0x180] sm:$0xff]
    %v1234 = vld [vmem:[#allocation2 + $0x188] sm:$0xff]
    %v1235 = vld [vmem:[#allocation2 + $0x190] sm:$0xff]
    %v1236 = vld [vmem:[#allocation2 + $0x198] sm:$0xff]
    %v1237 = vld [vmem:[#allocation2 + $0x1a0] sm:$0xff]
    %v1238 = vld [vmem:[#allocation2 + $0x1a8] sm:$0xff]
    %v1239 = vld [vmem:[#allocation2 + $0x1b0] sm:$0xff]
    %v1240 = vld [vmem:[#allocation2 + $0x1b8] sm:$0xff]
    %v1241 = vld [vmem:[#allocation2 + $0x1c0] sm:$0xff]
    %v1242 = vld [vmem:[#allocation2 + $0x1c8] sm:$0xff]
    %v1243 = vld [vmem:[#allocation2 + $0x1d0] sm:$0xff]
    %v1244 = vld [vmem:[#allocation2 + $0x1d8] sm:$0xff]
    %v1245 = vld [vmem:[#allocation2 + $0x1e0] sm:$0xff]
    %v1246 = vld [vmem:[#allocation2 + $0x1e8] sm:$0xff]
    %v1247 = vld [vmem:[#allocation2 + $0x1f0] sm:$0xff]
    %v1248 = vld [vmem:[#allocation2 + $0x1f8] sm:$0xff]
    %v1249 = vld [vmem:[#allocation2 + $0x200] sm:$0xff]
    %v1250 = vld [vmem:[#allocation2 + $0x208] sm:$0xff]
    %v1251 = vld [vmem:[#allocation2 + $0x210] sm:$0xff]
    %v1252 = vld [vmem:[#allocation2 + $0x218] sm:$0xff]
    %v1253 = vld [vmem:[#allocation2 + $0x220] sm:$0xff]
    %v1254 = vld [vmem:[#allocation2 + $0x228] sm:$0xff]
    %v1255 = vld [vmem:[#allocation2 + $0x230] sm:$0xff]
    %v1256 = vld [vmem:[#allocation2 + $0x238] sm:$0xff]
    %v1257 = vld [vmem:[#allocation2 + $0x240] sm:$0xff]
    %v1258 = vld [vmem:[#allocation2 + $0x248] sm:$0xff]
    %v1259 = vld [vmem:[#allocation2 + $0x250] sm:$0xff]
    %v1260 = vld [vmem:[#allocation2 + $0x258] sm:$0xff]
    %v1261 = vld [vmem:[#allocation2 + $0x260] sm:$0xff]
    %v1262 = vld [vmem:[#allocation2 + $0x268] sm:$0xff]
    %v1263 = vld [vmem:[#allocation2 + $0x270] sm:$0xff]
    %v1264 = vld [vmem:[#allocation2 + $0x278] sm:$0xff]
    %v1265 = vld [vmem:[#allocation2 + $0x280] sm:$0xff]
    %v1266 = vld [vmem:[#allocation2 + $0x288] sm:$0xff]
    %v1267 = vld [vmem:[#allocation2 + $0x290] sm:$0xff]
    %v1268 = vld [vmem:[#allocation2 + $0x298] sm:$0xff]
    %v1269 = vld [vmem:[#allocation2 + $0x2a0] sm:$0xff]
    %v1270 = vld [vmem:[#allocation2 + $0x2a8] sm:$0xff]
    %v1271 = vld [vmem:[#allocation2 + $0x2b0] sm:$0xff]
    %v1272 = vld [vmem:[#allocation2 + $0x2b8] sm:$0xff]
    %v1273 = vld [vmem:[#allocation2 + $0x2c0] sm:$0xff]
    %v1274 = vld [vmem:[#allocation2 + $0x2c8] sm:$0xff]
    %v1275 = vld [vmem:[#allocation2 + $0x2d0] sm:$0xff]
    %v1276 = vld [vmem:[#allocation2 + $0x2d8] sm:$0xff]
    %v1277 = vld [vmem:[#allocation2 + $0x2e0] sm:$0xff]
    %v1278 = vld [vmem:[#allocation2 + $0x2e8] sm:$0xff]
    %v1279 = vld [vmem:[#allocation2 + $0x2f0] sm:$0xff]
    %v1280 = vld [vmem:[#allocation2 + $0x2f8] sm:$0xff]
    %v1281 = vld [vmem:[#allocation2 + $0x300] sm:$0xff]
    %v1282 = vld [vmem:[#allocation2 + $0x308] sm:$0xff]
    %v1283 = vld [vmem:[#allocation2 + $0x310] sm:$0xff]
    %v1284 = vld [vmem:[#allocation2 + $0x318] sm:$0xff]
    %v1285 = vld [vmem:[#allocation2 + $0x320] sm:$0xff]
    %v1286 = vld [vmem:[#allocation2 + $0x328] sm:$0xff]
    %v1287 = vld [vmem:[#allocation2 + $0x330] sm:$0xff]
    %v1288 = vld [vmem:[#allocation2 + $0x338] sm:$0xff]
    %v1289 = vld [vmem:[#allocation2 + $0x340] sm:$0xff]
    %v1290 = vld [vmem:[#allocation2 + $0x348] sm:$0xff]
    %v1291 = vld [vmem:[#allocation2 + $0x350] sm:$0xff]
    %v1292 = vld [vmem:[#allocation2 + $0x358] sm:$0xff]
    %v1293 = vld [vmem:[#allocation2 + $0x360] sm:$0xff]
    %v1294 = vld [vmem:[#allocation2 + $0x368] sm:$0xff]
    %v1295 = vld [vmem:[#allocation2 + $0x370] sm:$0xff]
    %v1296 = vld [vmem:[#allocation2 + $0x378] sm:$0xff]
    %v1297 = vld [vmem:[#allocation2 + $0x380] sm:$0xff]
    %v1298 = vld [vmem:[#allocation2 + $0x388] sm:$0xff]
    %v1299 = vld [vmem:[#allocation2 + $0x390] sm:$0xff]
    %v1300 = vld [vmem:[#allocation2 + $0x398] sm:$0xff]
    %v1301 = vld [vmem:[#allocation2 + $0x3a0] sm:$0xff]
    %v1302 = vld [vmem:[#allocation2 + $0x3a8] sm:$0xff]
    %v1303 = vld [vmem:[#allocation2 + $0x3b0] sm:$0xff]
    %v1304 = vld [vmem:[#allocation2 + $0x3b8] sm:$0xff]
    %v1305 = vld [vmem:[#allocation2 + $0x3c0] sm:$0xff]
    %v1306 = vld [vmem:[#allocation2 + $0x3c8] sm:$0xff]
    %v1307 = vld [vmem:[#allocation2 + $0x3d0] sm:$0xff]
    %v1308 = vld [vmem:[#allocation2 + $0x3d8] sm:$0xff]
    %v1309 = vld [vmem:[#allocation2 + $0x3e0] sm:$0xff]
    %v1310 = vld [vmem:[#allocation2 + $0x3e8] sm:$0xff]
    %v1311 = vld [vmem:[#allocation2 + $0x3f0] sm:$0xff]
    %v1312 = vld [vmem:[#allocation2 + $0x3f8] sm:$0xff]
    %v1313 = vld [vmem:[#allocation2 + $0x400] sm:$0xff]
    %v1314 = vld [vmem:[#allocation2 + $0x408] sm:$0xff]
    %v1315 = vld [vmem:[#allocation2 + $0x410] sm:$0xff]
    %v1316 = vld [vmem:[#allocation2 + $0x418] sm:$0xff]
    %v1317 = vld [vmem:[#allocation2 + $0x420] sm:$0xff]
    %v1318 = vld [vmem:[#allocation2 + $0x428] sm:$0xff]
    %v1319 = vld [vmem:[#allocation2 + $0x430] sm:$0xff]
    %v1320 = vld [vmem:[#allocation2 + $0x438] sm:$0xff]
    %v1321 = vld [vmem:[#allocation2 + $0x440] sm:$0xff]
    %v1322 = vld [vmem:[#allocation2 + $0x448] sm:$0xff]
    %v1323 = vld [vmem:[#allocation2 + $0x450] sm:$0xff]
    %v1324 = vld [vmem:[#allocation2 + $0x458] sm:$0xff]
    %v1325 = vld [vmem:[#allocation2 + $0x460] sm:$0xff]
    %v1326 = vld [vmem:[#allocation2 + $0x468] sm:$0xff]
    %v1327 = vld [vmem:[#allocation2 + $0x470] sm:$0xff]
    %v1328 = vld [vmem:[#allocation2 + $0x478] sm:$0xff]
    %v1329 = vld [vmem:[#allocation2 + $0x480] sm:$0xff]
    %v1330 = vld [vmem:[#allocation2 + $0x488] sm:$0xff]
    %v1331 = vld [vmem:[#allocation2 + $0x490] sm:$0xff]
    %v1332 = vld [vmem:[#allocation2 + $0x498] sm:$0xff]
    %v1333 = vld [vmem:[#allocation2 + $0x4a0] sm:$0xff]
    %v1334 = vld [vmem:[#allocation2 + $0x4a8] sm:$0xff]
    %v1335 = vld [vmem:[#allocation2 + $0x4b0] sm:$0xff]
    %v1336 = vld [vmem:[#allocation2 + $0x4b8] sm:$0xff]
    %v1337 = vld [vmem:[#allocation2 + $0x4c0] sm:$0xff]
    %v1338 = vld [vmem:[#allocation2 + $0x4c8] sm:$0xff]
    %v1339 = vld [vmem:[#allocation2 + $0x4d0] sm:$0xff]
    %v1340 = vld [vmem:[#allocation2 + $0x4d8] sm:$0xff]
    %v1341 = vld [vmem:[#allocation2 + $0x4e0] sm:$0xff]
    %v1342 = vld [vmem:[#allocation2 + $0x4e8] sm:$0xff]
    %v1343 = vld [vmem:[#allocation2 + $0x4f0] sm:$0xff]
    %v1344 = vld [vmem:[#allocation2 + $0x4f8] sm:$0xff]
    %v1345 = vld [vmem:[#allocation2 + $0x500] sm:$0xff]
    %v1346 = vld [vmem:[#allocation2 + $0x508] sm:$0xff]
    %v1347 = vld [vmem:[#allocation2 + $0x510] sm:$0xff]
    %v1348 = vld [vmem:[#allocation2 + $0x518] sm:$0xff]
    %v1349 = vld [vmem:[#allocation2 + $0x520] sm:$0xff]
    %v1350 = vld [vmem:[#allocation2 + $0x528] sm:$0xff]
    %v1351 = vld [vmem:[#allocation2 + $0x530] sm:$0xff]
    %v1352 = vld [vmem:[#allocation2 + $0x538] sm:$0xff]
    %v1353 = vld [vmem:[#allocation2 + $0x540] sm:$0xff]
    %v1354 = vld [vmem:[#allocation2 + $0x548] sm:$0xff]
    %v1355 = vld [vmem:[#allocation2 + $0x550] sm:$0xff]
    %v1356 = vld [vmem:[#allocation2 + $0x558] sm:$0xff]
    %v1357 = vld [vmem:[#allocation2 + $0x560] sm:$0xff]
    %v1358 = vld [vmem:[#allocation2 + $0x568] sm:$0xff]
    %v1359 = vld [vmem:[#allocation2 + $0x570] sm:$0xff]
    %v1360 = vld [vmem:[#allocation2 + $0x578] sm:$0xff]
    %v1361 = vld [vmem:[#allocation2 + $0x580] sm:$0xff]
    %v1362 = vld [vmem:[#allocation2 + $0x588] sm:$0xff]
    %v1363 = vld [vmem:[#allocation2 + $0x590] sm:$0xff]
    %v1364 = vld [vmem:[#allocation2 + $0x598] sm:$0xff]
    %v1365 = vld [vmem:[#allocation2 + $0x5a0] sm:$0xff]
    %v1366 = vld [vmem:[#allocation2 + $0x5a8] sm:$0xff]
    %v1367 = vld [vmem:[#allocation2 + $0x5b0] sm:$0xff]
    %v1368 = vld [vmem:[#allocation2 + $0x5b8] sm:$0xff]
    %v1369 = vld [vmem:[#allocation2 + $0x5c0] sm:$0xff]
    %v1370 = vld [vmem:[#allocation2 + $0x5c8] sm:$0xff]
    %v1371 = vld [vmem:[#allocation2 + $0x5d0] sm:$0xff]
    %v1372 = vld [vmem:[#allocation2 + $0x5d8] sm:$0xff]
    %v1373 = vld [vmem:[#allocation2 + $0x5e0] sm:$0xff]
    %v1374 = vld [vmem:[#allocation2 + $0x5e8] sm:$0xff]
    %v1375 = vld [vmem:[#allocation2 + $0x5f0] sm:$0xff]
    %v1376 = vld [vmem:[#allocation2 + $0x5f8] sm:$0xff]
    %v1377 = vld [vmem:[#allocation2 + $0x600] sm:$0xff]
    %v1378 = vld [vmem:[#allocation2 + $0x608] sm:$0xff]
    %v1379 = vld [vmem:[#allocation2 + $0x610] sm:$0xff]
    %v1380 = vld [vmem:[#allocation2 + $0x618] sm:$0xff]
    %v1381 = vld [vmem:[#allocation2 + $0x620] sm:$0xff]
    %v1382 = vld [vmem:[#allocation2 + $0x628] sm:$0xff]
    %v1383 = vld [vmem:[#allocation2 + $0x630] sm:$0xff]
    %v1384 = vld [vmem:[#allocation2 + $0x638] sm:$0xff]
    %v1385 = vld [vmem:[#allocation2 + $0x640] sm:$0xff]
    %v1386 = vld [vmem:[#allocation2 + $0x648] sm:$0xff]
    %v1387 = vld [vmem:[#allocation2 + $0x650] sm:$0xff]
    %v1388 = vld [vmem:[#allocation2 + $0x658] sm:$0xff]
    %v1389 = vld [vmem:[#allocation2 + $0x660] sm:$0xff]
    %v1390 = vld [vmem:[#allocation2 + $0x668] sm:$0xff]
    %v1391 = vld [vmem:[#allocation2 + $0x670] sm:$0xff]
    %v1392 = vld [vmem:[#allocation2 + $0x678] sm:$0xff]
    %v1393 = vld [vmem:[#allocation2 + $0x680] sm:$0xff]
    %v1394 = vld [vmem:[#allocation2 + $0x688] sm:$0xff]
    %v1395 = vld [vmem:[#allocation2 + $0x690] sm:$0xff]
    %v1396 = vld [vmem:[#allocation2 + $0x698] sm:$0xff]
    %v1397 = vld [vmem:[#allocation2 + $0x6a0] sm:$0xff]
    %v1398 = vld [vmem:[#allocation2 + $0x6a8] sm:$0xff]
    %v1399 = vld [vmem:[#allocation2 + $0x6b0] sm:$0xff]
    %v1400 = vld [vmem:[#allocation2 + $0x6b8] sm:$0xff]
    %v1401 = vld [vmem:[#allocation2 + $0x6c0] sm:$0xff]
    %v1402 = vld [vmem:[#allocation2 + $0x6c8] sm:$0xff]
    %v1403 = vld [vmem:[#allocation2 + $0x6d0] sm:$0xff]
    %v1404 = vld [vmem:[#allocation2 + $0x6d8] sm:$0xff]
    %v1405 = vld [vmem:[#allocation2 + $0x6e0] sm:$0xff]
    %v1406 = vld [vmem:[#allocation2 + $0x6e8] sm:$0xff]
    %v1407 = vld [vmem:[#allocation2 + $0x6f0] sm:$0xff]
    %v1408 = vld [vmem:[#allocation2 + $0x6f8] sm:$0xff]
    %v1409 = vld [vmem:[#allocation2 + $0x700] sm:$0xff]
    %v1410 = vld [vmem:[#allocation2 + $0x708] sm:$0xff]
    %v1411 = vld [vmem:[#allocation2 + $0x710] sm:$0xff]
    %v1412 = vld [vmem:[#allocation2 + $0x718] sm:$0xff]
    %v1413 = vld [vmem:[#allocation2 + $0x720] sm:$0xff]
    %v1414 = vld [vmem:[#allocation2 + $0x728] sm:$0xff]
    %v1415 = vld [vmem:[#allocation2 + $0x730] sm:$0xff]
    %v1416 = vld [vmem:[#allocation2 + $0x738] sm:$0xff]
    %v1417 = vld [vmem:[#allocation2 + $0x740] sm:$0xff]
    %v1418 = vld [vmem:[#allocation2 + $0x748] sm:$0xff]
    %v1419 = vld [vmem:[#allocation2 + $0x750] sm:$0xff]
    %v1420 = vld [vmem:[#allocation2 + $0x758] sm:$0xff]
    %v1421 = vld [vmem:[#allocation2 + $0x760] sm:$0xff]
    %v1422 = vld [vmem:[#allocation2 + $0x768] sm:$0xff]
    %v1423 = vld [vmem:[#allocation2 + $0x770] sm:$0xff]
    %v1424 = vld [vmem:[#allocation2 + $0x778] sm:$0xff]
    %v1425 = vld [vmem:[#allocation2 + $0x780] sm:$0xff]
    %v1426 = vld [vmem:[#allocation2 + $0x788] sm:$0xff]
    %v1427 = vld [vmem:[#allocation2 + $0x790] sm:$0xff]
    %v1428 = vld [vmem:[#allocation2 + $0x798] sm:$0xff]
    %v1429 = vld [vmem:[#allocation2 + $0x7a0] sm:$0xff]
    %v1430 = vld [vmem:[#allocation2 + $0x7a8] sm:$0xff]
    %v1431 = vld [vmem:[#allocation2 + $0x7b0] sm:$0xff]
    %v1432 = vld [vmem:[#allocation2 + $0x7b8] sm:$0xff]
    %v1433 = vld [vmem:[#allocation2 + $0x7c0] sm:$0xff]
    %v1434 = vld [vmem:[#allocation2 + $0x7c8] sm:$0xff]
    %v1435 = vld [vmem:[#allocation2 + $0x7d0] sm:$0xff]
    %v1436 = vld [vmem:[#allocation2 + $0x7d8] sm:$0xff]
    %v1437 = vld [vmem:[#allocation2 + $0x7e0] sm:$0xff]
    %v1438 = vld [vmem:[#allocation2 + $0x7e8] sm:$0xff]
    %v1439 = vld [vmem:[#allocation2 + $0x7f0] sm:$0xff]
    %v1440 = vld [vmem:[#allocation2 + $0x7f8] sm:$0xff]
    %v1697 = vunpack.c.l.b16 %v1185
    %v1698 = vunpack.c.h.b16 %v1185
    %v1699 = vunpack.c.l.b16 %v1186
    %v1700 = vunpack.c.h.b16 %v1186
    %v1701 = vunpack.c.l.b16 %v1187
    %v1702 = vunpack.c.h.b16 %v1187
    %v1703 = vunpack.c.l.b16 %v1188
    %v1704 = vunpack.c.h.b16 %v1188
    %v1705 = vunpack.c.l.b16 %v1189
    %v1706 = vunpack.c.h.b16 %v1189
    %v1707 = vunpack.c.l.b16 %v1190
    %v1708 = vunpack.c.h.b16 %v1190
    %v1709 = vunpack.c.l.b16 %v1191
    %v1710 = vunpack.c.h.b16 %v1191
    %v1711 = vunpack.c.l.b16 %v1192
    %v1712 = vunpack.c.h.b16 %v1192
    %v1713 = vunpack.c.l.b16 %v1193
    %v1714 = vunpack.c.h.b16 %v1193
    %v1715 = vunpack.c.l.b16 %v1194
    %v1716 = vunpack.c.h.b16 %v1194
    %v1717 = vunpack.c.l.b16 %v1195
    %v1718 = vunpack.c.h.b16 %v1195
    %v1719 = vunpack.c.l.b16 %v1196
    %v1720 = vunpack.c.h.b16 %v1196
    %v1721 = vunpack.c.l.b16 %v1197
    %v1722 = vunpack.c.h.b16 %v1197
    %v1723 = vunpack.c.l.b16 %v1198
    %v1724 = vunpack.c.h.b16 %v1198
    %v1725 = vunpack.c.l.b16 %v1199
    %v1726 = vunpack.c.h.b16 %v1199
    %v1727 = vunpack.c.l.b16 %v1200
    %v1728 = vunpack.c.h.b16 %v1200
    %v1729 = vunpack.c.l.b16 %v1201
    %v1730 = vunpack.c.h.b16 %v1201
    %v1731 = vunpack.c.l.b16 %v1202
    %v1732 = vunpack.c.h.b16 %v1202
    %v1733 = vunpack.c.l.b16 %v1203
    %v1734 = vunpack.c.h.b16 %v1203
    %v1735 = vunpack.c.l.b16 %v1204
    %v1736 = vunpack.c.h.b16 %v1204
    %v1737 = vunpack.c.l.b16 %v1205
    %v1738 = vunpack.c.h.b16 %v1205
    %v1739 = vunpack.c.l.b16 %v1206
    %v1740 = vunpack.c.h.b16 %v1206
    %v1741 = vunpack.c.l.b16 %v1207
    %v1742 = vunpack.c.h.b16 %v1207
    %v1743 = vunpack.c.l.b16 %v1208
    %v1744 = vunpack.c.h.b16 %v1208
    %v1745 = vunpack.c.l.b16 %v1209
    %v1746 = vunpack.c.h.b16 %v1209
    %v1747 = vunpack.c.l.b16 %v1210
    %v1748 = vunpack.c.h.b16 %v1210
    %v1749 = vunpack.c.l.b16 %v1211
    %v1750 = vunpack.c.h.b16 %v1211
    %v1751 = vunpack.c.l.b16 %v1212
    %v1752 = vunpack.c.h.b16 %v1212
    %v1753 = vunpack.c.l.b16 %v1213
    %v1754 = vunpack.c.h.b16 %v1213
    %v1755 = vunpack.c.l.b16 %v1214
    %v1756 = vunpack.c.h.b16 %v1214
    %v1757 = vunpack.c.l.b16 %v1215
    %v1758 = vunpack.c.h.b16 %v1215
    %v1759 = vunpack.c.l.b16 %v1216
    %v1760 = vunpack.c.h.b16 %v1216
    %v1761 = vunpack.c.l.b16 %v1217
    %v1762 = vunpack.c.h.b16 %v1217
    %v1763 = vunpack.c.l.b16 %v1218
    %v1764 = vunpack.c.h.b16 %v1218
    %v1765 = vunpack.c.l.b16 %v1219
    %v1766 = vunpack.c.h.b16 %v1219
    %v1767 = vunpack.c.l.b16 %v1220
    %v1768 = vunpack.c.h.b16 %v1220
    %v1769 = vunpack.c.l.b16 %v1221
    %v1770 = vunpack.c.h.b16 %v1221
    %v1771 = vunpack.c.l.b16 %v1222
    %v1772 = vunpack.c.h.b16 %v1222
    %v1773 = vunpack.c.l.b16 %v1223
    %v1774 = vunpack.c.h.b16 %v1223
    %v1775 = vunpack.c.l.b16 %v1224
    %v1776 = vunpack.c.h.b16 %v1224
    %v1777 = vunpack.c.l.b16 %v1225
    %v1778 = vunpack.c.h.b16 %v1225
    %v1779 = vunpack.c.l.b16 %v1226
    %v1780 = vunpack.c.h.b16 %v1226
    %v1781 = vunpack.c.l.b16 %v1227
    %v1782 = vunpack.c.h.b16 %v1227
    %v1783 = vunpack.c.l.b16 %v1228
    %v1784 = vunpack.c.h.b16 %v1228
    %v1785 = vunpack.c.l.b16 %v1229
    %v1786 = vunpack.c.h.b16 %v1229
    %v1787 = vunpack.c.l.b16 %v1230
    %v1788 = vunpack.c.h.b16 %v1230
    %v1789 = vunpack.c.l.b16 %v1231
    %v1790 = vunpack.c.h.b16 %v1231
    %v1791 = vunpack.c.l.b16 %v1232
    %v1792 = vunpack.c.h.b16 %v1232
    %v1793 = vunpack.c.l.b16 %v1233
    %v1794 = vunpack.c.h.b16 %v1233
    %v1795 = vunpack.c.l.b16 %v1234
    %v1796 = vunpack.c.h.b16 %v1234
    %v1797 = vunpack.c.l.b16 %v1235
    %v1798 = vunpack.c.h.b16 %v1235
    %v1799 = vunpack.c.l.b16 %v1236
    %v1800 = vunpack.c.h.b16 %v1236
    %v1801 = vunpack.c.l.b16 %v1237
    %v1802 = vunpack.c.h.b16 %v1237
    %v1803 = vunpack.c.l.b16 %v1238
    %v1804 = vunpack.c.h.b16 %v1238
    %v1805 = vunpack.c.l.b16 %v1239
    %v1806 = vunpack.c.h.b16 %v1239
    %v1807 = vunpack.c.l.b16 %v1240
    %v1808 = vunpack.c.h.b16 %v1240
    %v1809 = vunpack.c.l.b16 %v1241
    %v1810 = vunpack.c.h.b16 %v1241
    %v1811 = vunpack.c.l.b16 %v1242
    %v1812 = vunpack.c.h.b16 %v1242
    %v1813 = vunpack.c.l.b16 %v1243
    %v1814 = vunpack.c.h.b16 %v1243
    %v1815 = vunpack.c.l.b16 %v1244
    %v1816 = vunpack.c.h.b16 %v1244
    %v1817 = vunpack.c.l.b16 %v1245
    %v1818 = vunpack.c.h.b16 %v1245
    %v1819 = vunpack.c.l.b16 %v1246
    %v1820 = vunpack.c.h.b16 %v1246
    %v1821 = vunpack.c.l.b16 %v1247
    %v1822 = vunpack.c.h.b16 %v1247
    %v1823 = vunpack.c.l.b16 %v1248
    %v1824 = vunpack.c.h.b16 %v1248
    %v1825 = vunpack.c.l.b16 %v1249
    %v1826 = vunpack.c.h.b16 %v1249
    %v1827 = vunpack.c.l.b16 %v1250
    %v1828 = vunpack.c.h.b16 %v1250
    %v1829 = vunpack.c.l.b16 %v1251
    %v1830 = vunpack.c.h.b16 %v1251
    %v1831 = vunpack.c.l.b16 %v1252
    %v1832 = vunpack.c.h.b16 %v1252
    %v1833 = vunpack.c.l.b16 %v1253
    %v1834 = vunpack.c.h.b16 %v1253
    %v1835 = vunpack.c.l.b16 %v1254
    %v1836 = vunpack.c.h.b16 %v1254
    %v1837 = vunpack.c.l.b16 %v1255
    %v1838 = vunpack.c.h.b16 %v1255
    %v1839 = vunpack.c.l.b16 %v1256
    %v1840 = vunpack.c.h.b16 %v1256
    %v1841 = vunpack.c.l.b16 %v1257
    %v1842 = vunpack.c.h.b16 %v1257
    %v1843 = vunpack.c.l.b16 %v1258
    %v1844 = vunpack.c.h.b16 %v1258
    %v1845 = vunpack.c.l.b16 %v1259
    %v1846 = vunpack.c.h.b16 %v1259
    %v1847 = vunpack.c.l.b16 %v1260
    %v1848 = vunpack.c.h.b16 %v1260
    %v1849 = vunpack.c.l.b16 %v1261
    %v1850 = vunpack.c.h.b16 %v1261
    %v1851 = vunpack.c.l.b16 %v1262
    %v1852 = vunpack.c.h.b16 %v1262
    %v1853 = vunpack.c.l.b16 %v1263
    %v1854 = vunpack.c.h.b16 %v1263
    %v1855 = vunpack.c.l.b16 %v1264
    %v1856 = vunpack.c.h.b16 %v1264
    %v1857 = vunpack.c.l.b16 %v1265
    %v1858 = vunpack.c.h.b16 %v1265
    %v1859 = vunpack.c.l.b16 %v1266
    %v1860 = vunpack.c.h.b16 %v1266
    %v1861 = vunpack.c.l.b16 %v1267
    %v1862 = vunpack.c.h.b16 %v1267
    %v1863 = vunpack.c.l.b16 %v1268
    %v1864 = vunpack.c.h.b16 %v1268
    %v1865 = vunpack.c.l.b16 %v1269
    %v1866 = vunpack.c.h.b16 %v1269
    %v1867 = vunpack.c.l.b16 %v1270
    %v1868 = vunpack.c.h.b16 %v1270
    %v1869 = vunpack.c.l.b16 %v1271
    %v1870 = vunpack.c.h.b16 %v1271
    %v1871 = vunpack.c.l.b16 %v1272
    %v1872 = vunpack.c.h.b16 %v1272
    %v1873 = vunpack.c.l.b16 %v1273
    %v1874 = vunpack.c.h.b16 %v1273
    %v1875 = vunpack.c.l.b16 %v1274
    %v1876 = vunpack.c.h.b16 %v1274
    %v1877 = vunpack.c.l.b16 %v1275
    %v1878 = vunpack.c.h.b16 %v1275
    %v1879 = vunpack.c.l.b16 %v1276
    %v1880 = vunpack.c.h.b16 %v1276
    %v1881 = vunpack.c.l.b16 %v1277
    %v1882 = vunpack.c.h.b16 %v1277
    %v1883 = vunpack.c.l.b16 %v1278
    %v1884 = vunpack.c.h.b16 %v1278
    %v1885 = vunpack.c.l.b16 %v1279
    %v1886 = vunpack.c.h.b16 %v1279
    %v1887 = vunpack.c.l.b16 %v1280
    %v1888 = vunpack.c.h.b16 %v1280
    %v1889 = vunpack.c.l.b16 %v1281
    %v1890 = vunpack.c.h.b16 %v1281
    %v1891 = vunpack.c.l.b16 %v1282
    %v1892 = vunpack.c.h.b16 %v1282
    %v1893 = vunpack.c.l.b16 %v1283
    %v1894 = vunpack.c.h.b16 %v1283
    %v1895 = vunpack.c.l.b16 %v1284
    %v1896 = vunpack.c.h.b16 %v1284
    %v1897 = vunpack.c.l.b16 %v1285
    %v1898 = vunpack.c.h.b16 %v1285
    %v1899 = vunpack.c.l.b16 %v1286
    %v1900 = vunpack.c.h.b16 %v1286
    %v1901 = vunpack.c.l.b16 %v1287
    %v1902 = vunpack.c.h.b16 %v1287
    %v1903 = vunpack.c.l.b16 %v1288
    %v1904 = vunpack.c.h.b16 %v1288
    %v1905 = vunpack.c.l.b16 %v1289
    %v1906 = vunpack.c.h.b16 %v1289
    %v1907 = vunpack.c.l.b16 %v1290
    %v1908 = vunpack.c.h.b16 %v1290
    %v1909 = vunpack.c.l.b16 %v1291
    %v1910 = vunpack.c.h.b16 %v1291
    %v1911 = vunpack.c.l.b16 %v1292
    %v1912 = vunpack.c.h.b16 %v1292
    %v1913 = vunpack.c.l.b16 %v1293
    %v1914 = vunpack.c.h.b16 %v1293
    %v1915 = vunpack.c.l.b16 %v1294
    %v1916 = vunpack.c.h.b16 %v1294
    %v1917 = vunpack.c.l.b16 %v1295
    %v1918 = vunpack.c.h.b16 %v1295
    %v1919 = vunpack.c.l.b16 %v1296
    %v1920 = vunpack.c.h.b16 %v1296
    %v1921 = vunpack.c.l.b16 %v1297
    %v1922 = vunpack.c.h.b16 %v1297
    %v1923 = vunpack.c.l.b16 %v1298
    %v1924 = vunpack.c.h.b16 %v1298
    %v1925 = vunpack.c.l.b16 %v1299
    %v1926 = vunpack.c.h.b16 %v1299
    %v1927 = vunpack.c.l.b16 %v1300
    %v1928 = vunpack.c.h.b16 %v1300
    %v1929 = vunpack.c.l.b16 %v1301
    %v1930 = vunpack.c.h.b16 %v1301
    %v1931 = vunpack.c.l.b16 %v1302
    %v1932 = vunpack.c.h.b16 %v1302
    %v1933 = vunpack.c.l.b16 %v1303
    %v1934 = vunpack.c.h.b16 %v1303
    %v1935 = vunpack.c.l.b16 %v1304
    %v1936 = vunpack.c.h.b16 %v1304
    %v1937 = vunpack.c.l.b16 %v1305
    %v1938 = vunpack.c.h.b16 %v1305
    %v1939 = vunpack.c.l.b16 %v1306
    %v1940 = vunpack.c.h.b16 %v1306
    %v1941 = vunpack.c.l.b16 %v1307
    %v1942 = vunpack.c.h.b16 %v1307
    %v1943 = vunpack.c.l.b16 %v1308
    %v1944 = vunpack.c.h.b16 %v1308
    %v1945 = vunpack.c.l.b16 %v1309
    %v1946 = vunpack.c.h.b16 %v1309
    %v1947 = vunpack.c.l.b16 %v1310
    %v1948 = vunpack.c.h.b16 %v1310
    %v1949 = vunpack.c.l.b16 %v1311
    %v1950 = vunpack.c.h.b16 %v1311
    %v1951 = vunpack.c.l.b16 %v1312
    %v1952 = vunpack.c.h.b16 %v1312
    %v1953 = vunpack.c.l.b16 %v1313
    %v1954 = vunpack.c.h.b16 %v1313
    %v1955 = vunpack.c.l.b16 %v1314
    %v1956 = vunpack.c.h.b16 %v1314
    %v1957 = vunpack.c.l.b16 %v1315
    %v1958 = vunpack.c.h.b16 %v1315
    %v1959 = vunpack.c.l.b16 %v1316
    %v1960 = vunpack.c.h.b16 %v1316
    %v1961 = vunpack.c.l.b16 %v1317
    %v1962 = vunpack.c.h.b16 %v1317
    %v1963 = vunpack.c.l.b16 %v1318
    %v1964 = vunpack.c.h.b16 %v1318
    %v1965 = vunpack.c.l.b16 %v1319
    %v1966 = vunpack.c.h.b16 %v1319
    %v1967 = vunpack.c.l.b16 %v1320
    %v1968 = vunpack.c.h.b16 %v1320
    %v1969 = vunpack.c.l.b16 %v1321
    %v1970 = vunpack.c.h.b16 %v1321
    %v1971 = vunpack.c.l.b16 %v1322
    %v1972 = vunpack.c.h.b16 %v1322
    %v1973 = vunpack.c.l.b16 %v1323
    %v1974 = vunpack.c.h.b16 %v1323
    %v1975 = vunpack.c.l.b16 %v1324
    %v1976 = vunpack.c.h.b16 %v1324
    %v1977 = vunpack.c.l.b16 %v1325
    %v1978 = vunpack.c.h.b16 %v1325
    %v1979 = vunpack.c.l.b16 %v1326
    %v1980 = vunpack.c.h.b16 %v1326
    %v1981 = vunpack.c.l.b16 %v1327
    %v1982 = vunpack.c.h.b16 %v1327
    %v1983 = vunpack.c.l.b16 %v1328
    %v1984 = vunpack.c.h.b16 %v1328
    %v1985 = vunpack.c.l.b16 %v1329
    %v1986 = vunpack.c.h.b16 %v1329
    %v1987 = vunpack.c.l.b16 %v1330
    %v1988 = vunpack.c.h.b16 %v1330
    %v1989 = vunpack.c.l.b16 %v1331
    %v1990 = vunpack.c.h.b16 %v1331
    %v1991 = vunpack.c.l.b16 %v1332
    %v1992 = vunpack.c.h.b16 %v1332
    %v1993 = vunpack.c.l.b16 %v1333
    %v1994 = vunpack.c.h.b16 %v1333
    %v1995 = vunpack.c.l.b16 %v1334
    %v1996 = vunpack.c.h.b16 %v1334
    %v1997 = vunpack.c.l.b16 %v1335
    %v1998 = vunpack.c.h.b16 %v1335
    %v1999 = vunpack.c.l.b16 %v1336
    %v2000 = vunpack.c.h.b16 %v1336
    %v2001 = vunpack.c.l.b16 %v1337
    %v2002 = vunpack.c.h.b16 %v1337
    %v2003 = vunpack.c.l.b16 %v1338
    %v2004 = vunpack.c.h.b16 %v1338
    %v2005 = vunpack.c.l.b16 %v1339
    %v2006 = vunpack.c.h.b16 %v1339
    %v2007 = vunpack.c.l.b16 %v1340
    %v2008 = vunpack.c.h.b16 %v1340
    %v2009 = vunpack.c.l.b16 %v1341
    %v2010 = vunpack.c.h.b16 %v1341
    %v2011 = vunpack.c.l.b16 %v1342
    %v2012 = vunpack.c.h.b16 %v1342
    %v2013 = vunpack.c.l.b16 %v1343
    %v2014 = vunpack.c.h.b16 %v1343
    %v2015 = vunpack.c.l.b16 %v1344
    %v2016 = vunpack.c.h.b16 %v1344
    %v2017 = vunpack.c.l.b16 %v1345
    %v2018 = vunpack.c.h.b16 %v1345
    %v2019 = vunpack.c.l.b16 %v1346
    %v2020 = vunpack.c.h.b16 %v1346
    %v2021 = vunpack.c.l.b16 %v1347
    %v2022 = vunpack.c.h.b16 %v1347
    %v2023 = vunpack.c.l.b16 %v1348
    %v2024 = vunpack.c.h.b16 %v1348
    %v2025 = vunpack.c.l.b16 %v1349
    %v2026 = vunpack.c.h.b16 %v1349
    %v2027 = vunpack.c.l.b16 %v1350
    %v2028 = vunpack.c.h.b16 %v1350
    %v2029 = vunpack.c.l.b16 %v1351
    %v2030 = vunpack.c.h.b16 %v1351
    %v2031 = vunpack.c.l.b16 %v1352
    %v2032 = vunpack.c.h.b16 %v1352
    %v2033 = vunpack.c.l.b16 %v1353
    %v2034 = vunpack.c.h.b16 %v1353
    %v2035 = vunpack.c.l.b16 %v1354
    %v2036 = vunpack.c.h.b16 %v1354
    %v2037 = vunpack.c.l.b16 %v1355
    %v2038 = vunpack.c.h.b16 %v1355
    %v2039 = vunpack.c.l.b16 %v1356
    %v2040 = vunpack.c.h.b16 %v1356
    %v2041 = vunpack.c.l.b16 %v1357
    %v2042 = vunpack.c.h.b16 %v1357
    %v2043 = vunpack.c.l.b16 %v1358
    %v2044 = vunpack.c.h.b16 %v1358
    %v2045 = vunpack.c.l.b16 %v1359
    %v2046 = vunpack.c.h.b16 %v1359
    %v2047 = vunpack.c.l.b16 %v1360
    %v2048 = vunpack.c.h.b16 %v1360
    %v2049 = vunpack.c.l.b16 %v1361
    %v2050 = vunpack.c.h.b16 %v1361
    %v2051 = vunpack.c.l.b16 %v1362
    %v2052 = vunpack.c.h.b16 %v1362
    %v2053 = vunpack.c.l.b16 %v1363
    %v2054 = vunpack.c.h.b16 %v1363
    %v2055 = vunpack.c.l.b16 %v1364
    %v2056 = vunpack.c.h.b16 %v1364
    %v2057 = vunpack.c.l.b16 %v1365
    %v2058 = vunpack.c.h.b16 %v1365
    %v2059 = vunpack.c.l.b16 %v1366
    %v2060 = vunpack.c.h.b16 %v1366
    %v2061 = vunpack.c.l.b16 %v1367
    %v2062 = vunpack.c.h.b16 %v1367
    %v2063 = vunpack.c.l.b16 %v1368
    %v2064 = vunpack.c.h.b16 %v1368
    %v2065 = vunpack.c.l.b16 %v1369
    %v2066 = vunpack.c.h.b16 %v1369
    %v2067 = vunpack.c.l.b16 %v1370
    %v2068 = vunpack.c.h.b16 %v1370
    %v2069 = vunpack.c.l.b16 %v1371
    %v2070 = vunpack.c.h.b16 %v1371
    %v2071 = vunpack.c.l.b16 %v1372
    %v2072 = vunpack.c.h.b16 %v1372
    %v2073 = vunpack.c.l.b16 %v1373
    %v2074 = vunpack.c.h.b16 %v1373
    %v2075 = vunpack.c.l.b16 %v1374
    %v2076 = vunpack.c.h.b16 %v1374
    %v2077 = vunpack.c.l.b16 %v1375
    %v2078 = vunpack.c.h.b16 %v1375
    %v2079 = vunpack.c.l.b16 %v1376
    %v2080 = vunpack.c.h.b16 %v1376
    %v2081 = vunpack.c.l.b16 %v1377
    %v2082 = vunpack.c.h.b16 %v1377
    %v2083 = vunpack.c.l.b16 %v1378
    %v2084 = vunpack.c.h.b16 %v1378
    %v2085 = vunpack.c.l.b16 %v1379
    %v2086 = vunpack.c.h.b16 %v1379
    %v2087 = vunpack.c.l.b16 %v1380
    %v2088 = vunpack.c.h.b16 %v1380
    %v2089 = vunpack.c.l.b16 %v1381
    %v2090 = vunpack.c.h.b16 %v1381
    %v2091 = vunpack.c.l.b16 %v1382
    %v2092 = vunpack.c.h.b16 %v1382
    %v2093 = vunpack.c.l.b16 %v1383
    %v2094 = vunpack.c.h.b16 %v1383
    %v2095 = vunpack.c.l.b16 %v1384
    %v2096 = vunpack.c.h.b16 %v1384
    %v2097 = vunpack.c.l.b16 %v1385
    %v2098 = vunpack.c.h.b16 %v1385
    %v2099 = vunpack.c.l.b16 %v1386
    %v2100 = vunpack.c.h.b16 %v1386
    %v2101 = vunpack.c.l.b16 %v1387
    %v2102 = vunpack.c.h.b16 %v1387
    %v2103 = vunpack.c.l.b16 %v1388
    %v2104 = vunpack.c.h.b16 %v1388
    %v2105 = vunpack.c.l.b16 %v1389
    %v2106 = vunpack.c.h.b16 %v1389
    %v2107 = vunpack.c.l.b16 %v1390
    %v2108 = vunpack.c.h.b16 %v1390
    %v2109 = vunpack.c.l.b16 %v1391
    %v2110 = vunpack.c.h.b16 %v1391
    %v2111 = vunpack.c.l.b16 %v1392
    %v2112 = vunpack.c.h.b16 %v1392
    %v2113 = vunpack.c.l.b16 %v1393
    %v2114 = vunpack.c.h.b16 %v1393
    %v2115 = vunpack.c.l.b16 %v1394
    %v2116 = vunpack.c.h.b16 %v1394
    %v2117 = vunpack.c.l.b16 %v1395
    %v2118 = vunpack.c.h.b16 %v1395
    %v2119 = vunpack.c.l.b16 %v1396
    %v2120 = vunpack.c.h.b16 %v1396
    %v2121 = vunpack.c.l.b16 %v1397
    %v2122 = vunpack.c.h.b16 %v1397
    %v2123 = vunpack.c.l.b16 %v1398
    %v2124 = vunpack.c.h.b16 %v1398
    %v2125 = vunpack.c.l.b16 %v1399
    %v2126 = vunpack.c.h.b16 %v1399
    %v2127 = vunpack.c.l.b16 %v1400
    %v2128 = vunpack.c.h.b16 %v1400
    %v2129 = vunpack.c.l.b16 %v1401
    %v2130 = vunpack.c.h.b16 %v1401
    %v2131 = vunpack.c.l.b16 %v1402
    %v2132 = vunpack.c.h.b16 %v1402
    %v2133 = vunpack.c.l.b16 %v1403
    %v2134 = vunpack.c.h.b16 %v1403
    %v2135 = vunpack.c.l.b16 %v1404
    %v2136 = vunpack.c.h.b16 %v1404
    %v2137 = vunpack.c.l.b16 %v1405
    %v2138 = vunpack.c.h.b16 %v1405
    %v2139 = vunpack.c.l.b16 %v1406
    %v2140 = vunpack.c.h.b16 %v1406
    %v2141 = vunpack.c.l.b16 %v1407
    %v2142 = vunpack.c.h.b16 %v1407
    %v2143 = vunpack.c.l.b16 %v1408
    %v2144 = vunpack.c.h.b16 %v1408
    %v2145 = vunpack.c.l.b16 %v1409
    %v2146 = vunpack.c.h.b16 %v1409
    %v2147 = vunpack.c.l.b16 %v1410
    %v2148 = vunpack.c.h.b16 %v1410
    %v2149 = vunpack.c.l.b16 %v1411
    %v2150 = vunpack.c.h.b16 %v1411
    %v2151 = vunpack.c.l.b16 %v1412
    %v2152 = vunpack.c.h.b16 %v1412
    %v2153 = vunpack.c.l.b16 %v1413
    %v2154 = vunpack.c.h.b16 %v1413
    %v2155 = vunpack.c.l.b16 %v1414
    %v2156 = vunpack.c.h.b16 %v1414
    %v2157 = vunpack.c.l.b16 %v1415
    %v2158 = vunpack.c.h.b16 %v1415
    %v2159 = vunpack.c.l.b16 %v1416
    %v2160 = vunpack.c.h.b16 %v1416
    %v2161 = vunpack.c.l.b16 %v1417
    %v2162 = vunpack.c.h.b16 %v1417
    %v2163 = vunpack.c.l.b16 %v1418
    %v2164 = vunpack.c.h.b16 %v1418
    %v2165 = vunpack.c.l.b16 %v1419
    %v2166 = vunpack.c.h.b16 %v1419
    %v2167 = vunpack.c.l.b16 %v1420
    %v2168 = vunpack.c.h.b16 %v1420
    %v2169 = vunpack.c.l.b16 %v1421
    %v2170 = vunpack.c.h.b16 %v1421
    %v2171 = vunpack.c.l.b16 %v1422
    %v2172 = vunpack.c.h.b16 %v1422
    %v2173 = vunpack.c.l.b16 %v1423
    %v2174 = vunpack.c.h.b16 %v1423
    %v2175 = vunpack.c.l.b16 %v1424
    %v2176 = vunpack.c.h.b16 %v1424
    %v2177 = vunpack.c.l.b16 %v1425
    %v2178 = vunpack.c.h.b16 %v1425
    %v2179 = vunpack.c.l.b16 %v1426
    %v2180 = vunpack.c.h.b16 %v1426
    %v2181 = vunpack.c.l.b16 %v1427
    %v2182 = vunpack.c.h.b16 %v1427
    %v2183 = vunpack.c.l.b16 %v1428
    %v2184 = vunpack.c.h.b16 %v1428
    %v2185 = vunpack.c.l.b16 %v1429
    %v2186 = vunpack.c.h.b16 %v1429
    %v2187 = vunpack.c.l.b16 %v1430
    %v2188 = vunpack.c.h.b16 %v1430
    %v2189 = vunpack.c.l.b16 %v1431
    %v2190 = vunpack.c.h.b16 %v1431
    %v2191 = vunpack.c.l.b16 %v1432
    %v2192 = vunpack.c.h.b16 %v1432
    %v2193 = vunpack.c.l.b16 %v1433
    %v2194 = vunpack.c.h.b16 %v1433
    %v2195 = vunpack.c.l.b16 %v1434
    %v2196 = vunpack.c.h.b16 %v1434
    %v2197 = vunpack.c.l.b16 %v1435
    %v2198 = vunpack.c.h.b16 %v1435
    %v2199 = vunpack.c.l.b16 %v1436
    %v2200 = vunpack.c.h.b16 %v1436
    %v2201 = vunpack.c.l.b16 %v1437
    %v2202 = vunpack.c.h.b16 %v1437
    %v2203 = vunpack.c.l.b16 %v1438
    %v2204 = vunpack.c.h.b16 %v1438
    %v2205 = vunpack.c.l.b16 %v1439
    %v2206 = vunpack.c.h.b16 %v1439
    %v2207 = vunpack.c.l.b16 %v1440
    %v2208 = vunpack.c.h.b16 %v1440
    %v2209 = vpack.c.b16 %v1705, %v1697
    %v2210 = vpack.c.b16 %v1706, %v1698
    %v2211 = vpack.c.b16 %v1707, %v1699
    %v2212 = vpack.c.b16 %v1708, %v1700
    %v2213 = vpack.c.b16 %v1709, %v1701
    %v2214 = vpack.c.b16 %v1710, %v1702
    %v2215 = vpack.c.b16 %v1711, %v1703
    %v2216 = vpack.c.b16 %v1712, %v1704
    %v2217 = vpack.c.b16 %v1721, %v1713
    %v2218 = vpack.c.b16 %v1722, %v1714
    %v2219 = vpack.c.b16 %v1723, %v1715
    %v2220 = vpack.c.b16 %v1724, %v1716
    %v2221 = vpack.c.b16 %v1725, %v1717
    %v2222 = vpack.c.b16 %v1726, %v1718
    %v2223 = vpack.c.b16 %v1727, %v1719
    %v2224 = vpack.c.b16 %v1728, %v1720
    %v2225 = vpack.c.b16 %v1737, %v1729
    %v2226 = vpack.c.b16 %v1738, %v1730
    %v2227 = vpack.c.b16 %v1739, %v1731
    %v2228 = vpack.c.b16 %v1740, %v1732
    %v2229 = vpack.c.b16 %v1741, %v1733
    %v2230 = vpack.c.b16 %v1742, %v1734
    %v2231 = vpack.c.b16 %v1743, %v1735
    %v2232 = vpack.c.b16 %v1744, %v1736
    %v2233 = vpack.c.b16 %v1753, %v1745
    %v2234 = vpack.c.b16 %v1754, %v1746
    %v2235 = vpack.c.b16 %v1755, %v1747
    %v2236 = vpack.c.b16 %v1756, %v1748
    %v2237 = vpack.c.b16 %v1757, %v1749
    %v2238 = vpack.c.b16 %v1758, %v1750
    %v2239 = vpack.c.b16 %v1759, %v1751
    %v2240 = vpack.c.b16 %v1760, %v1752
    %v2241 = vpack.c.b16 %v1769, %v1761
    %v2242 = vpack.c.b16 %v1770, %v1762
    %v2243 = vpack.c.b16 %v1771, %v1763
    %v2244 = vpack.c.b16 %v1772, %v1764
    %v2245 = vpack.c.b16 %v1773, %v1765
    %v2246 = vpack.c.b16 %v1774, %v1766
    %v2247 = vpack.c.b16 %v1775, %v1767
    %v2248 = vpack.c.b16 %v1776, %v1768
    %v2249 = vpack.c.b16 %v1785, %v1777
    %v2250 = vpack.c.b16 %v1786, %v1778
    %v2251 = vpack.c.b16 %v1787, %v1779
    %v2252 = vpack.c.b16 %v1788, %v1780
    %v2253 = vpack.c.b16 %v1789, %v1781
    %v2254 = vpack.c.b16 %v1790, %v1782
    %v2255 = vpack.c.b16 %v1791, %v1783
    %v2256 = vpack.c.b16 %v1792, %v1784
    %v2257 = vpack.c.b16 %v1801, %v1793
    %v2258 = vpack.c.b16 %v1802, %v1794
    %v2259 = vpack.c.b16 %v1803, %v1795
    %v2260 = vpack.c.b16 %v1804, %v1796
    %v2261 = vpack.c.b16 %v1805, %v1797
    %v2262 = vpack.c.b16 %v1806, %v1798
    %v2263 = vpack.c.b16 %v1807, %v1799
    %v2264 = vpack.c.b16 %v1808, %v1800
    %v2265 = vpack.c.b16 %v1817, %v1809
    %v2266 = vpack.c.b16 %v1818, %v1810
    %v2267 = vpack.c.b16 %v1819, %v1811
    %v2268 = vpack.c.b16 %v1820, %v1812
    %v2269 = vpack.c.b16 %v1821, %v1813
    %v2270 = vpack.c.b16 %v1822, %v1814
    %v2271 = vpack.c.b16 %v1823, %v1815
    %v2272 = vpack.c.b16 %v1824, %v1816
    %v2273 = vpack.c.b16 %v1833, %v1825
    %v2274 = vpack.c.b16 %v1834, %v1826
    %v2275 = vpack.c.b16 %v1835, %v1827
    %v2276 = vpack.c.b16 %v1836, %v1828
    %v2277 = vpack.c.b16 %v1837, %v1829
    %v2278 = vpack.c.b16 %v1838, %v1830
    %v2279 = vpack.c.b16 %v1839, %v1831
    %v2280 = vpack.c.b16 %v1840, %v1832
    %v2281 = vpack.c.b16 %v1849, %v1841
    %v2282 = vpack.c.b16 %v1850, %v1842
    %v2283 = vpack.c.b16 %v1851, %v1843
    %v2284 = vpack.c.b16 %v1852, %v1844
    %v2285 = vpack.c.b16 %v1853, %v1845
    %v2286 = vpack.c.b16 %v1854, %v1846
    %v2287 = vpack.c.b16 %v1855, %v1847
    %v2288 = vpack.c.b16 %v1856, %v1848
    %v2289 = vpack.c.b16 %v1865, %v1857
    %v2290 = vpack.c.b16 %v1866, %v1858
    %v2291 = vpack.c.b16 %v1867, %v1859
    %v2292 = vpack.c.b16 %v1868, %v1860
    %v2293 = vpack.c.b16 %v1869, %v1861
    %v2294 = vpack.c.b16 %v1870, %v1862
    %v2295 = vpack.c.b16 %v1871, %v1863
    %v2296 = vpack.c.b16 %v1872, %v1864
    %v2297 = vpack.c.b16 %v1881, %v1873
    %v2298 = vpack.c.b16 %v1882, %v1874
    %v2299 = vpack.c.b16 %v1883, %v1875
    %v2300 = vpack.c.b16 %v1884, %v1876
    %v2301 = vpack.c.b16 %v1885, %v1877
    %v2302 = vpack.c.b16 %v1886, %v1878
    %v2303 = vpack.c.b16 %v1887, %v1879
    %v2304 = vpack.c.b16 %v1888, %v1880
    %v2305 = vpack.c.b16 %v1897, %v1889
    %v2306 = vpack.c.b16 %v1898, %v1890
    %v2307 = vpack.c.b16 %v1899, %v1891
    %v2308 = vpack.c.b16 %v1900, %v1892
    %v2309 = vpack.c.b16 %v1901, %v1893
    %v2310 = vpack.c.b16 %v1902, %v1894
    %v2311 = vpack.c.b16 %v1903, %v1895
    %v2312 = vpack.c.b16 %v1904, %v1896
    %v2313 = vpack.c.b16 %v1913, %v1905
    %v2314 = vpack.c.b16 %v1914, %v1906
    %v2315 = vpack.c.b16 %v1915, %v1907
    %v2316 = vpack.c.b16 %v1916, %v1908
    %v2317 = vpack.c.b16 %v1917, %v1909
    %v2318 = vpack.c.b16 %v1918, %v1910
    %v2319 = vpack.c.b16 %v1919, %v1911
    %v2320 = vpack.c.b16 %v1920, %v1912
    %v2321 = vpack.c.b16 %v1929, %v1921
    %v2322 = vpack.c.b16 %v1930, %v1922
    %v2323 = vpack.c.b16 %v1931, %v1923
    %v2324 = vpack.c.b16 %v1932, %v1924
    %v2325 = vpack.c.b16 %v1933, %v1925
    %v2326 = vpack.c.b16 %v1934, %v1926
    %v2327 = vpack.c.b16 %v1935, %v1927
    %v2328 = vpack.c.b16 %v1936, %v1928
    %v2329 = vpack.c.b16 %v1945, %v1937
    %v2330 = vpack.c.b16 %v1946, %v1938
    %v2331 = vpack.c.b16 %v1947, %v1939
    %v2332 = vpack.c.b16 %v1948, %v1940
    %v2333 = vpack.c.b16 %v1949, %v1941
    %v2334 = vpack.c.b16 %v1950, %v1942
    %v2335 = vpack.c.b16 %v1951, %v1943
    %v2336 = vpack.c.b16 %v1952, %v1944
    %v2337 = vpack.c.b16 %v1961, %v1953
    %v2338 = vpack.c.b16 %v1962, %v1954
    %v2339 = vpack.c.b16 %v1963, %v1955
    %v2340 = vpack.c.b16 %v1964, %v1956
    %v2341 = vpack.c.b16 %v1965, %v1957
    %v2342 = vpack.c.b16 %v1966, %v1958
    %v2343 = vpack.c.b16 %v1967, %v1959
    %v2344 = vpack.c.b16 %v1968, %v1960
    %v2345 = vpack.c.b16 %v1977, %v1969
    %v2346 = vpack.c.b16 %v1978, %v1970
    %v2347 = vpack.c.b16 %v1979, %v1971
    %v2348 = vpack.c.b16 %v1980, %v1972
    %v2349 = vpack.c.b16 %v1981, %v1973
    %v2350 = vpack.c.b16 %v1982, %v1974
    %v2351 = vpack.c.b16 %v1983, %v1975
    %v2352 = vpack.c.b16 %v1984, %v1976
    %v2353 = vpack.c.b16 %v1993, %v1985
    %v2354 = vpack.c.b16 %v1994, %v1986
    %v2355 = vpack.c.b16 %v1995, %v1987
    %v2356 = vpack.c.b16 %v1996, %v1988
    %v2357 = vpack.c.b16 %v1997, %v1989
    %v2358 = vpack.c.b16 %v1998, %v1990
    %v2359 = vpack.c.b16 %v1999, %v1991
    %v2360 = vpack.c.b16 %v2000, %v1992
    %v2361 = vpack.c.b16 %v2009, %v2001
    %v2362 = vpack.c.b16 %v2010, %v2002
    %v2363 = vpack.c.b16 %v2011, %v2003
    %v2364 = vpack.c.b16 %v2012, %v2004
    %v2365 = vpack.c.b16 %v2013, %v2005
    %v2366 = vpack.c.b16 %v2014, %v2006
    %v2367 = vpack.c.b16 %v2015, %v2007
    %v2368 = vpack.c.b16 %v2016, %v2008
    %v2369 = vpack.c.b16 %v2025, %v2017
    %v2370 = vpack.c.b16 %v2026, %v2018
    %v2371 = vpack.c.b16 %v2027, %v2019
    %v2372 = vpack.c.b16 %v2028, %v2020
    %v2373 = vpack.c.b16 %v2029, %v2021
    %v2374 = vpack.c.b16 %v2030, %v2022
    %v2375 = vpack.c.b16 %v2031, %v2023
    %v2376 = vpack.c.b16 %v2032, %v2024
    %v2377 = vpack.c.b16 %v2041, %v2033
    %v2378 = vpack.c.b16 %v2042, %v2034
    %v2379 = vpack.c.b16 %v2043, %v2035
    %v2380 = vpack.c.b16 %v2044, %v2036
    %v2381 = vpack.c.b16 %v2045, %v2037
    %v2382 = vpack.c.b16 %v2046, %v2038
    %v2383 = vpack.c.b16 %v2047, %v2039
    %v2384 = vpack.c.b16 %v2048, %v2040
    %v2385 = vpack.c.b16 %v2057, %v2049
    %v2386 = vpack.c.b16 %v2058, %v2050
    %v2387 = vpack.c.b16 %v2059, %v2051
    %v2388 = vpack.c.b16 %v2060, %v2052
    %v2389 = vpack.c.b16 %v2061, %v2053
    %v2390 = vpack.c.b16 %v2062, %v2054
    %v2391 = vpack.c.b16 %v2063, %v2055
    %v2392 = vpack.c.b16 %v2064, %v2056
    %v2393 = vpack.c.b16 %v2073, %v2065
    %v2394 = vpack.c.b16 %v2074, %v2066
    %v2395 = vpack.c.b16 %v2075, %v2067
    %v2396 = vpack.c.b16 %v2076, %v2068
    %v2397 = vpack.c.b16 %v2077, %v2069
    %v2398 = vpack.c.b16 %v2078, %v2070
    %v2399 = vpack.c.b16 %v2079, %v2071
    %v2400 = vpack.c.b16 %v2080, %v2072
    %v2401 = vpack.c.b16 %v2089, %v2081
    %v2402 = vpack.c.b16 %v2090, %v2082
    %v2403 = vpack.c.b16 %v2091, %v2083
    %v2404 = vpack.c.b16 %v2092, %v2084
    %v2405 = vpack.c.b16 %v2093, %v2085
    %v2406 = vpack.c.b16 %v2094, %v2086
    %v2407 = vpack.c.b16 %v2095, %v2087
    %v2408 = vpack.c.b16 %v2096, %v2088
    %v2409 = vpack.c.b16 %v2105, %v2097
    %v2410 = vpack.c.b16 %v2106, %v2098
    %v2411 = vpack.c.b16 %v2107, %v2099
    %v2412 = vpack.c.b16 %v2108, %v2100
    %v2413 = vpack.c.b16 %v2109, %v2101
    %v2414 = vpack.c.b16 %v2110, %v2102
    %v2415 = vpack.c.b16 %v2111, %v2103
    %v2416 = vpack.c.b16 %v2112, %v2104
    %v2417 = vpack.c.b16 %v2121, %v2113
    %v2418 = vpack.c.b16 %v2122, %v2114
    %v2419 = vpack.c.b16 %v2123, %v2115
    %v2420 = vpack.c.b16 %v2124, %v2116
    %v2421 = vpack.c.b16 %v2125, %v2117
    %v2422 = vpack.c.b16 %v2126, %v2118
    %v2423 = vpack.c.b16 %v2127, %v2119
    %v2424 = vpack.c.b16 %v2128, %v2120
    %v2425 = vpack.c.b16 %v2137, %v2129
    %v2426 = vpack.c.b16 %v2138, %v2130
    %v2427 = vpack.c.b16 %v2139, %v2131
    %v2428 = vpack.c.b16 %v2140, %v2132
    %v2429 = vpack.c.b16 %v2141, %v2133
    %v2430 = vpack.c.b16 %v2142, %v2134
    %v2431 = vpack.c.b16 %v2143, %v2135
    %v2432 = vpack.c.b16 %v2144, %v2136
    %v2433 = vpack.c.b16 %v2153, %v2145
    %v2434 = vpack.c.b16 %v2154, %v2146
    %v2435 = vpack.c.b16 %v2155, %v2147
    %v2436 = vpack.c.b16 %v2156, %v2148
    %v2437 = vpack.c.b16 %v2157, %v2149
    %v2438 = vpack.c.b16 %v2158, %v2150
    %v2439 = vpack.c.b16 %v2159, %v2151
    %v2440 = vpack.c.b16 %v2160, %v2152
    %v2441 = vpack.c.b16 %v2169, %v2161
    %v2442 = vpack.c.b16 %v2170, %v2162
    %v2443 = vpack.c.b16 %v2171, %v2163
    %v2444 = vpack.c.b16 %v2172, %v2164
    %v2445 = vpack.c.b16 %v2173, %v2165
    %v2446 = vpack.c.b16 %v2174, %v2166
    %v2447 = vpack.c.b16 %v2175, %v2167
    %v2448 = vpack.c.b16 %v2176, %v2168
    %v2449 = vpack.c.b16 %v2185, %v2177
    %v2450 = vpack.c.b16 %v2186, %v2178
    %v2451 = vpack.c.b16 %v2187, %v2179
    %v2452 = vpack.c.b16 %v2188, %v2180
    %v2453 = vpack.c.b16 %v2189, %v2181
    %v2454 = vpack.c.b16 %v2190, %v2182
    %v2455 = vpack.c.b16 %v2191, %v2183
    %v2456 = vpack.c.b16 %v2192, %v2184
    %v2457 = vpack.c.b16 %v2201, %v2193
    %v2458 = vpack.c.b16 %v2202, %v2194
    %v2459 = vpack.c.b16 %v2203, %v2195
    %v2460 = vpack.c.b16 %v2204, %v2196
    %v2461 = vpack.c.b16 %v2205, %v2197
    %v2462 = vpack.c.b16 %v2206, %v2198
    %v2463 = vpack.c.b16 %v2207, %v2199
    %v2464 = vpack.c.b16 %v2208, %v2200
    %2721 = vmatprep.subr.bf16.mxu0 %v2266
    %2722 = vmatpush1.bf16.msra.mxu0 %v2265
    %2723 = vmatprep.subr.bf16.mxu0 %v2258
    %2724 = vmatpush1.bf16.msra.mxu0 %v2257
    %2725 = vmatprep.subr.bf16.mxu0 %v2250
    %2726 = vmatpush1.bf16.msra.mxu0 %v2249
    %2727 = vmatprep.subr.bf16.mxu0 %v2242
    %2728 = vmatpush1.bf16.msra.mxu0 %v2241
    %2729 = vmatprep.subr.bf16.mxu0 %v2234
    %2730 = vmatpush1.bf16.msra.mxu0 %v2233
    %2731 = vmatprep.subr.bf16.mxu0 %v2226
    %2732 = vmatpush1.bf16.msra.mxu0 %v2225
    %2733 = vmatprep.subr.bf16.mxu0 %v2218
    %2734 = vmatpush1.bf16.msra.mxu0 %v2217
    %2735 = vmatprep.subr.bf16.mxu0 %v2210
    %2736 = vmatpush1.bf16.msra.mxu0 %v2209
    %2737 = vmatprep.subr.bf16.mxu0 %v2330
    %2738 = vmatpush2.bf16.msra.mxu0 %v2329
    %2739 = vmatprep.subr.bf16.mxu0 %v2322
    %2740 = vmatpush2.bf16.msra.mxu0 %v2321
    %2741 = vmatprep.subr.bf16.mxu0 %v2314
    %2742 = vmatpush2.bf16.msra.mxu0 %v2313
    %2743 = vmatprep.subr.bf16.mxu0 %v2306
    %2744 = vmatpush2.bf16.msra.mxu0 %v2305
    %2745 = vmatprep.subr.bf16.mxu0 %v2298
    %2746 = vmatpush2.bf16.msra.mxu0 %v2297
    %2747 = vmatprep.subr.bf16.mxu0 %v2290
    %2748 = vmatpush2.bf16.msra.mxu0 %v2289
    %2749 = vmatprep.subr.bf16.mxu0 %v2282
    %2750 = vmatpush2.bf16.msra.mxu0 %v2281
    %2751 = vmatprep.subr.bf16.mxu0 %v2274
    %2752 = vmatpush2.bf16.msra.mxu0 %v2273
    %2753 = vmatprep.mubr.bf16.mxu0 %v1182
    %2754 = vmatmul.mubr.bf16.gmra.mxu0 %v1181
    %v2755 = vpop.f32.mrf.mxu0
    %v2756 = vadd.f32 0.0, %v2755
    %v2757 = vpop.f32.mrf.mxu0
    %v2758 = vadd.f32 0.0, %v2757
    %v2759 = vpop.f32.mrf.mxu0
    %v2760 = vadd.f32 0.0, %v2759
    %v2761 = vpop.f32.mrf.mxu0
    %v2762 = vadd.f32 0.0, %v2761
    %2763 = vdwg.mxu0
    %2764 = vmatprep.subr.bf16.mxu0 %v2394
    %2765 = vmatpush1.bf16.msra.mxu0 %v2393
    %2766 = vmatprep.subr.bf16.mxu0 %v2386
    %2767 = vmatpush1.bf16.msra.mxu0 %v2385
    %2768 = vmatprep.subr.bf16.mxu0 %v2378
    %2769 = vmatpush1.bf16.msra.mxu0 %v2377
    %2770 = vmatprep.subr.bf16.mxu0 %v2370
    %2771 = vmatpush1.bf16.msra.mxu0 %v2369
    %2772 = vmatprep.subr.bf16.mxu0 %v2362
    %2773 = vmatpush1.bf16.msra.mxu0 %v2361
    %2774 = vmatprep.subr.bf16.mxu0 %v2354
    %2775 = vmatpush1.bf16.msra.mxu0 %v2353
    %2776 = vmatprep.subr.bf16.mxu0 %v2346
    %2777 = vmatpush1.bf16.msra.mxu0 %v2345
    %2778 = vmatprep.subr.bf16.mxu0 %v2338
    %2779 = vmatpush1.bf16.msra.mxu0 %v2337
    %2780 = vmatprep.subr.bf16.mxu0 %v2458
    %2781 = vmatpush2.bf16.msra.mxu0 %v2457
    %2782 = vmatprep.subr.bf16.mxu0 %v2450
    %2783 = vmatpush2.bf16.msra.mxu0 %v2449
    %2784 = vmatprep.subr.bf16.mxu0 %v2442
    %2785 = vmatpush2.bf16.msra.mxu0 %v2441
    %2786 = vmatprep.subr.bf16.mxu0 %v2434
    %2787 = vmatpush2.bf16.msra.mxu0 %v2433
    %2788 = vmatprep.subr.bf16.mxu0 %v2426
    %2789 = vmatpush2.bf16.msra.mxu0 %v2425
    %2790 = vmatprep.subr.bf16.mxu0 %v2418
    %2791 = vmatpush2.bf16.msra.mxu0 %v2417
    %2792 = vmatprep.subr.bf16.mxu0 %v2410
    %2793 = vmatpush2.bf16.msra.mxu0 %v2409
    %2794 = vmatprep.subr.bf16.mxu0 %v2402
    %2795 = vmatpush2.bf16.msra.mxu0 %v2401
    %2796 = vmatprep.mubr.bf16.mxu0 %v1184
    %2797 = vmatmul.mubr.bf16.gmra.mxu0 %v1183
    %v2798 = vpop.f32.mrf.mxu0
    %v2799 = vadd.f32 %v2756, %v2798
    %v2800 = vpop.f32.mrf.mxu0
    %v2801 = vadd.f32 %v2758, %v2800
    %v2802 = vpop.f32.mrf.mxu0
    %v2803 = vadd.f32 %v2760, %v2802
    %v2804 = vpop.f32.mrf.mxu0
    %v2805 = vadd.f32 %v2762, %v2804
    %2806 = vdwg.mxu0
    %2807 = vmatprep.subr.bf16.mxu0 %v2268
    %2808 = vmatpush1.bf16.msra.mxu0 %v2267
    %2809 = vmatprep.subr.bf16.mxu0 %v2260
    %2810 = vmatpush1.bf16.msra.mxu0 %v2259
    %2811 = vmatprep.subr.bf16.mxu0 %v2252
    %2812 = vmatpush1.bf16.msra.mxu0 %v2251
    %2813 = vmatprep.subr.bf16.mxu0 %v2244
    %2814 = vmatpush1.bf16.msra.mxu0 %v2243
    %2815 = vmatprep.subr.bf16.mxu0 %v2236
    %2816 = vmatpush1.bf16.msra.mxu0 %v2235
    %2817 = vmatprep.subr.bf16.mxu0 %v2228
    %2818 = vmatpush1.bf16.msra.mxu0 %v2227
    %2819 = vmatprep.subr.bf16.mxu0 %v2220
    %2820 = vmatpush1.bf16.msra.mxu0 %v2219
    %2821 = vmatprep.subr.bf16.mxu0 %v2212
    %2822 = vmatpush1.bf16.msra.mxu0 %v2211
    %2823 = vmatprep.subr.bf16.mxu0 %v2332
    %2824 = vmatpush2.bf16.msra.mxu0 %v2331
    %2825 = vmatprep.subr.bf16.mxu0 %v2324
    %2826 = vmatpush2.bf16.msra.mxu0 %v2323
    %2827 = vmatprep.subr.bf16.mxu0 %v2316
    %2828 = vmatpush2.bf16.msra.mxu0 %v2315
    %2829 = vmatprep.subr.bf16.mxu0 %v2308
    %2830 = vmatpush2.bf16.msra.mxu0 %v2307
    %2831 = vmatprep.subr.bf16.mxu0 %v2300
    %2832 = vmatpush2.bf16.msra.mxu0 %v2299
    %2833 = vmatprep.subr.bf16.mxu0 %v2292
    %2834 = vmatpush2.bf16.msra.mxu0 %v2291
    %2835 = vmatprep.subr.bf16.mxu0 %v2284
    %2836 = vmatpush2.bf16.msra.mxu0 %v2283
    %2837 = vmatprep.subr.bf16.mxu0 %v2276
    %2838 = vmatpush2.bf16.msra.mxu0 %v2275
    %2839 = vmatprep.mubr.bf16.mxu0 %v1182
    %2840 = vmatmul.mubr.bf16.gmra.mxu0 %v1181
    %v2841 = vpop.f32.mrf.mxu0
    %v2842 = vadd.f32 0.0, %v2841
    %v2843 = vpop.f32.mrf.mxu0
    %v2844 = vadd.f32 0.0, %v2843
    %v2845 = vpop.f32.mrf.mxu0
    %v2846 = vadd.f32 0.0, %v2845
    %v2847 = vpop.f32.mrf.mxu0
    %v2848 = vadd.f32 0.0, %v2847
    %2849 = vdwg.mxu0
    %2850 = vmatprep.subr.bf16.mxu0 %v2396
    %2851 = vmatpush1.bf16.msra.mxu0 %v2395
    %2852 = vmatprep.subr.bf16.mxu0 %v2388
    %2853 = vmatpush1.bf16.msra.mxu0 %v2387
    %2854 = vmatprep.subr.bf16.mxu0 %v2380
    %2855 = vmatpush1.bf16.msra.mxu0 %v2379
    %2856 = vmatprep.subr.bf16.mxu0 %v2372
    %2857 = vmatpush1.bf16.msra.mxu0 %v2371
    %2858 = vmatprep.subr.bf16.mxu0 %v2364
    %2859 = vmatpush1.bf16.msra.mxu0 %v2363
    %2860 = vmatprep.subr.bf16.mxu0 %v2356
    %2861 = vmatpush1.bf16.msra.mxu0 %v2355
    %2862 = vmatprep.subr.bf16.mxu0 %v2348
    %2863 = vmatpush1.bf16.msra.mxu0 %v2347
    %2864 = vmatprep.subr.bf16.mxu0 %v2340
    %2865 = vmatpush1.bf16.msra.mxu0 %v2339
    %2866 = vmatprep.subr.bf16.mxu0 %v2460
    %2867 = vmatpush2.bf16.msra.mxu0 %v2459
    %2868 = vmatprep.subr.bf16.mxu0 %v2452
    %2869 = vmatpush2.bf16.msra.mxu0 %v2451
    %2870 = vmatprep.subr.bf16.mxu0 %v2444
    %2871 = vmatpush2.bf16.msra.mxu0 %v2443
    %2872 = vmatprep.subr.bf16.mxu0 %v2436
    %2873 = vmatpush2.bf16.msra.mxu0 %v2435
    %2874 = vmatprep.subr.bf16.mxu0 %v2428
    %2875 = vmatpush2.bf16.msra.mxu0 %v2427
    %2876 = vmatprep.subr.bf16.mxu0 %v2420
    %2877 = vmatpush2.bf16.msra.mxu0 %v2419
    %2878 = vmatprep.subr.bf16.mxu0 %v2412
    %2879 = vmatpush2.bf16.msra.mxu0 %v2411
    %2880 = vmatprep.subr.bf16.mxu0 %v2404
    %2881 = vmatpush2.bf16.msra.mxu0 %v2403
    %2882 = vmatprep.mubr.bf16.mxu0 %v1184
    %2883 = vmatmul.mubr.bf16.gmra.mxu0 %v1183
    %v2884 = vpop.f32.mrf.mxu0
    %v2885 = vadd.f32 %v2842, %v2884
    %v2886 = vpop.f32.mrf.mxu0
    %v2887 = vadd.f32 %v2844, %v2886
    %v2888 = vpop.f32.mrf.mxu0
    %v2889 = vadd.f32 %v2846, %v2888
    %v2890 = vpop.f32.mrf.mxu0
    %v2891 = vadd.f32 %v2848, %v2890
    %2892 = vdwg.mxu0
    %2893 = vmatprep.subr.bf16.mxu0 %v2270
    %2894 = vmatpush1.bf16.msra.mxu0 %v2269
    %2895 = vmatprep.subr.bf16.mxu0 %v2262
    %2896 = vmatpush1.bf16.msra.mxu0 %v2261
    %2897 = vmatprep.subr.bf16.mxu0 %v2254
    %2898 = vmatpush1.bf16.msra.mxu0 %v2253
    %2899 = vmatprep.subr.bf16.mxu0 %v2246
    %2900 = vmatpush1.bf16.msra.mxu0 %v2245
    %2901 = vmatprep.subr.bf16.mxu0 %v2238
    %2902 = vmatpush1.bf16.msra.mxu0 %v2237
    %2903 = vmatprep.subr.bf16.mxu0 %v2230
    %2904 = vmatpush1.bf16.msra.mxu0 %v2229
    %2905 = vmatprep.subr.bf16.mxu0 %v2222
    %2906 = vmatpush1.bf16.msra.mxu0 %v2221
    %2907 = vmatprep.subr.bf16.mxu0 %v2214
    %2908 = vmatpush1.bf16.msra.mxu0 %v2213
    %2909 = vmatprep.subr.bf16.mxu0 %v2334
    %2910 = vmatpush2.bf16.msra.mxu0 %v2333
    %2911 = vmatprep.subr.bf16.mxu0 %v2326
    %2912 = vmatpush2.bf16.msra.mxu0 %v2325
    %2913 = vmatprep.subr.bf16.mxu0 %v2318
    %2914 = vmatpush2.bf16.msra.mxu0 %v2317
    %2915 = vmatprep.subr.bf16.mxu0 %v2310
    %2916 = vmatpush2.bf16.msra.mxu0 %v2309
    %2917 = vmatprep.subr.bf16.mxu0 %v2302
    %2918 = vmatpush2.bf16.msra.mxu0 %v2301
    %2919 = vmatprep.subr.bf16.mxu0 %v2294
    %2920 = vmatpush2.bf16.msra.mxu0 %v2293
    %2921 = vmatprep.subr.bf16.mxu0 %v2286
    %2922 = vmatpush2.bf16.msra.mxu0 %v2285
    %2923 = vmatprep.subr.bf16.mxu0 %v2278
    %2924 = vmatpush2.bf16.msra.mxu0 %v2277
    %2925 = vmatprep.mubr.bf16.mxu0 %v1182
    %2926 = vmatmul.mubr.bf16.gmra.mxu0 %v1181
    %v2927 = vpop.f32.mrf.mxu0
    %v2928 = vadd.f32 0.0, %v2927
    %v2929 = vpop.f32.mrf.mxu0
    %v2930 = vadd.f32 0.0, %v2929
    %v2931 = vpop.f32.mrf.mxu0
    %v2932 = vadd.f32 0.0, %v2931
    %v2933 = vpop.f32.mrf.mxu0
    %v2934 = vadd.f32 0.0, %v2933
    %2935 = vdwg.mxu0
    %2936 = vmatprep.subr.bf16.mxu0 %v2398
    %2937 = vmatpush1.bf16.msra.mxu0 %v2397
    %2938 = vmatprep.subr.bf16.mxu0 %v2390
    %2939 = vmatpush1.bf16.msra.mxu0 %v2389
    %2940 = vmatprep.subr.bf16.mxu0 %v2382
    %2941 = vmatpush1.bf16.msra.mxu0 %v2381
    %2942 = vmatprep.subr.bf16.mxu0 %v2374
    %2943 = vmatpush1.bf16.msra.mxu0 %v2373
    %2944 = vmatprep.subr.bf16.mxu0 %v2366
    %2945 = vmatpush1.bf16.msra.mxu0 %v2365
    %2946 = vmatprep.subr.bf16.mxu0 %v2358
    %2947 = vmatpush1.bf16.msra.mxu0 %v2357
    %2948 = vmatprep.subr.bf16.mxu0 %v2350
    %2949 = vmatpush1.bf16.msra.mxu0 %v2349
    %2950 = vmatprep.subr.bf16.mxu0 %v2342
    %2951 = vmatpush1.bf16.msra.mxu0 %v2341
    %2952 = vmatprep.subr.bf16.mxu0 %v2462
    %2953 = vmatpush2.bf16.msra.mxu0 %v2461
    %2954 = vmatprep.subr.bf16.mxu0 %v2454
    %2955 = vmatpush2.bf16.msra.mxu0 %v2453
    %2956 = vmatprep.subr.bf16.mxu0 %v2446
    %2957 = vmatpush2.bf16.msra.mxu0 %v2445
    %2958 = vmatprep.subr.bf16.mxu0 %v2438
    %2959 = vmatpush2.bf16.msra.mxu0 %v2437
    %2960 = vmatprep.subr.bf16.mxu0 %v2430
    %2961 = vmatpush2.bf16.msra.mxu0 %v2429
    %2962 = vmatprep.subr.bf16.mxu0 %v2422
    %2963 = vmatpush2.bf16.msra.mxu0 %v2421
    %2964 = vmatprep.subr.bf16.mxu0 %v2414
    %2965 = vmatpush2.bf16.msra.mxu0 %v2413
    %2966 = vmatprep.subr.bf16.mxu0 %v2406
    %2967 = vmatpush2.bf16.msra.mxu0 %v2405
    %2968 = vmatprep.mubr.bf16.mxu0 %v1184
    %2969 = vmatmul.mubr.bf16.gmra.mxu0 %v1183
    %v2970 = vpop.f32.mrf.mxu0
    %v2971 = vadd.f32 %v2928, %v2970
    %v2972 = vpop.f32.mrf.mxu0
    %v2973 = vadd.f32 %v2930, %v2972
    %v2974 = vpop.f32.mrf.mxu0
    %v2975 = vadd.f32 %v2932, %v2974
    %v2976 = vpop.f32.mrf.mxu0
    %v2977 = vadd.f32 %v2934, %v2976
    %2978 = vdwg.mxu0
    %2979 = vmatprep.subr.bf16.mxu0 %v2272
    %2980 = vmatpush1.bf16.msra.mxu0 %v2271
    %2981 = vmatprep.subr.bf16.mxu0 %v2264
    %2982 = vmatpush1.bf16.msra.mxu0 %v2263
    %2983 = vmatprep.subr.bf16.mxu0 %v2256
    %2984 = vmatpush1.bf16.msra.mxu0 %v2255
    %2985 = vmatprep.subr.bf16.mxu0 %v2248
    %2986 = vmatpush1.bf16.msra.mxu0 %v2247
    %2987 = vmatprep.subr.bf16.mxu0 %v2240
    %2988 = vmatpush1.bf16.msra.mxu0 %v2239
    %2989 = vmatprep.subr.bf16.mxu0 %v2232
    %2990 = vmatpush1.bf16.msra.mxu0 %v2231
    %2991 = vmatprep.subr.bf16.mxu0 %v2224
    %2992 = vmatpush1.bf16.msra.mxu0 %v2223
    %2993 = vmatprep.subr.bf16.mxu0 %v2216
    %2994 = vmatpush1.bf16.msra.mxu0 %v2215
    %2995 = vmatprep.subr.bf16.mxu0 %v2336
    %2996 = vmatpush2.bf16.msra.mxu0 %v2335
    %2997 = vmatprep.subr.bf16.mxu0 %v2328
    %2998 = vmatpush2.bf16.msra.mxu0 %v2327
    %2999 = vmatprep.subr.bf16.mxu0 %v2320
    %3000 = vmatpush2.bf16.msra.mxu0 %v2319
    %3001 = vmatprep.subr.bf16.mxu0 %v2312
    %3002 = vmatpush2.bf16.msra.mxu0 %v2311
    %3003 = vmatprep.subr.bf16.mxu0 %v2304
    %3004 = vmatpush2.bf16.msra.mxu0 %v2303
    %3005 = vmatprep.subr.bf16.mxu0 %v2296
    %3006 = vmatpush2.bf16.msra.mxu0 %v2295
    %3007 = vmatprep.subr.bf16.mxu0 %v2288
    %3008 = vmatpush2.bf16.msra.mxu0 %v2287
    %3009 = vmatprep.subr.bf16.mxu0 %v2280
    %3010 = vmatpush2.bf16.msra.mxu0 %v2279
    %3011 = vmatprep.mubr.bf16.mxu0 %v1182
    %3012 = vmatmul.mubr.bf16.gmra.mxu0 %v1181
    %v3013 = vpop.f32.mrf.mxu0
    %v3014 = vadd.f32 0.0, %v3013
    %v3015 = vpop.f32.mrf.mxu0
    %v3016 = vadd.f32 0.0, %v3015
    %v3017 = vpop.f32.mrf.mxu0
    %v3018 = vadd.f32 0.0, %v3017
    %v3019 = vpop.f32.mrf.mxu0
    %v3020 = vadd.f32 0.0, %v3019
    %3021 = vdwg.mxu0
    %3022 = vmatprep.subr.bf16.mxu0 %v2400
    %3023 = vmatpush1.bf16.msra.mxu0 %v2399
    %3024 = vmatprep.subr.bf16.mxu0 %v2392
    %3025 = vmatpush1.bf16.msra.mxu0 %v2391
    %3026 = vmatprep.subr.bf16.mxu0 %v2384
    %3027 = vmatpush1.bf16.msra.mxu0 %v2383
    %3028 = vmatprep.subr.bf16.mxu0 %v2376
    %3029 = vmatpush1.bf16.msra.mxu0 %v2375
    %3030 = vmatprep.subr.bf16.mxu0 %v2368
    %3031 = vmatpush1.bf16.msra.mxu0 %v2367
    %3032 = vmatprep.subr.bf16.mxu0 %v2360
    %3033 = vmatpush1.bf16.msra.mxu0 %v2359
    %3034 = vmatprep.subr.bf16.mxu0 %v2352
    %3035 = vmatpush1.bf16.msra.mxu0 %v2351
    %3036 = vmatprep.subr.bf16.mxu0 %v2344
    %3037 = vmatpush1.bf16.msra.mxu0 %v2343
    %3038 = vmatprep.subr.bf16.mxu0 %v2464
    %3039 = vmatpush2.bf16.msra.mxu0 %v2463
    %3040 = vmatprep.subr.bf16.mxu0 %v2456
    %3041 = vmatpush2.bf16.msra.mxu0 %v2455
    %3042 = vmatprep.subr.bf16.mxu0 %v2448
    %3043 = vmatpush2.bf16.msra.mxu0 %v2447
    %3044 = vmatprep.subr.bf16.mxu0 %v2440
    %3045 = vmatpush2.bf16.msra.mxu0 %v2439
    %3046 = vmatprep.subr.bf16.mxu0 %v2432
    %3047 = vmatpush2.bf16.msra.mxu0 %v2431
    %3048 = vmatprep.subr.bf16.mxu0 %v2424
    %3049 = vmatpush2.bf16.msra.mxu0 %v2423
    %3050 = vmatprep.subr.bf16.mxu0 %v2416
    %3051 = vmatpush2.bf16.msra.mxu0 %v2415
    %3052 = vmatprep.subr.bf16.mxu0 %v2408
    %3053 = vmatpush2.bf16.msra.mxu0 %v2407
    %3054 = vmatprep.mubr.bf16.mxu0 %v1184
    %3055 = vmatmul.mubr.bf16.gmra.mxu0 %v1183
    %v3056 = vpop.f32.mrf.mxu0
    %v3057 = vadd.f32 %v3014, %v3056
    %v3058 = vpop.f32.mrf.mxu0
    %v3059 = vadd.f32 %v3016, %v3058
    %v3060 = vpop.f32.mrf.mxu0
    %v3061 = vadd.f32 %v3018, %v3060
    %v3062 = vpop.f32.mrf.mxu0
    %v3063 = vadd.f32 %v3020, %v3062
    %3064 = vdwg.mxu0
    %v3065 = vld [vmem:[%s9] sm:$0xff]
    %v3066 = vld [vmem:[%s10] sm:$0xff]
    %v3067 = vadd.f32 %v2799, %v2803
    %v3068 = vrot.slane %v3067, 4
    %v3069 = vadd.f32 %v3067, %v3068
    %v3070 = vrot.slane %v3069, 2
    %v3071 = vadd.f32 %v3069, %v3070
    %v3072 = vrot.slane %v3071, 1
    %v3073 = vadd.f32 %v3071, %v3072
    %v3074 = vadd.f32 %v2801, %v2805
    %v3075 = vrot.slane %v3074, 4
    %v3076 = vadd.f32 %v3074, %v3075
    %v3077 = vrot.slane %v3076, 2
    %v3078 = vadd.f32 %v3076, %v3077
    %v3079 = vrot.slane %v3078, 1
    %v3080 = vadd.f32 %v3078, %v3079
    %v3081 = vadd.f32 %v2885, %v2889
    %v3082 = vrot.slane %v3081, 4
    %v3083 = vadd.f32 %v3081, %v3082
    %v3084 = vrot.slane %v3083, 2
    %v3085 = vadd.f32 %v3083, %v3084
    %v3086 = vrot.slane %v3085, 1
    %v3087 = vadd.f32 %v3085, %v3086
    %v3088 = vadd.f32 %v2887, %v2891
    %v3089 = vrot.slane %v3088, 4
    %v3090 = vadd.f32 %v3088, %v3089
    %v3091 = vrot.slane %v3090, 2
    %v3092 = vadd.f32 %v3090, %v3091
    %v3093 = vrot.slane %v3092, 1
    %v3094 = vadd.f32 %v3092, %v3093
    %v3095 = vadd.f32 %v2971, %v2975
    %v3096 = vrot.slane %v3095, 4
    %v3097 = vadd.f32 %v3095, %v3096
    %v3098 = vrot.slane %v3097, 2
    %v3099 = vadd.f32 %v3097, %v3098
    %v3100 = vrot.slane %v3099, 1
    %v3101 = vadd.f32 %v3099, %v3100
    %v3102 = vadd.f32 %v2973, %v2977
    %v3103 = vrot.slane %v3102, 4
    %v3104 = vadd.f32 %v3102, %v3103
    %v3105 = vrot.slane %v3104, 2
    %v3106 = vadd.f32 %v3104, %v3105
    %v3107 = vrot.slane %v3106, 1
    %v3108 = vadd.f32 %v3106, %v3107
    %v3109 = vadd.f32 %v3057, %v3061
    %v3110 = vrot.slane %v3109, 4
    %v3111 = vadd.f32 %v3109, %v3110
    %v3112 = vrot.slane %v3111, 2
    %v3113 = vadd.f32 %v3111, %v3112
    %v3114 = vrot.slane %v3113, 1
    %v3115 = vadd.f32 %v3113, %v3114
    %v3116 = vadd.f32 %v3059, %v3063
    %v3117 = vrot.slane %v3116, 4
    %v3118 = vadd.f32 %v3116, %v3117
    %v3119 = vrot.slane %v3118, 2
    %v3120 = vadd.f32 %v3118, %v3119
    %v3121 = vrot.slane %v3120, 1
    %v3122 = vadd.f32 %v3120, %v3121
    %v3123 = vmul.f32 %v3073, 0.125
    %v3124 = vmul.f32 %v3080, 0.125
    %v3125 = vmul.f32 %v3087, 0.125
    %v3126 = vmul.f32 %v3094, 0.125
    %v3127 = vmul.f32 %v3101, 0.125
    %v3128 = vmul.f32 %v3108, 0.125
    %v3129 = vmul.f32 %v3115, 0.125
    %v3130 = vmul.f32 %v3122, 0.125
    %v3131 = vmul.f32 %v2799, %v2799
    %v3132 = vmul.f32 %v2801, %v2801
    %v3133 = vmul.f32 %v2885, %v2885
    %v3134 = vmul.f32 %v2887, %v2887
    %v3135 = vmul.f32 %v2971, %v2971
    %v3136 = vmul.f32 %v2973, %v2973
    %v3137 = vmul.f32 %v3057, %v3057
    %v3138 = vmul.f32 %v3059, %v3059
    %v3139 = vmul.f32 %v2803, %v2803
    %v3140 = vmul.f32 %v2805, %v2805
    %v3141 = vmul.f32 %v2889, %v2889
    %v3142 = vmul.f32 %v2891, %v2891
    %v3143 = vmul.f32 %v2975, %v2975
    %v3144 = vmul.f32 %v2977, %v2977
    %v3145 = vmul.f32 %v3061, %v3061
    %v3146 = vmul.f32 %v3063, %v3063
    %v3147 = vadd.f32 %v3131, %v3139
    %v3148 = vrot.slane %v3147, 4
    %v3149 = vadd.f32 %v3147, %v3148
    %v3150 = vrot.slane %v3149, 2
    %v3151 = vadd.f32 %v3149, %v3150
    %v3152 = vrot.slane %v3151, 1
    %v3153 = vadd.f32 %v3151, %v3152
    %v3154 = vadd.f32 %v3132, %v3140
    %v3155 = vrot.slane %v3154, 4
    %v3156 = vadd.f32 %v3154, %v3155
    %v3157 = vrot.slane %v3156, 2
    %v3158 = vadd.f32 %v3156, %v3157
    %v3159 = vrot.slane %v3158, 1
    %v3160 = vadd.f32 %v3158, %v3159
    %v3161 = vadd.f32 %v3133, %v3141
    %v3162 = vrot.slane %v3161, 4
    %v3163 = vadd.f32 %v3161, %v3162
    %v3164 = vrot.slane %v3163, 2
    %v3165 = vadd.f32 %v3163, %v3164
    %v3166 = vrot.slane %v3165, 1
    %v3167 = vadd.f32 %v3165, %v3166
    %v3168 = vadd.f32 %v3134, %v3142
    %v3169 = vrot.slane %v3168, 4
    %v3170 = vadd.f32 %v3168, %v3169
    %v3171 = vrot.slane %v3170, 2
    %v3172 = vadd.f32 %v3170, %v3171
    %v3173 = vrot.slane %v3172, 1
    %v3174 = vadd.f32 %v3172, %v3173
    %v3175 = vadd.f32 %v3135, %v3143
    %v3176 = vrot.slane %v3175, 4
    %v3177 = vadd.f32 %v3175, %v3176
    %v3178 = vrot.slane %v3177, 2
    %v3179 = vadd.f32 %v3177, %v3178
    %v3180 = vrot.slane %v3179, 1
    %v3181 = vadd.f32 %v3179, %v3180
    %v3182 = vadd.f32 %v3136, %v3144
    %v3183 = vrot.slane %v3182, 4
    %v3184 = vadd.f32 %v3182, %v3183
    %v3185 = vrot.slane %v3184, 2
    %v3186 = vadd.f32 %v3184, %v3185
    %v3187 = vrot.slane %v3186, 1
    %v3188 = vadd.f32 %v3186, %v3187
    %v3189 = vadd.f32 %v3137, %v3145
    %v3190 = vrot.slane %v3189, 4
    %v3191 = vadd.f32 %v3189, %v3190
    %v3192 = vrot.slane %v3191, 2
    %v3193 = vadd.f32 %v3191, %v3192
    %v3194 = vrot.slane %v3193, 1
    %v3195 = vadd.f32 %v3193, %v3194
    %v3196 = vadd.f32 %v3138, %v3146
    %v3197 = vrot.slane %v3196, 4
    %v3198 = vadd.f32 %v3196, %v3197
    %v3199 = vrot.slane %v3198, 2
    %v3200 = vadd.f32 %v3198, %v3199
    %v3201 = vrot.slane %v3200, 1
    %v3202 = vadd.f32 %v3200, %v3201
    %v3203 = vmul.f32 %v3153, 0.125
    %v3204 = vmul.f32 %v3160, 0.125
    %v3205 = vmul.f32 %v3167, 0.125
    %v3206 = vmul.f32 %v3174, 0.125
    %v3207 = vmul.f32 %v3181, 0.125
    %v3208 = vmul.f32 %v3188, 0.125
    %v3209 = vmul.f32 %v3195, 0.125
    %v3210 = vmul.f32 %v3202, 0.125
    %v3211 = vmul.f32 %v3123, %v3123
    %v3212 = vmul.f32 %v3124, %v3124
    %v3213 = vmul.f32 %v3125, %v3125
    %v3214 = vmul.f32 %v3126, %v3126
    %v3215 = vmul.f32 %v3127, %v3127
    %v3216 = vmul.f32 %v3128, %v3128
    %v3217 = vmul.f32 %v3129, %v3129
    %v3218 = vmul.f32 %v3130, %v3130
    %v3219 = vsub.f32 %v3203, %v3211
    %v3220 = vsub.f32 %v3204, %v3212
    %v3221 = vsub.f32 %v3205, %v3213
    %v3222 = vsub.f32 %v3206, %v3214
    %v3223 = vsub.f32 %v3207, %v3215
    %v3224 = vsub.f32 %v3208, %v3216
    %v3225 = vsub.f32 %v3209, %v3217
    %v3226 = vsub.f32 %v3210, %v3218
    %v3227 = vmax.f32 %v3219, 0.0
    %v3228 = vmax.f32 %v3220, 0.0
    %v3229 = vmax.f32 %v3221, 0.0
    %v3230 = vmax.f32 %v3222, 0.0
    %v3231 = vmax.f32 %v3223, 0.0
    %v3232 = vmax.f32 %v3224, 0.0
    %v3233 = vmax.f32 %v3225, 0.0
    %v3234 = vmax.f32 %v3226, 0.0
    %v3235 = vadd.f32 %v3227, 0.8
    %v3236 = vadd.f32 %v3228, 0.8
    %v3237 = vadd.f32 %v3229, 0.8
    %v3238 = vadd.f32 %v3230, 0.8
    %v3239 = vadd.f32 %v3231, 0.8
    %v3240 = vadd.f32 %v3232, 0.8
    %v3241 = vadd.f32 %v3233, 0.8
    %v3242 = vadd.f32 %v3234, 0.8
    %v3243 = vrsqrt.pop %v3235
    %v3244 = vrsqrt.pop %v3236
    %v3245 = vrsqrt.pop %v3237
    %v3246 = vrsqrt.pop %v3238
    %v3247 = vrsqrt.pop %v3239
    %v3248 = vrsqrt.pop %v3240
    %v3249 = vrsqrt.pop %v3241
    %v3250 = vrsqrt.pop %v3242
    %v3259 = vcombine.low %v3243, %v3244
    %v3260 = vcombine.low %v3245, %v3246
    %v3261 = vcombine.low %v3247, %v3248
    %v3262 = vcombine.low %v3249, %v3250
    %v3264 = vunpack.c.l.s4 1966171168
    %v3265 = vunpack.c.0.s8 %v3264
    %v3266 = vlaneseq
    %v3267 = vshrl.u32 %v3266, 7
    %v3268 = vsub.s32 %v3265, %v3267
    %v3269 = vrot.slane %v3259, %v3268
    %v3271 = vunpack.c.l.s4 1966171168
    %v3272 = vunpack.c.0.s8 %v3271
    %v3273 = vlaneseq
    %v3274 = vshrl.u32 %v3273, 7
    %v3275 = vsub.s32 %v3272, %v3274
    %v3276 = vrot.slane %v3260, %v3275
    %v3278 = vunpack.c.l.s4 1966171168
    %v3279 = vunpack.c.0.s8 %v3278
    %v3280 = vlaneseq
    %v3281 = vshrl.u32 %v3280, 7
    %v3282 = vsub.s32 %v3279, %v3281
    %v3283 = vrot.slane %v3261, %v3282
    %v3285 = vunpack.c.l.s4 1966171168
    %v3286 = vunpack.c.0.s8 %v3285
    %v3287 = vlaneseq
    %v3288 = vshrl.u32 %v3287, 7
    %v3289 = vsub.s32 %v3286, %v3288
    %v3290 = vrot.slane %v3262, %v3289
    %v3291 = vcombine.low %v3269, %v3276
    %v3292 = vcombine.low %v3283, %v3290
    %v3294 = vunpack.c.l.s4 1966171168
    %v3295 = vunpack.c.0.s8 %v3294
    %v3296 = vlaneseq
    %v3297 = vshrl.u32 %v3296, 7
    %v3298 = vsub.s32 %v3295, %v3297
    %v3299 = vrot.slane %v3291, %v3298
    %v3301 = vunpack.c.l.s4 1966171168
    %v3302 = vunpack.c.0.s8 %v3301
    %v3303 = vlaneseq
    %v3304 = vshrl.u32 %v3303, 7
    %v3305 = vsub.s32 %v3302, %v3304
    %v3306 = vrot.slane %v3292, %v3305
    %v3307 = vcombine.low %v3299, %v3306
    %v3309 = vmul.f32 %v3065, %v3307
    %v3311 = vlaneseq
    %v3312 = vshrl.u32 %v3311, 7
    %v3313 = vsub.s32 0, %v3312
    %v3314 = vrot.slane %v3309, %v3313
    %v3315 = vlaneseq
    %v3316 = vshrl.u32 %v3315, 7
    %v3317 = vsub.s32 1, %v3316
    %v3318 = vrot.slane %v3309, %v3317
    %v3319 = vlaneseq
    %v3320 = vshrl.u32 %v3319, 7
    %v3321 = vsub.s32 2, %v3320
    %v3322 = vrot.slane %v3309, %v3321
    %v3323 = vlaneseq
    %v3324 = vshrl.u32 %v3323, 7
    %v3325 = vsub.s32 3, %v3324
    %v3326 = vrot.slane %v3309, %v3325
    %v3327 = vlaneseq
    %v3328 = vshrl.u32 %v3327, 7
    %v3329 = vsub.s32 4, %v3328
    %v3330 = vrot.slane %v3309, %v3329
    %v3331 = vlaneseq
    %v3332 = vshrl.u32 %v3331, 7
    %v3333 = vsub.s32 5, %v3332
    %v3334 = vrot.slane %v3309, %v3333
    %v3335 = vlaneseq
    %v3336 = vshrl.u32 %v3335, 7
    %v3337 = vsub.s32 6, %v3336
    %v3338 = vrot.slane %v3309, %v3337
    %v3339 = vlaneseq
    %v3340 = vshrl.u32 %v3339, 7
    %v3341 = vsub.s32 7, %v3340
    %v3342 = vrot.slane %v3309, %v3341
    %v3351 = vmul.f32 %v3123, %v3314
    %v3352 = vmul.f32 %v3124, %v3318
    %v3353 = vmul.f32 %v3125, %v3322
    %v3354 = vmul.f32 %v3126, %v3326
    %v3355 = vmul.f32 %v3127, %v3330
    %v3356 = vmul.f32 %v3128, %v3334
    %v3357 = vmul.f32 %v3129, %v3338
    %v3358 = vmul.f32 %v3130, %v3342
    %v3367 = vcombine.low %v3351, %v3352
    %v3368 = vcombine.low %v3353, %v3354
    %v3369 = vcombine.low %v3355, %v3356
    %v3370 = vcombine.low %v3357, %v3358
    %v3372 = vunpack.c.l.s4 1966171168
    %v3373 = vunpack.c.0.s8 %v3372
    %v3374 = vlaneseq
    %v3375 = vshrl.u32 %v3374, 7
    %v3376 = vsub.s32 %v3373, %v3375
    %v3377 = vrot.slane %v3367, %v3376
    %v3379 = vunpack.c.l.s4 1966171168
    %v3380 = vunpack.c.0.s8 %v3379
    %v3381 = vlaneseq
    %v3382 = vshrl.u32 %v3381, 7
    %v3383 = vsub.s32 %v3380, %v3382
    %v3384 = vrot.slane %v3368, %v3383
    %v3386 = vunpack.c.l.s4 1966171168
    %v3387 = vunpack.c.0.s8 %v3386
    %v3388 = vlaneseq
    %v3389 = vshrl.u32 %v3388, 7
    %v3390 = vsub.s32 %v3387, %v3389
    %v3391 = vrot.slane %v3369, %v3390
    %v3393 = vunpack.c.l.s4 1966171168
    %v3394 = vunpack.c.0.s8 %v3393
    %v3395 = vlaneseq
    %v3396 = vshrl.u32 %v3395, 7
    %v3397 = vsub.s32 %v3394, %v3396
    %v3398 = vrot.slane %v3370, %v3397
    %v3399 = vcombine.low %v3377, %v3384
    %v3400 = vcombine.low %v3391, %v3398
    %v3402 = vunpack.c.l.s4 1966171168
    %v3403 = vunpack.c.0.s8 %v3402
    %v3404 = vlaneseq
    %v3405 = vshrl.u32 %v3404, 7
    %v3406 = vsub.s32 %v3403, %v3405
    %v3407 = vrot.slane %v3399, %v3406
    %v3409 = vunpack.c.l.s4 1966171168
    %v3410 = vunpack.c.0.s8 %v3409
    %v3411 = vlaneseq
    %v3412 = vshrl.u32 %v3411, 7
    %v3413 = vsub.s32 %v3410, %v3412
    %v3414 = vrot.slane %v3400, %v3413
    %v3415 = vcombine.low %v3407, %v3414
    %v3417 = vsub.f32 %v3066, %v3415
    %v3418 = vmul.f32 %v2799, %v3314
    %v3419 = vmul.f32 %v2801, %v3318
    %v3420 = vmul.f32 %v2885, %v3322
    %v3421 = vmul.f32 %v2887, %v3326
    %v3422 = vmul.f32 %v2971, %v3330
    %v3423 = vmul.f32 %v2973, %v3334
    %v3424 = vmul.f32 %v3057, %v3338
    %v3425 = vmul.f32 %v3059, %v3342
    %v3426 = vmul.f32 %v2803, %v3314
    %v3427 = vmul.f32 %v2805, %v3318
    %v3428 = vmul.f32 %v2889, %v3322
    %v3429 = vmul.f32 %v2891, %v3326
    %v3430 = vmul.f32 %v2975, %v3330
    %v3431 = vmul.f32 %v2977, %v3334
    %v3432 = vmul.f32 %v3061, %v3338
    %v3433 = vmul.f32 %v3063, %v3342
    %v3435 = vlaneseq
    %v3436 = vshrl.u32 %v3435, 7
    %v3437 = vsub.s32 0, %v3436
    %v3438 = vrot.slane %v3417, %v3437
    %v3439 = vlaneseq
    %v3440 = vshrl.u32 %v3439, 7
    %v3441 = vsub.s32 1, %v3440
    %v3442 = vrot.slane %v3417, %v3441
    %v3443 = vlaneseq
    %v3444 = vshrl.u32 %v3443, 7
    %v3445 = vsub.s32 2, %v3444
    %v3446 = vrot.slane %v3417, %v3445
    %v3447 = vlaneseq
    %v3448 = vshrl.u32 %v3447, 7
    %v3449 = vsub.s32 3, %v3448
    %v3450 = vrot.slane %v3417, %v3449
    %v3451 = vlaneseq
    %v3452 = vshrl.u32 %v3451, 7
    %v3453 = vsub.s32 4, %v3452
    %v3454 = vrot.slane %v3417, %v3453
    %v3455 = vlaneseq
    %v3456 = vshrl.u32 %v3455, 7
    %v3457 = vsub.s32 5, %v3456
    %v3458 = vrot.slane %v3417, %v3457
    %v3459 = vlaneseq
    %v3460 = vshrl.u32 %v3459, 7
    %v3461 = vsub.s32 6, %v3460
    %v3462 = vrot.slane %v3417, %v3461
    %v3463 = vlaneseq
    %v3464 = vshrl.u32 %v3463, 7
    %v3465 = vsub.s32 7, %v3464
    %v3466 = vrot.slane %v3417, %v3465
    %v3475 = vadd.f32 %v3418, %v3438
    %v3476 = vadd.f32 %v3419, %v3442
    %v3477 = vadd.f32 %v3420, %v3446
    %v3478 = vadd.f32 %v3421, %v3450
    %v3479 = vadd.f32 %v3422, %v3454
    %v3480 = vadd.f32 %v3423, %v3458
    %v3481 = vadd.f32 %v3424, %v3462
    %v3482 = vadd.f32 %v3425, %v3466
    %v3483 = vadd.f32 %v3426, %v3438
    %v3484 = vadd.f32 %v3427, %v3442
    %v3485 = vadd.f32 %v3428, %v3446
    %v3486 = vadd.f32 %v3429, %v3450
    %v3487 = vadd.f32 %v3430, %v3454
    %v3488 = vadd.f32 %v3431, %v3458
    %v3489 = vadd.f32 %v3432, %v3462
    %v3490 = vadd.f32 %v3433, %v3466
    %vm3491 = vcmp.gt.f32.partialorder %v3475, 0.0
    %vm3492 = vcmp.gt.f32.partialorder %v3476, 0.0
    %vm3493 = vcmp.gt.f32.partialorder %v3477, 0.0
    %vm3494 = vcmp.gt.f32.partialorder %v3478, 0.0
    %vm3495 = vcmp.gt.f32.partialorder %v3479, 0.0
    %vm3496 = vcmp.gt.f32.partialorder %v3480, 0.0
    %vm3497 = vcmp.gt.f32.partialorder %v3481, 0.0
    %vm3498 = vcmp.gt.f32.partialorder %v3482, 0.0
    %vm3499 = vcmp.gt.f32.partialorder %v3483, 0.0
    %vm3500 = vcmp.gt.f32.partialorder %v3484, 0.0
    %vm3501 = vcmp.gt.f32.partialorder %v3485, 0.0
    %vm3502 = vcmp.gt.f32.partialorder %v3486, 0.0
    %vm3503 = vcmp.gt.f32.partialorder %v3487, 0.0
    %vm3504 = vcmp.gt.f32.partialorder %v3488, 0.0
    %vm3505 = vcmp.gt.f32.partialorder %v3489, 0.0
    %vm3506 = vcmp.gt.f32.partialorder %v3490, 0.0
    %v3507 = vmul.f32 %v3475, 0.2
    %v3508 = vmul.f32 %v3476, 0.2
    %v3509 = vmul.f32 %v3477, 0.2
    %v3510 = vmul.f32 %v3478, 0.2
    %v3511 = vmul.f32 %v3479, 0.2
    %v3512 = vmul.f32 %v3480, 0.2
    %v3513 = vmul.f32 %v3481, 0.2
    %v3514 = vmul.f32 %v3482, 0.2
    %v3515 = vmul.f32 %v3483, 0.2
    %v3516 = vmul.f32 %v3484, 0.2
    %v3517 = vmul.f32 %v3485, 0.2
    %v3518 = vmul.f32 %v3486, 0.2
    %v3519 = vmul.f32 %v3487, 0.2
    %v3520 = vmul.f32 %v3488, 0.2
    %v3521 = vmul.f32 %v3489, 0.2
    %v3522 = vmul.f32 %v3490, 0.2
    %v3523 = vsel %vm3491, %v3475, %v3507
    %v3524 = vsel %vm3492, %v3476, %v3508
    %v3525 = vsel %vm3493, %v3477, %v3509
    %v3526 = vsel %vm3494, %v3478, %v3510
    %v3527 = vsel %vm3495, %v3479, %v3511
    %v3528 = vsel %vm3496, %v3480, %v3512
    %v3529 = vsel %vm3497, %v3481, %v3513
    %v3530 = vsel %vm3498, %v3482, %v3514
    %v3531 = vsel %vm3499, %v3483, %v3515
    %v3532 = vsel %vm3500, %v3484, %v3516
    %v3533 = vsel %vm3501, %v3485, %v3517
    %v3534 = vsel %vm3502, %v3486, %v3518
    %v3535 = vsel %vm3503, %v3487, %v3519
    %v3536 = vsel %vm3504, %v3488, %v3520
    %v3537 = vsel %vm3505, %v3489, %v3521
    %v3538 = vsel %vm3506, %v3490, %v3522
    %v3539 = vmul.f32 %v3523, %v66
    %v3540 = vmul.f32 %v3524, %v66
    %v3541 = vmul.f32 %v3525, %v66
    %v3542 = vmul.f32 %v3526, %v66
    %v3543 = vmul.f32 %v3527, %v66
    %v3544 = vmul.f32 %v3528, %v66
    %v3545 = vmul.f32 %v3529, %v66
    %v3546 = vmul.f32 %v3530, %v66
    %v3547 = vmul.f32 %v3531, %v67
    %v3548 = vmul.f32 %v3532, %v67
    %v3549 = vmul.f32 %v3533, %v67
    %v3550 = vmul.f32 %v3534, %v67
    %v3551 = vmul.f32 %v3535, %v67
    %v3552 = vmul.f32 %v3536, %v67
    %v3553 = vmul.f32 %v3537, %v67
    %v3554 = vmul.f32 %v3538, %v67
    %v3555 = vpack.c.bf16 %v3547, %v3539
    %v3556 = vpack.c.bf16 %v3548, %v3540
    %v3557 = vpack.c.bf16 %v3549, %v3541
    %v3558 = vpack.c.bf16 %v3550, %v3542
    %v3559 = vpack.c.bf16 %v3551, %v3543
    %v3560 = vpack.c.bf16 %v3552, %v3544
    %v3561 = vpack.c.bf16 %v3553, %v3545
    %v3562 = vpack.c.bf16 %v3554, %v3546
    %v3563 = vld [vmem:[%s11] sm:$0xf]
    %v3564 = vld [vmem:[%s11 + $0x4] sm:$0xf]
    %v3565 = vld [vmem:[%s11 + $0x8] sm:$0xf]
    %v3566 = vld [vmem:[%s11 + $0xc] sm:$0xf]
    %v3567 = vld [vmem:[%s11 + $0x10] sm:$0xf]
    %v3568 = vld [vmem:[%s11 + $0x14] sm:$0xf]
    %v3569 = vld [vmem:[%s11 + $0x18] sm:$0xf]
    %v3570 = vld [vmem:[%s11 + $0x1c] sm:$0xf]
    %v3571 = vld [vmem:[%s11 + $0x20] sm:$0xf]
    %v3572 = vld [vmem:[%s11 + $0x24] sm:$0xf]
    %v3573 = vld [vmem:[%s11 + $0x28] sm:$0xf]
    %v3574 = vld [vmem:[%s11 + $0x2c] sm:$0xf]
    %v3575 = vld [vmem:[%s11 + $0x30] sm:$0xf]
    %v3576 = vld [vmem:[%s11 + $0x34] sm:$0xf]
    %v3577 = vld [vmem:[%s11 + $0x38] sm:$0xf]
    %v3578 = vld [vmem:[%s11 + $0x3c] sm:$0xf]
    %v3579 = vld [vmem:[%s11 + $0x40] sm:$0xf]
    %v3580 = vld [vmem:[%s11 + $0x44] sm:$0xf]
    %v3581 = vld [vmem:[%s11 + $0x48] sm:$0xf]
    %v3582 = vld [vmem:[%s11 + $0x4c] sm:$0xf]
    %v3583 = vld [vmem:[%s11 + $0x50] sm:$0xf]
    %v3584 = vld [vmem:[%s11 + $0x54] sm:$0xf]
    %v3585 = vld [vmem:[%s11 + $0x58] sm:$0xf]
    %v3586 = vld [vmem:[%s11 + $0x5c] sm:$0xf]
    %v3587 = vld [vmem:[%s11 + $0x60] sm:$0xf]
    %v3588 = vld [vmem:[%s11 + $0x64] sm:$0xf]
    %v3589 = vld [vmem:[%s11 + $0x68] sm:$0xf]
    %v3590 = vld [vmem:[%s11 + $0x6c] sm:$0xf]
    %v3591 = vld [vmem:[%s11 + $0x70] sm:$0xf]
    %v3592 = vld [vmem:[%s11 + $0x74] sm:$0xf]
    %v3593 = vld [vmem:[%s11 + $0x78] sm:$0xf]
    %v3594 = vld [vmem:[%s11 + $0x7c] sm:$0xf]
    %v3595 = vld [vmem:[%s11 + $0x80] sm:$0xf]
    %v3596 = vld [vmem:[%s11 + $0x84] sm:$0xf]
    %v3597 = vld [vmem:[%s11 + $0x88] sm:$0xf]
    %v3598 = vld [vmem:[%s11 + $0x8c] sm:$0xf]
    %v3599 = vld [vmem:[%s11 + $0x90] sm:$0xf]
    %v3600 = vld [vmem:[%s11 + $0x94] sm:$0xf]
    %v3601 = vld [vmem:[%s11 + $0x98] sm:$0xf]
    %v3602 = vld [vmem:[%s11 + $0x9c] sm:$0xf]
    %v3603 = vld [vmem:[%s11 + $0xa0] sm:$0xf]
    %v3604 = vld [vmem:[%s11 + $0xa4] sm:$0xf]
    %v3605 = vld [vmem:[%s11 + $0xa8] sm:$0xf]
    %v3606 = vld [vmem:[%s11 + $0xac] sm:$0xf]
    %v3607 = vld [vmem:[%s11 + $0xb0] sm:$0xf]
    %v3608 = vld [vmem:[%s11 + $0xb4] sm:$0xf]
    %v3609 = vld [vmem:[%s11 + $0xb8] sm:$0xf]
    %v3610 = vld [vmem:[%s11 + $0xbc] sm:$0xf]
    %v3611 = vld [vmem:[%s11 + $0xc0] sm:$0xf]
    %v3612 = vld [vmem:[%s11 + $0xc4] sm:$0xf]
    %v3613 = vld [vmem:[%s11 + $0xc8] sm:$0xf]
    %v3614 = vld [vmem:[%s11 + $0xcc] sm:$0xf]
    %v3615 = vld [vmem:[%s11 + $0xd0] sm:$0xf]
    %v3616 = vld [vmem:[%s11 + $0xd4] sm:$0xf]
    %v3617 = vld [vmem:[%s11 + $0xd8] sm:$0xf]
    %v3618 = vld [vmem:[%s11 + $0xdc] sm:$0xf]
    %v3619 = vld [vmem:[%s11 + $0xe0] sm:$0xf]
    %v3620 = vld [vmem:[%s11 + $0xe4] sm:$0xf]
    %v3621 = vld [vmem:[%s11 + $0xe8] sm:$0xf]
    %v3622 = vld [vmem:[%s11 + $0xec] sm:$0xf]
    %v3623 = vld [vmem:[%s11 + $0xf0] sm:$0xf]
    %v3624 = vld [vmem:[%s11 + $0xf4] sm:$0xf]
    %v3625 = vld [vmem:[%s11 + $0xf8] sm:$0xf]
    %v3626 = vld [vmem:[%s11 + $0xfc] sm:$0xf]
    %v3627 = vld [vmem:[%s11 + $0x100] sm:$0xf]
    %v3628 = vld [vmem:[%s11 + $0x104] sm:$0xf]
    %v3629 = vld [vmem:[%s11 + $0x108] sm:$0xf]
    %v3630 = vld [vmem:[%s11 + $0x10c] sm:$0xf]
    %v3631 = vld [vmem:[%s11 + $0x110] sm:$0xf]
    %v3632 = vld [vmem:[%s11 + $0x114] sm:$0xf]
    %v3633 = vld [vmem:[%s11 + $0x118] sm:$0xf]
    %v3634 = vld [vmem:[%s11 + $0x11c] sm:$0xf]
    %v3635 = vld [vmem:[%s11 + $0x120] sm:$0xf]
    %v3636 = vld [vmem:[%s11 + $0x124] sm:$0xf]
    %v3637 = vld [vmem:[%s11 + $0x128] sm:$0xf]
    %v3638 = vld [vmem:[%s11 + $0x12c] sm:$0xf]
    %v3639 = vld [vmem:[%s11 + $0x130] sm:$0xf]
    %v3640 = vld [vmem:[%s11 + $0x134] sm:$0xf]
    %v3641 = vld [vmem:[%s11 + $0x138] sm:$0xf]
    %v3642 = vld [vmem:[%s11 + $0x13c] sm:$0xf]
    %v3643 = vld [vmem:[%s11 + $0x140] sm:$0xf]
    %v3644 = vld [vmem:[%s11 + $0x144] sm:$0xf]
    %v3645 = vld [vmem:[%s11 + $0x148] sm:$0xf]
    %v3646 = vld [vmem:[%s11 + $0x14c] sm:$0xf]
    %v3647 = vld [vmem:[%s11 + $0x150] sm:$0xf]
    %v3648 = vld [vmem:[%s11 + $0x154] sm:$0xf]
    %v3649 = vld [vmem:[%s11 + $0x158] sm:$0xf]
    %v3650 = vld [vmem:[%s11 + $0x15c] sm:$0xf]
    %v3651 = vld [vmem:[%s11 + $0x160] sm:$0xf]
    %v3652 = vld [vmem:[%s11 + $0x164] sm:$0xf]
    %v3653 = vld [vmem:[%s11 + $0x168] sm:$0xf]
    %v3654 = vld [vmem:[%s11 + $0x16c] sm:$0xf]
    %v3655 = vld [vmem:[%s11 + $0x170] sm:$0xf]
    %v3656 = vld [vmem:[%s11 + $0x174] sm:$0xf]
    %v3657 = vld [vmem:[%s11 + $0x178] sm:$0xf]
    %v3658 = vld [vmem:[%s11 + $0x17c] sm:$0xf]
    %v3659 = vld [vmem:[%s11 + $0x180] sm:$0xf]
    %v3660 = vld [vmem:[%s11 + $0x184] sm:$0xf]
    %v3661 = vld [vmem:[%s11 + $0x188] sm:$0xf]
    %v3662 = vld [vmem:[%s11 + $0x18c] sm:$0xf]
    %v3663 = vld [vmem:[%s11 + $0x190] sm:$0xf]
    %v3664 = vld [vmem:[%s11 + $0x194] sm:$0xf]
    %v3665 = vld [vmem:[%s11 + $0x198] sm:$0xf]
    %v3666 = vld [vmem:[%s11 + $0x19c] sm:$0xf]
    %v3667 = vld [vmem:[%s11 + $0x1a0] sm:$0xf]
    %v3668 = vld [vmem:[%s11 + $0x1a4] sm:$0xf]
    %v3669 = vld [vmem:[%s11 + $0x1a8] sm:$0xf]
    %v3670 = vld [vmem:[%s11 + $0x1ac] sm:$0xf]
    %v3671 = vld [vmem:[%s11 + $0x1b0] sm:$0xf]
    %v3672 = vld [vmem:[%s11 + $0x1b4] sm:$0xf]
    %v3673 = vld [vmem:[%s11 + $0x1b8] sm:$0xf]
    %v3674 = vld [vmem:[%s11 + $0x1bc] sm:$0xf]
    %v3675 = vld [vmem:[%s11 + $0x1c0] sm:$0xf]
    %v3676 = vld [vmem:[%s11 + $0x1c4] sm:$0xf]
    %v3677 = vld [vmem:[%s11 + $0x1c8] sm:$0xf]
    %v3678 = vld [vmem:[%s11 + $0x1cc] sm:$0xf]
    %v3679 = vld [vmem:[%s11 + $0x1d0] sm:$0xf]
    %v3680 = vld [vmem:[%s11 + $0x1d4] sm:$0xf]
    %v3681 = vld [vmem:[%s11 + $0x1d8] sm:$0xf]
    %v3682 = vld [vmem:[%s11 + $0x1dc] sm:$0xf]
    %v3683 = vld [vmem:[%s11 + $0x1e0] sm:$0xf]
    %v3684 = vld [vmem:[%s11 + $0x1e4] sm:$0xf]
    %v3685 = vld [vmem:[%s11 + $0x1e8] sm:$0xf]
    %v3686 = vld [vmem:[%s11 + $0x1ec] sm:$0xf]
    %v3687 = vld [vmem:[%s11 + $0x1f0] sm:$0xf]
    %v3688 = vld [vmem:[%s11 + $0x1f4] sm:$0xf]
    %v3689 = vld [vmem:[%s11 + $0x1f8] sm:$0xf]
    %v3690 = vld [vmem:[%s11 + $0x1fc] sm:$0xf]
    %v3691 = vld [vmem:[%s12] sm:$0x1]
    %v3693 = vlaneseq
    %v3694 = vshrl.u32 %v3693, 7
    %v3695 = vsub.s32 0, %v3694
    %v3696 = vrot.slane %v3691, %v3695
    %v3826 = vunpack.c.l.b16 %v3563
    %v3827 = vunpack.c.l.b16 %v3564
    %v3828 = vunpack.c.l.b16 %v3565
    %v3829 = vunpack.c.l.b16 %v3566
    %v3830 = vunpack.c.l.b16 %v3567
    %v3831 = vunpack.c.l.b16 %v3568
    %v3832 = vunpack.c.l.b16 %v3569
    %v3833 = vunpack.c.l.b16 %v3570
    %v3834 = vunpack.c.l.b16 %v3571
    %v3835 = vunpack.c.l.b16 %v3572
    %v3836 = vunpack.c.l.b16 %v3573
    %v3837 = vunpack.c.l.b16 %v3574
    %v3838 = vunpack.c.l.b16 %v3575
    %v3839 = vunpack.c.l.b16 %v3576
    %v3840 = vunpack.c.l.b16 %v3577
    %v3841 = vunpack.c.l.b16 %v3578
    %v3842 = vunpack.c.l.b16 %v3579
    %v3843 = vunpack.c.l.b16 %v3580
    %v3844 = vunpack.c.l.b16 %v3581
    %v3845 = vunpack.c.l.b16 %v3582
    %v3846 = vunpack.c.l.b16 %v3583
    %v3847 = vunpack.c.l.b16 %v3584
    %v3848 = vunpack.c.l.b16 %v3585
    %v3849 = vunpack.c.l.b16 %v3586
    %v3850 = vunpack.c.l.b16 %v3587
    %v3851 = vunpack.c.l.b16 %v3588
    %v3852 = vunpack.c.l.b16 %v3589
    %v3853 = vunpack.c.l.b16 %v3590
    %v3854 = vunpack.c.l.b16 %v3591
    %v3855 = vunpack.c.l.b16 %v3592
    %v3856 = vunpack.c.l.b16 %v3593
    %v3857 = vunpack.c.l.b16 %v3594
    %v3858 = vunpack.c.l.b16 %v3595
    %v3859 = vunpack.c.l.b16 %v3596
    %v3860 = vunpack.c.l.b16 %v3597
    %v3861 = vunpack.c.l.b16 %v3598
    %v3862 = vunpack.c.l.b16 %v3599
    %v3863 = vunpack.c.l.b16 %v3600
    %v3864 = vunpack.c.l.b16 %v3601
    %v3865 = vunpack.c.l.b16 %v3602
    %v3866 = vunpack.c.l.b16 %v3603
    %v3867 = vunpack.c.l.b16 %v3604
    %v3868 = vunpack.c.l.b16 %v3605
    %v3869 = vunpack.c.l.b16 %v3606
    %v3870 = vunpack.c.l.b16 %v3607
    %v3871 = vunpack.c.l.b16 %v3608
    %v3872 = vunpack.c.l.b16 %v3609
    %v3873 = vunpack.c.l.b16 %v3610
    %v3874 = vunpack.c.l.b16 %v3611
    %v3875 = vunpack.c.l.b16 %v3612
    %v3876 = vunpack.c.l.b16 %v3613
    %v3877 = vunpack.c.l.b16 %v3614
    %v3878 = vunpack.c.l.b16 %v3615
    %v3879 = vunpack.c.l.b16 %v3616
    %v3880 = vunpack.c.l.b16 %v3617
    %v3881 = vunpack.c.l.b16 %v3618
    %v3882 = vunpack.c.l.b16 %v3619
    %v3883 = vunpack.c.l.b16 %v3620
    %v3884 = vunpack.c.l.b16 %v3621
    %v3885 = vunpack.c.l.b16 %v3622
    %v3886 = vunpack.c.l.b16 %v3623
    %v3887 = vunpack.c.l.b16 %v3624
    %v3888 = vunpack.c.l.b16 %v3625
    %v3889 = vunpack.c.l.b16 %v3626
    %v3890 = vunpack.c.l.b16 %v3627
    %v3891 = vunpack.c.l.b16 %v3628
    %v3892 = vunpack.c.l.b16 %v3629
    %v3893 = vunpack.c.l.b16 %v3630
    %v3894 = vunpack.c.l.b16 %v3631
    %v3895 = vunpack.c.l.b16 %v3632
    %v3896 = vunpack.c.l.b16 %v3633
    %v3897 = vunpack.c.l.b16 %v3634
    %v3898 = vunpack.c.l.b16 %v3635
    %v3899 = vunpack.c.l.b16 %v3636
    %v3900 = vunpack.c.l.b16 %v3637
    %v3901 = vunpack.c.l.b16 %v3638
    %v3902 = vunpack.c.l.b16 %v3639
    %v3903 = vunpack.c.l.b16 %v3640
    %v3904 = vunpack.c.l.b16 %v3641
    %v3905 = vunpack.c.l.b16 %v3642
    %v3906 = vunpack.c.l.b16 %v3643
    %v3907 = vunpack.c.l.b16 %v3644
    %v3908 = vunpack.c.l.b16 %v3645
    %v3909 = vunpack.c.l.b16 %v3646
    %v3910 = vunpack.c.l.b16 %v3647
    %v3911 = vunpack.c.l.b16 %v3648
    %v3912 = vunpack.c.l.b16 %v3649
    %v3913 = vunpack.c.l.b16 %v3650
    %v3914 = vunpack.c.l.b16 %v3651
    %v3915 = vunpack.c.l.b16 %v3652
    %v3916 = vunpack.c.l.b16 %v3653
    %v3917 = vunpack.c.l.b16 %v3654
    %v3918 = vunpack.c.l.b16 %v3655
    %v3919 = vunpack.c.l.b16 %v3656
    %v3920 = vunpack.c.l.b16 %v3657
    %v3921 = vunpack.c.l.b16 %v3658
    %v3922 = vunpack.c.l.b16 %v3659
    %v3923 = vunpack.c.l.b16 %v3660
    %v3924 = vunpack.c.l.b16 %v3661
    %v3925 = vunpack.c.l.b16 %v3662
    %v3926 = vunpack.c.l.b16 %v3663
    %v3927 = vunpack.c.l.b16 %v3664
    %v3928 = vunpack.c.l.b16 %v3665
    %v3929 = vunpack.c.l.b16 %v3666
    %v3930 = vunpack.c.l.b16 %v3667
    %v3931 = vunpack.c.l.b16 %v3668
    %v3932 = vunpack.c.l.b16 %v3669
    %v3933 = vunpack.c.l.b16 %v3670
    %v3934 = vunpack.c.l.b16 %v3671
    %v3935 = vunpack.c.l.b16 %v3672
    %v3936 = vunpack.c.l.b16 %v3673
    %v3937 = vunpack.c.l.b16 %v3674
    %v3938 = vunpack.c.l.b16 %v3675
    %v3939 = vunpack.c.l.b16 %v3676
    %v3940 = vunpack.c.l.b16 %v3677
    %v3941 = vunpack.c.l.b16 %v3678
    %v3942 = vunpack.c.l.b16 %v3679
    %v3943 = vunpack.c.l.b16 %v3680
    %v3944 = vunpack.c.l.b16 %v3681
    %v3945 = vunpack.c.l.b16 %v3682
    %v3946 = vunpack.c.l.b16 %v3683
    %v3947 = vunpack.c.l.b16 %v3684
    %v3948 = vunpack.c.l.b16 %v3685
    %v3949 = vunpack.c.l.b16 %v3686
    %v3950 = vunpack.c.l.b16 %v3687
    %v3951 = vunpack.c.l.b16 %v3688
    %v3952 = vunpack.c.l.b16 %v3689
    %v3953 = vunpack.c.l.b16 %v3690
    %v3954 = vpack.c.b16 %v3827, %v3826
    %v3955 = vpack.c.b16 %v3829, %v3828
    %v3956 = vpack.c.b16 %v3831, %v3830
    %v3957 = vpack.c.b16 %v3833, %v3832
    %v3958 = vpack.c.b16 %v3835, %v3834
    %v3959 = vpack.c.b16 %v3837, %v3836
    %v3960 = vpack.c.b16 %v3839, %v3838
    %v3961 = vpack.c.b16 %v3841, %v3840
    %v3962 = vpack.c.b16 %v3843, %v3842
    %v3963 = vpack.c.b16 %v3845, %v3844
    %v3964 = vpack.c.b16 %v3847, %v3846
    %v3965 = vpack.c.b16 %v3849, %v3848
    %v3966 = vpack.c.b16 %v3851, %v3850
    %v3967 = vpack.c.b16 %v3853, %v3852
    %v3968 = vpack.c.b16 %v3855, %v3854
    %v3969 = vpack.c.b16 %v3857, %v3856
    %v3970 = vpack.c.b16 %v3859, %v3858
    %v3971 = vpack.c.b16 %v3861, %v3860
    %v3972 = vpack.c.b16 %v3863, %v3862
    %v3973 = vpack.c.b16 %v3865, %v3864
    %v3974 = vpack.c.b16 %v3867, %v3866
    %v3975 = vpack.c.b16 %v3869, %v3868
    %v3976 = vpack.c.b16 %v3871, %v3870
    %v3977 = vpack.c.b16 %v3873, %v3872
    %v3978 = vpack.c.b16 %v3875, %v3874
    %v3979 = vpack.c.b16 %v3877, %v3876
    %v3980 = vpack.c.b16 %v3879, %v3878
    %v3981 = vpack.c.b16 %v3881, %v3880
    %v3982 = vpack.c.b16 %v3883, %v3882
    %v3983 = vpack.c.b16 %v3885, %v3884
    %v3984 = vpack.c.b16 %v3887, %v3886
    %v3985 = vpack.c.b16 %v3889, %v3888
    %v3986 = vpack.c.b16 %v3891, %v3890
    %v3987 = vpack.c.b16 %v3893, %v3892
    %v3988 = vpack.c.b16 %v3895, %v3894
    %v3989 = vpack.c.b16 %v3897, %v3896
    %v3990 = vpack.c.b16 %v3899, %v3898
    %v3991 = vpack.c.b16 %v3901, %v3900
    %v3992 = vpack.c.b16 %v3903, %v3902
    %v3993 = vpack.c.b16 %v3905, %v3904
    %v3994 = vpack.c.b16 %v3907, %v3906
    %v3995 = vpack.c.b16 %v3909, %v3908
    %v3996 = vpack.c.b16 %v3911, %v3910
    %v3997 = vpack.c.b16 %v3913, %v3912
    %v3998 = vpack.c.b16 %v3915, %v3914
    %v3999 = vpack.c.b16 %v3917, %v3916
    %v4000 = vpack.c.b16 %v3919, %v3918
    %v4001 = vpack.c.b16 %v3921, %v3920
    %v4002 = vpack.c.b16 %v3923, %v3922
    %v4003 = vpack.c.b16 %v3925, %v3924
    %v4004 = vpack.c.b16 %v3927, %v3926
    %v4005 = vpack.c.b16 %v3929, %v3928
    %v4006 = vpack.c.b16 %v3931, %v3930
    %v4007 = vpack.c.b16 %v3933, %v3932
    %v4008 = vpack.c.b16 %v3935, %v3934
    %v4009 = vpack.c.b16 %v3937, %v3936
    %v4010 = vpack.c.b16 %v3939, %v3938
    %v4011 = vpack.c.b16 %v3941, %v3940
    %v4012 = vpack.c.b16 %v3943, %v3942
    %v4013 = vpack.c.b16 %v3945, %v3944
    %v4014 = vpack.c.b16 %v3947, %v3946
    %v4015 = vpack.c.b16 %v3949, %v3948
    %v4016 = vpack.c.b16 %v3951, %v3950
    %v4017 = vpack.c.b16 %v3953, %v3952
    %4082 = vmatprep.subr.bf16.mxu0 0
    %4083 = vmatpush1.bf16.msra.mxu0 %v3961
    %4084 = vmatprep.subr.bf16.mxu0 0
    %4085 = vmatpush1.bf16.msra.mxu0 %v3960
    %4086 = vmatprep.subr.bf16.mxu0 0
    %4087 = vmatpush1.bf16.msra.mxu0 %v3959
    %4088 = vmatprep.subr.bf16.mxu0 0
    %4089 = vmatpush1.bf16.msra.mxu0 %v3958
    %4090 = vmatprep.subr.bf16.mxu0 0
    %4091 = vmatpush1.bf16.msra.mxu0 %v3957
    %4092 = vmatprep.subr.bf16.mxu0 0
    %4093 = vmatpush1.bf16.msra.mxu0 %v3956
    %4094 = vmatprep.subr.bf16.mxu0 0
    %4095 = vmatpush1.bf16.msra.mxu0 %v3955
    %4096 = vmatprep.subr.bf16.mxu0 0
    %4097 = vmatpush1.bf16.msra.mxu0 %v3954
    %4098 = vmatprep.subr.bf16.mxu0 0
    %4099 = vmatpush2.bf16.msra.mxu0 %v3969
    %4100 = vmatprep.subr.bf16.mxu0 0
    %4101 = vmatpush2.bf16.msra.mxu0 %v3968
    %4102 = vmatprep.subr.bf16.mxu0 0
    %4103 = vmatpush2.bf16.msra.mxu0 %v3967
    %4104 = vmatprep.subr.bf16.mxu0 0
    %4105 = vmatpush2.bf16.msra.mxu0 %v3966
    %4106 = vmatprep.subr.bf16.mxu0 0
    %4107 = vmatpush2.bf16.msra.mxu0 %v3965
    %4108 = vmatprep.subr.bf16.mxu0 0
    %4109 = vmatpush2.bf16.msra.mxu0 %v3964
    %4110 = vmatprep.subr.bf16.mxu0 0
    %4111 = vmatpush2.bf16.msra.mxu0 %v3963
    %4112 = vmatprep.subr.bf16.mxu0 0
    %4113 = vmatpush2.bf16.msra.mxu0 %v3962
    %4114 = vmatprep.mubr.bf16.mxu0 %v3556
    %4115 = vmatmul.mubr.bf16.gmra.mxu0 %v3555
    %v4116 = vpop.f32.mrf.mxu0
    %v4117 = vadd.f32 %v3696, %v4116
    %v4118 = vpop.f32.mrf.mxu0
    %v4119 = vpop.f32.mrf.mxu0
    %v4120 = vadd.f32 %v3696, %v4119
    %v4121 = vpop.f32.mrf.mxu0
    %4122 = vdwg.mxu0
    %4123 = vmatprep.subr.bf16.mxu0 0
    %4124 = vmatpush1.bf16.msra.mxu0 %v3977
    %4125 = vmatprep.subr.bf16.mxu0 0
    %4126 = vmatpush1.bf16.msra.mxu0 %v3976
    %4127 = vmatprep.subr.bf16.mxu0 0
    %4128 = vmatpush1.bf16.msra.mxu0 %v3975
    %4129 = vmatprep.subr.bf16.mxu0 0
    %4130 = vmatpush1.bf16.msra.mxu0 %v3974
    %4131 = vmatprep.subr.bf16.mxu0 0
    %4132 = vmatpush1.bf16.msra.mxu0 %v3973
    %4133 = vmatprep.subr.bf16.mxu0 0
    %4134 = vmatpush1.bf16.msra.mxu0 %v3972
    %4135 = vmatprep.subr.bf16.mxu0 0
    %4136 = vmatpush1.bf16.msra.mxu0 %v3971
    %4137 = vmatprep.subr.bf16.mxu0 0
    %4138 = vmatpush1.bf16.msra.mxu0 %v3970
    %4139 = vmatprep.subr.bf16.mxu0 0
    %4140 = vmatpush2.bf16.msra.mxu0 %v3985
    %4141 = vmatprep.subr.bf16.mxu0 0
    %4142 = vmatpush2.bf16.msra.mxu0 %v3984
    %4143 = vmatprep.subr.bf16.mxu0 0
    %4144 = vmatpush2.bf16.msra.mxu0 %v3983
    %4145 = vmatprep.subr.bf16.mxu0 0
    %4146 = vmatpush2.bf16.msra.mxu0 %v3982
    %4147 = vmatprep.subr.bf16.mxu0 0
    %4148 = vmatpush2.bf16.msra.mxu0 %v3981
    %4149 = vmatprep.subr.bf16.mxu0 0
    %4150 = vmatpush2.bf16.msra.mxu0 %v3980
    %4151 = vmatprep.subr.bf16.mxu0 0
    %4152 = vmatpush2.bf16.msra.mxu0 %v3979
    %4153 = vmatprep.subr.bf16.mxu0 0
    %4154 = vmatpush2.bf16.msra.mxu0 %v3978
    %4155 = vmatprep.mubr.bf16.mxu0 %v3558
    %4156 = vmatmul.mubr.bf16.gmra.mxu0 %v3557
    %v4157 = vpop.f32.mrf.mxu0
    %v4158 = vadd.f32 %v4117, %v4157
    %v4159 = vpop.f32.mrf.mxu0
    %v4160 = vpop.f32.mrf.mxu0
    %v4161 = vadd.f32 %v4120, %v4160
    %v4162 = vpop.f32.mrf.mxu0
    %4163 = vdwg.mxu0
    %4164 = vmatprep.subr.bf16.mxu0 0
    %4165 = vmatpush1.bf16.msra.mxu0 %v3993
    %4166 = vmatprep.subr.bf16.mxu0 0
    %4167 = vmatpush1.bf16.msra.mxu0 %v3992
    %4168 = vmatprep.subr.bf16.mxu0 0
    %4169 = vmatpush1.bf16.msra.mxu0 %v3991
    %4170 = vmatprep.subr.bf16.mxu0 0
    %4171 = vmatpush1.bf16.msra.mxu0 %v3990
    %4172 = vmatprep.subr.bf16.mxu0 0
    %4173 = vmatpush1.bf16.msra.mxu0 %v3989
    %4174 = vmatprep.subr.bf16.mxu0 0
    %4175 = vmatpush1.bf16.msra.mxu0 %v3988
    %4176 = vmatprep.subr.bf16.mxu0 0
    %4177 = vmatpush1.bf16.msra.mxu0 %v3987
    %4178 = vmatprep.subr.bf16.mxu0 0
    %4179 = vmatpush1.bf16.msra.mxu0 %v3986
    %4180 = vmatprep.subr.bf16.mxu0 0
    %4181 = vmatpush2.bf16.msra.mxu0 %v4001
    %4182 = vmatprep.subr.bf16.mxu0 0
    %4183 = vmatpush2.bf16.msra.mxu0 %v4000
    %4184 = vmatprep.subr.bf16.mxu0 0
    %4185 = vmatpush2.bf16.msra.mxu0 %v3999
    %4186 = vmatprep.subr.bf16.mxu0 0
    %4187 = vmatpush2.bf16.msra.mxu0 %v3998
    %4188 = vmatprep.subr.bf16.mxu0 0
    %4189 = vmatpush2.bf16.msra.mxu0 %v3997
    %4190 = vmatprep.subr.bf16.mxu0 0
    %4191 = vmatpush2.bf16.msra.mxu0 %v3996
    %4192 = vmatprep.subr.bf16.mxu0 0
    %4193 = vmatpush2.bf16.msra.mxu0 %v3995
    %4194 = vmatprep.subr.bf16.mxu0 0
    %4195 = vmatpush2.bf16.msra.mxu0 %v3994
    %4196 = vmatprep.mubr.bf16.mxu0 %v3560
    %4197 = vmatmul.mubr.bf16.gmra.mxu0 %v3559
    %v4198 = vpop.f32.mrf.mxu0
    %v4199 = vadd.f32 %v4158, %v4198
    %v4200 = vpop.f32.mrf.mxu0
    %v4201 = vpop.f32.mrf.mxu0
    %v4202 = vadd.f32 %v4161, %v4201
    %v4203 = vpop.f32.mrf.mxu0
    %4204 = vdwg.mxu0
    %4205 = vmatprep.subr.bf16.mxu0 0
    %4206 = vmatpush1.bf16.msra.mxu0 %v4009
    %4207 = vmatprep.subr.bf16.mxu0 0
    %4208 = vmatpush1.bf16.msra.mxu0 %v4008
    %4209 = vmatprep.subr.bf16.mxu0 0
    %4210 = vmatpush1.bf16.msra.mxu0 %v4007
    %4211 = vmatprep.subr.bf16.mxu0 0
    %4212 = vmatpush1.bf16.msra.mxu0 %v4006
    %4213 = vmatprep.subr.bf16.mxu0 0
    %4214 = vmatpush1.bf16.msra.mxu0 %v4005
    %4215 = vmatprep.subr.bf16.mxu0 0
    %4216 = vmatpush1.bf16.msra.mxu0 %v4004
    %4217 = vmatprep.subr.bf16.mxu0 0
    %4218 = vmatpush1.bf16.msra.mxu0 %v4003
    %4219 = vmatprep.subr.bf16.mxu0 0
    %4220 = vmatpush1.bf16.msra.mxu0 %v4002
    %4221 = vmatprep.subr.bf16.mxu0 0
    %4222 = vmatpush2.bf16.msra.mxu0 %v4017
    %4223 = vmatprep.subr.bf16.mxu0 0
    %4224 = vmatpush2.bf16.msra.mxu0 %v4016
    %4225 = vmatprep.subr.bf16.mxu0 0
    %4226 = vmatpush2.bf16.msra.mxu0 %v4015
    %4227 = vmatprep.subr.bf16.mxu0 0
    %4228 = vmatpush2.bf16.msra.mxu0 %v4014
    %4229 = vmatprep.subr.bf16.mxu0 0
    %4230 = vmatpush2.bf16.msra.mxu0 %v4013
    %4231 = vmatprep.subr.bf16.mxu0 0
    %4232 = vmatpush2.bf16.msra.mxu0 %v4012
    %4233 = vmatprep.subr.bf16.mxu0 0
    %4234 = vmatpush2.bf16.msra.mxu0 %v4011
    %4235 = vmatprep.subr.bf16.mxu0 0
    %4236 = vmatpush2.bf16.msra.mxu0 %v4010
    %4237 = vmatprep.mubr.bf16.mxu0 %v3562
    %4238 = vmatmul.mubr.bf16.gmra.mxu0 %v3561
    %v4239 = vpop.f32.mrf.mxu0
    %v4240 = vadd.f32 %v4199, %v4239
    %v4241 = vpop.f32.mrf.mxu0
    %v4242 = vpop.f32.mrf.mxu0
    %v4243 = vadd.f32 %v4202, %v4242
    %v4244 = vpop.f32.mrf.mxu0
    %4245 = vdwg.mxu0
    %v4246 = vtanh.pop %v4240
    %v4247 = vtanh.pop %v4243
    %v4248 = vpack.c.bf16 %v4247, %v4246
    %v4250 = vunpack.c.l.b16 %v4248
    %v4251 = vunpack.c.h.b16 %v4248
    %v4252 = vpack.c.b16 %v4250, %v4250
    %v4253 = vpack.c.b16 %v4251, %v4251
    %vm4256 = vcmask 519168
    %4257 = vst.msk [vmem:[%s13] sm:$0xf] %vm4256, %v4252
    %4258 = vst.msk [vmem:[%s13 + $0x4] sm:$0xf] %vm4256, %v4253
    // Predicated region
    $region58: #{generator_forward.1} parent=1 // pred_check
      _
    $region59: #{generator_forward.1} parent=1 // pred_check_branch
      %4260 = sbr.rel (0) target = $region61
    $region60: #{generator_forward.1} parent=1 // pred_region
      _
    $region61: #{generator_forward.1} parent=1 // pred_fallthru
      _
    // Predicated region
    $region62: #{generator_forward.1} parent=1 // pred_check
      _
    $region63: #{generator_forward.1} parent=1 // pred_check_branch
      %4262 = sbr.rel (0) target = $region65
    $region64: #{generator_forward.1} parent=1 // pred_region
      _
    $region65: #{generator_forward.1} parent=1 // pred_fallthru
      _
    %4263 = vsyncpa [#allocation3], 1

</llo_original>
